<compile_context>
chip_gen: v5e
topology: v5e:2x2
jax: 0.10.0
libtpu: 0.0.40
codegen_flags: <defaults>
</compile_context>

<pallas_src>
import functools

import jax
import jax.numpy as jnp
from jax.experimental import pallas as pl
from jax.experimental.pallas import tpu as pltpu


def _upsample_kernel(x_ref, pe_ref, po_ref, w_ref, o_ref, *, cin, cout, h, w):
    # x_ref : (cin, h+2, w+2)   zero-padded input image (VMEM)
    # pe_ref: (w, 2w) f32       0/1 matrix, column j -> column 2j   (resident)
    # po_ref: (w, 2w) f32       0/1 matrix, column j -> column 2j+1 (resident)
    # w_ref : (cout*cin*9,) f32 flat conv weights in SMEM, idx = co*cin*9 + ci*9 + kh*3 + kw
    # o_ref : (cout//4, h, 4w)  "super-row" output: [row 2i | row 2i+1] along lanes
    n_groups = cout // 4
    cin9 = cin * 9

    pe = pe_ref[...]
    po = po_ref[...]
    hiprec = jax.lax.Precision.HIGHEST

    def group_body(g, carry):
        # One pixel-shuffle group = 4 consecutive conv output channels.
        base = g * (4 * cin9)
        accs = [jnp.zeros((h, w), jnp.float32) for _ in range(4)]
        # Inner tap loops are static (fully unrolled) so slices stay static; the outer
        # fori_loop keeps only ~5 tiles live per group.
        for ci in range(cin):
            for kh in range(3):
                for kw in range(3):
                    tap = x_ref[ci, kh:kh + h, kw:kw + w].astype(jnp.float32)
                    k = ci * 9 + kh * 3 + kw
                    for j in range(4):
                        accs[j] = accs[j] + w_ref[base + j * cin9 + k] * tap

        # Column interleave on the MXU (exact: 0/1 matrices + HIGHEST precision).
        top = (jnp.dot(accs[0], pe, precision=hiprec, preferred_element_type=jnp.float32)
               + jnp.dot(accs[1], po, precision=hiprec, preferred_element_type=jnp.float32))
        bot = (jnp.dot(accs[2], pe, precision=hiprec, preferred_element_type=jnp.float32)
               + jnp.dot(accs[3], po, precision=hiprec, preferred_element_type=jnp.float32))

        # Row interleave is free: even row goes to lanes [0, 2w), odd row to [2w, 4w);
        # the wrapper's contiguous reshape turns each super-row into two output rows.
        o_ref[g, :, 0:2 * w] = top.astype(o_ref.dtype)
        o_ref[g, :, 2 * w:4 * w] = bot.astype(o_ref.dtype)
        return carry

    jax.lax.fori_loop(0, n_groups, group_body, 0)


def upsample(x, weight):
    """x: (N, Cin, H, W); weight: (2*Cin, Cin, 3, 3) OIHW. Returns (N, Cin//2, 2H, 2W)."""
    N, Cin, H, W = x.shape
    Cout = weight.shape[0]
    assert weight.shape == (Cout, Cin, 3, 3)
    assert Cout % 4 == 0, "PixelShuffle(2) requires conv output channels % 4 == 0"
    c_ps = Cout // 4
    itemsize = jnp.dtype(x.dtype).itemsize

    # Zero-pad spatially once (cheap, fused by XLA); layout stays NCHW.
    x_pad = jnp.pad(x, ((0, 0), (0, 0), (1, 1), (1, 1)))
    # 1D SMEM weight table (tight padding): idx = co*(Cin*9) + ci*9 + kh*3 + kw.
    w_flat = weight.reshape(-1).astype(jnp.float32)

    # Column-interleave 0/1 matrices, built once and kept resident in VMEM.
    col = jax.lax.broadcasted_iota(jnp.int32, (W, 2 * W), 1)
    row = jax.lax.broadcasted_iota(jnp.int32, (W, 2 * W), 0)
    put_even_col = (col == 2 * row).astype(jnp.float32)       # col w -> 2w
    put_odd_col = (col == 2 * row + 1).astype(jnp.float32)    # col w -> 2w+1

    kernel = functools.partial(_upsample_kernel, cin=Cin, cout=Cout, h=H, w=W)

    conv_flops = 2 * N * Cout * Cin * 9 * H * W
    shuffle_flops = 4 * N * Cout * H * W * W            # (H,W) @ (W,2W) per conv channel
    bytes_accessed = (x_pad.size * itemsize + N * c_ps * 2 * H * 2 * W * itemsize
                      + w_flat.size * 4 + 2 * put_even_col.size * 4)

    out = pl.pallas_call(
        kernel,
        out_shape=jax.ShapeDtypeStruct((N, c_ps, H, 4 * W), x.dtype),
        grid_spec=pltpu.PrefetchScalarGridSpec(
            num_scalar_prefetch=0,
            grid=(N,),
            in_specs=[
                pl.BlockSpec((None, Cin, H + 2, W + 2), lambda n: (n, 0, 0, 0)),
                pl.BlockSpec((W, 2 * W), lambda n: (0, 0)),          # resident constant
                pl.BlockSpec((W, 2 * W), lambda n: (0, 0)),          # resident constant
                pl.BlockSpec(memory_space=pltpu.MemorySpace.SMEM),   # flat weights
            ],
            out_specs=pl.BlockSpec((None, c_ps, H, 4 * W), lambda n: (n, 0, 0, 0)),
        ),
        compiler_params=pltpu.CompilerParams(
            dimension_semantics=("parallel",),
            vmem_limit_bytes=48 * 1024 * 1024,
        ),
        cost_estimate=pl.CostEstimate(
            flops=conv_flops + shuffle_flops,
            transcendentals=0,
            bytes_accessed=bytes_accessed,
        ),
    )(x_pad, put_even_col, put_odd_col, w_flat)

    # Free contiguous reshape: each (4W) super-row is [row 2i | row 2i+1].
    return out.reshape(N, c_ps, 2 * H, 2 * W)


def upsample_ref(x, weight):
    """Pure-JAX reference: conv3x3 (no bias) + PixelShuffle(2), PyTorch semantics."""
    y = jax.lax.conv_general_dilated(
        x, weight, window_strides=(1, 1), padding=((1, 1), (1, 1)),
        dimension_numbers=("NCHW", "OIHW", "NCHW"))
    N, C, H, W = y.shape
    r = 2
    c_ps = C // (r * r)
    y = y.reshape(N, c_ps, r, r, H, W)
    y = jnp.transpose(y, (0, 1, 4, 2, 5, 3))
    return y.reshape(N, c_ps, H * r, W * r)


if __name__ == "__main__":
    key = jax.random.PRNGKey(0)
    kx, kw = jax.random.split(key, 2)

    N, n_feat, H, W = 2, 4, 16, 16
    x = jax.random.normal(kx, (N, n_feat, H, W), dtype=jnp.float32)
    # Conv2d weight (no bias in the module); scale roughly like default init.
    weight = (1.0 / (n_feat * 9)) * jax.random.normal(
        kw, (2 * n_feat, n_feat, 3, 3), dtype=jnp.float32)

    out = jax.block_until_ready(upsample(x, weight))
    ref = upsample_ref(x, weight)

    assert out.shape == (N, n_feat // 2, 2 * H, 2 * W), out.shape
    assert jnp.allclose(out, ref, atol=1e-4, rtol=1e-4), float(jnp.max(jnp.abs(out - ref)))
    print("KERNEL_OK")
</pallas_src>

<mosaic_0001>
module attributes {stable_mosaic.version = 11 : i64} {
  func.func @_upsample_kernel(%arg0: i32, %arg1: memref<1x4x18x18xf32, #tpu.memory_space<vmem>>, %arg2: memref<16x32xf32, #tpu.memory_space<vmem>>, %arg3: memref<16x32xf32, #tpu.memory_space<vmem>>, %arg4: memref<288xf32, #tpu.memory_space<smem>>, %arg5: memref<1x2x16x64xf32, #tpu.memory_space<vmem>>) attributes {dimension_semantics = [#tpu.dimension_semantics<parallel>], iteration_bounds = array<i64: 2>, scalar_prefetch = 0 : i64, scratch_operands = 0 : i64, tpu.core_type = #tpu.core_type<tc>, window_params = [{transform_indices = @transform_0, window_bounds = array<i64: 1, 4, 18, 18>}, {pipeline_mode = #tpu.pipeline_mode<synchronous>, transform_indices = @transform_1, window_bounds = array<i64: 16, 32>}, {pipeline_mode = #tpu.pipeline_mode<synchronous>, transform_indices = @transform_2, window_bounds = array<i64: 16, 32>}, {transform_indices = @transform_3, window_bounds = array<i64: 288>}, {transform_indices = @transform_4, window_bounds = array<i64: 1, 2, 16, 64>}]} {
    %c0 = arith.constant 0 : index
    %c0_0 = arith.constant 0 : index
    %0 = vector.load %arg2[%c0, %c0_0] : memref<16x32xf32, #tpu.memory_space<vmem>>, vector<16x32xf32>
    %c0_1 = arith.constant 0 : index
    %c0_2 = arith.constant 0 : index
    %1 = vector.load %arg3[%c0_1, %c0_2] : memref<16x32xf32, #tpu.memory_space<vmem>>, vector<16x32xf32>
    %c0_i32 = arith.constant 0 : i32
    %c2_i32 = arith.constant 2 : i32
    %2 = arith.addi %c0_i32, %c2_i32 : i32
    %c1_i32 = arith.constant 1 : i32
    scf.for %arg6 = %c0_i32 to %2 step %c1_i32  : i32 {
      %c144_i32 = arith.constant 144 : i32
      %3 = arith.muli %arg6, %c144_i32 : i32
      %cst = arith.constant 0.000000e+00 : f32
      %4 = vector.broadcast %cst : f32 to vector<16x16xf32>
      %cst_4 = arith.constant 0.000000e+00 : f32
      %5 = vector.broadcast %cst_4 : f32 to vector<16x16xf32>
      %cst_5 = arith.constant 0.000000e+00 : f32
      %6 = vector.broadcast %cst_5 : f32 to vector<16x16xf32>
      %cst_6 = arith.constant 0.000000e+00 : f32
      %7 = vector.broadcast %cst_6 : f32 to vector<16x16xf32>
      %c0_7 = arith.constant 0 : index
      %c0_8 = arith.constant 0 : index
      %c0_9 = arith.constant 0 : index
      %c0_10 = arith.constant 0 : index
      %8 = vector.load %arg1[%c0_7, %c0_8, %c0_9, %c0_10] : memref<1x4x18x18xf32, #tpu.memory_space<vmem>>, vector<1x1x16x16xf32>
      %9 = vector.shape_cast %8 : vector<1x1x16x16xf32> to vector<16x16xf32>
      %c0_i32_11 = arith.constant 0 : i32
      %10 = arith.addi %3, %c0_i32_11 : i32
      %c0_i32_12 = arith.constant 0 : i32
      %11 = arith.addi %10, %c0_i32_12 : i32
      %12 = arith.index_cast %11 : i32 to index
      %13 = memref.load %arg4[%12] : memref<288xf32, #tpu.memory_space<smem>>
      %14 = vector.broadcast %13 : f32 to vector<16x16xf32>
      %15 = arith.mulf %14, %9 : vector<16x16xf32>
      %16 = arith.addf %4, %15 : vector<16x16xf32>
      %c36_i32 = arith.constant 36 : i32
      %17 = arith.addi %3, %c36_i32 : i32
      %c0_i32_13 = arith.constant 0 : i32
      %18 = arith.addi %17, %c0_i32_13 : i32
      %19 = arith.index_cast %18 : i32 to index
      %20 = memref.load %arg4[%19] : memref<288xf32, #tpu.memory_space<smem>>
      %21 = vector.broadcast %20 : f32 to vector<16x16xf32>
      %22 = arith.mulf %21, %9 : vector<16x16xf32>
      %23 = arith.addf %5, %22 : vector<16x16xf32>
      %c72_i32 = arith.constant 72 : i32
      %24 = arith.addi %3, %c72_i32 : i32
      %c0_i32_14 = arith.constant 0 : i32
      %25 = arith.addi %24, %c0_i32_14 : i32
      %26 = arith.index_cast %25 : i32 to index
      %27 = memref.load %arg4[%26] : memref<288xf32, #tpu.memory_space<smem>>
      %28 = vector.broadcast %27 : f32 to vector<16x16xf32>
      %29 = arith.mulf %28, %9 : vector<16x16xf32>
      %30 = arith.addf %6, %29 : vector<16x16xf32>
      %c108_i32 = arith.constant 108 : i32
      %31 = arith.addi %3, %c108_i32 : i32
      %c0_i32_15 = arith.constant 0 : i32
      %32 = arith.addi %31, %c0_i32_15 : i32
      %33 = arith.index_cast %32 : i32 to index
      %34 = memref.load %arg4[%33] : memref<288xf32, #tpu.memory_space<smem>>
      %35 = vector.broadcast %34 : f32 to vector<16x16xf32>
      %36 = arith.mulf %35, %9 : vector<16x16xf32>
      %37 = arith.addf %7, %36 : vector<16x16xf32>
      %c0_16 = arith.constant 0 : index
      %c0_17 = arith.constant 0 : index
      %c0_18 = arith.constant 0 : index
      %c1 = arith.constant 1 : index
      %38 = vector.load %arg1[%c0_16, %c0_17, %c0_18, %c1] : memref<1x4x18x18xf32, #tpu.memory_space<vmem>>, vector<1x1x16x16xf32>
      %39 = vector.shape_cast %38 : vector<1x1x16x16xf32> to vector<16x16xf32>
      %c0_i32_19 = arith.constant 0 : i32
      %40 = arith.addi %3, %c0_i32_19 : i32
      %c1_i32_20 = arith.constant 1 : i32
      %41 = arith.addi %40, %c1_i32_20 : i32
      %42 = arith.index_cast %41 : i32 to index
      %43 = memref.load %arg4[%42] : memref<288xf32, #tpu.memory_space<smem>>
      %44 = vector.broadcast %43 : f32 to vector<16x16xf32>
      %45 = arith.mulf %44, %39 : vector<16x16xf32>
      %46 = arith.addf %16, %45 : vector<16x16xf32>
      %c36_i32_21 = arith.constant 36 : i32
      %47 = arith.addi %3, %c36_i32_21 : i32
      %c1_i32_22 = arith.constant 1 : i32
      %48 = arith.addi %47, %c1_i32_22 : i32
      %49 = arith.index_cast %48 : i32 to index
      %50 = memref.load %arg4[%49] : memref<288xf32, #tpu.memory_space<smem>>
      %51 = vector.broadcast %50 : f32 to vector<16x16xf32>
      %52 = arith.mulf %51, %39 : vector<16x16xf32>
      %53 = arith.addf %23, %52 : vector<16x16xf32>
      %c72_i32_23 = arith.constant 72 : i32
      %54 = arith.addi %3, %c72_i32_23 : i32
      %c1_i32_24 = arith.constant 1 : i32
      %55 = arith.addi %54, %c1_i32_24 : i32
      %56 = arith.index_cast %55 : i32 to index
      %57 = memref.load %arg4[%56] : memref<288xf32, #tpu.memory_space<smem>>
      %58 = vector.broadcast %57 : f32 to vector<16x16xf32>
      %59 = arith.mulf %58, %39 : vector<16x16xf32>
      %60 = arith.addf %30, %59 : vector<16x16xf32>
      %c108_i32_25 = arith.constant 108 : i32
      %61 = arith.addi %3, %c108_i32_25 : i32
      %c1_i32_26 = arith.constant 1 : i32
      %62 = arith.addi %61, %c1_i32_26 : i32
      %63 = arith.index_cast %62 : i32 to index
      %64 = memref.load %arg4[%63] : memref<288xf32, #tpu.memory_space<smem>>
      %65 = vector.broadcast %64 : f32 to vector<16x16xf32>
      %66 = arith.mulf %65, %39 : vector<16x16xf32>
      %67 = arith.addf %37, %66 : vector<16x16xf32>
      %c0_27 = arith.constant 0 : index
      %c0_28 = arith.constant 0 : index
      %c0_29 = arith.constant 0 : index
      %c2 = arith.constant 2 : index
      %68 = vector.load %arg1[%c0_27, %c0_28, %c0_29, %c2] : memref<1x4x18x18xf32, #tpu.memory_space<vmem>>, vector<1x1x16x16xf32>
      %69 = vector.shape_cast %68 : vector<1x1x16x16xf32> to vector<16x16xf32>
      %c0_i32_30 = arith.constant 0 : i32
      %70 = arith.addi %3, %c0_i32_30 : i32
      %c2_i32_31 = arith.constant 2 : i32
      %71 = arith.addi %70, %c2_i32_31 : i32
      %72 = arith.index_cast %71 : i32 to index
      %73 = memref.load %arg4[%72] : memref<288xf32, #tpu.memory_space<smem>>
      %74 = vector.broadcast %73 : f32 to vector<16x16xf32>
      %75 = arith.mulf %74, %69 : vector<16x16xf32>
      %76 = arith.addf %46, %75 : vector<16x16xf32>
      %c36_i32_32 = arith.constant 36 : i32
      %77 = arith.addi %3, %c36_i32_32 : i32
      %c2_i32_33 = arith.constant 2 : i32
      %78 = arith.addi %77, %c2_i32_33 : i32
      %79 = arith.index_cast %78 : i32 to index
      %80 = memref.load %arg4[%79] : memref<288xf32, #tpu.memory_space<smem>>
      %81 = vector.broadcast %80 : f32 to vector<16x16xf32>
      %82 = arith.mulf %81, %69 : vector<16x16xf32>
      %83 = arith.addf %53, %82 : vector<16x16xf32>
      %c72_i32_34 = arith.constant 72 : i32
      %84 = arith.addi %3, %c72_i32_34 : i32
      %c2_i32_35 = arith.constant 2 : i32
      %85 = arith.addi %84, %c2_i32_35 : i32
      %86 = arith.index_cast %85 : i32 to index
      %87 = memref.load %arg4[%86] : memref<288xf32, #tpu.memory_space<smem>>
      %88 = vector.broadcast %87 : f32 to vector<16x16xf32>
      %89 = arith.mulf %88, %69 : vector<16x16xf32>
      %90 = arith.addf %60, %89 : vector<16x16xf32>
      %c108_i32_36 = arith.constant 108 : i32
      %91 = arith.addi %3, %c108_i32_36 : i32
      %c2_i32_37 = arith.constant 2 : i32
      %92 = arith.addi %91, %c2_i32_37 : i32
      %93 = arith.index_cast %92 : i32 to index
      %94 = memref.load %arg4[%93] : memref<288xf32, #tpu.memory_space<smem>>
      %95 = vector.broadcast %94 : f32 to vector<16x16xf32>
      %96 = arith.mulf %95, %69 : vector<16x16xf32>
      %97 = arith.addf %67, %96 : vector<16x16xf32>
      %c0_38 = arith.constant 0 : index
      %c0_39 = arith.constant 0 : index
      %c1_40 = arith.constant 1 : index
      %c0_41 = arith.constant 0 : index
      %98 = vector.load %arg1[%c0_38, %c0_39, %c1_40, %c0_41] : memref<1x4x18x18xf32, #tpu.memory_space<vmem>>, vector<1x1x16x16xf32>
      %99 = vector.shape_cast %98 : vector<1x1x16x16xf32> to vector<16x16xf32>
      %c0_i32_42 = arith.constant 0 : i32
      %100 = arith.addi %3, %c0_i32_42 : i32
      %c3_i32 = arith.constant 3 : i32
      %101 = arith.addi %100, %c3_i32 : i32
      %102 = arith.index_cast %101 : i32 to index
      %103 = memref.load %arg4[%102] : memref<288xf32, #tpu.memory_space<smem>>
      %104 = vector.broadcast %103 : f32 to vector<16x16xf32>
      %105 = arith.mulf %104, %99 : vector<16x16xf32>
      %106 = arith.addf %76, %105 : vector<16x16xf32>
      %c36_i32_43 = arith.constant 36 : i32
      %107 = arith.addi %3, %c36_i32_43 : i32
      %c3_i32_44 = arith.constant 3 : i32
      %108 = arith.addi %107, %c3_i32_44 : i32
      %109 = arith.index_cast %108 : i32 to index
      %110 = memref.load %arg4[%109] : memref<288xf32, #tpu.memory_space<smem>>
      %111 = vector.broadcast %110 : f32 to vector<16x16xf32>
      %112 = arith.mulf %111, %99 : vector<16x16xf32>
      %113 = arith.addf %83, %112 : vector<16x16xf32>
      %c72_i32_45 = arith.constant 72 : i32
      %114 = arith.addi %3, %c72_i32_45 : i32
      %c3_i32_46 = arith.constant 3 : i32
      %115 = arith.addi %114, %c3_i32_46 : i32
      %116 = arith.index_cast %115 : i32 to index
      %117 = memref.load %arg4[%116] : memref<288xf32, #tpu.memory_space<smem>>
      %118 = vector.broadcast %117 : f32 to vector<16x16xf32>
      %119 = arith.mulf %118, %99 : vector<16x16xf32>
      %120 = arith.addf %90, %119 : vector<16x16xf32>
      %c108_i32_47 = arith.constant 108 : i32
      %121 = arith.addi %3, %c108_i32_47 : i32
      %c3_i32_48 = arith.constant 3 : i32
      %122 = arith.addi %121, %c3_i32_48 : i32
      %123 = arith.index_cast %122 : i32 to index
      %124 = memref.load %arg4[%123] : memref<288xf32, #tpu.memory_space<smem>>
      %125 = vector.broadcast %124 : f32 to vector<16x16xf32>
      %126 = arith.mulf %125, %99 : vector<16x16xf32>
      %127 = arith.addf %97, %126 : vector<16x16xf32>
      %c0_49 = arith.constant 0 : index
      %c0_50 = arith.constant 0 : index
      %c1_51 = arith.constant 1 : index
      %c1_52 = arith.constant 1 : index
      %128 = vector.load %arg1[%c0_49, %c0_50, %c1_51, %c1_52] : memref<1x4x18x18xf32, #tpu.memory_space<vmem>>, vector<1x1x16x16xf32>
      %129 = vector.shape_cast %128 : vector<1x1x16x16xf32> to vector<16x16xf32>
      %c0_i32_53 = arith.constant 0 : i32
      %130 = arith.addi %3, %c0_i32_53 : i32
      %c4_i32 = arith.constant 4 : i32
      %131 = arith.addi %130, %c4_i32 : i32
      %132 = arith.index_cast %131 : i32 to index
      %133 = memref.load %arg4[%132] : memref<288xf32, #tpu.memory_space<smem>>
      %134 = vector.broadcast %133 : f32 to vector<16x16xf32>
      %135 = arith.mulf %134, %129 : vector<16x16xf32>
      %136 = arith.addf %106, %135 : vector<16x16xf32>
      %c36_i32_54 = arith.constant 36 : i32
      %137 = arith.addi %3, %c36_i32_54 : i32
      %c4_i32_55 = arith.constant 4 : i32
      %138 = arith.addi %137, %c4_i32_55 : i32
      %139 = arith.index_cast %138 : i32 to index
      %140 = memref.load %arg4[%139] : memref<288xf32, #tpu.memory_space<smem>>
      %141 = vector.broadcast %140 : f32 to vector<16x16xf32>
      %142 = arith.mulf %141, %129 : vector<16x16xf32>
      %143 = arith.addf %113, %142 : vector<16x16xf32>
      %c72_i32_56 = arith.constant 72 : i32
      %144 = arith.addi %3, %c72_i32_56 : i32
      %c4_i32_57 = arith.constant 4 : i32
      %145 = arith.addi %144, %c4_i32_57 : i32
      %146 = arith.index_cast %145 : i32 to index
      %147 = memref.load %arg4[%146] : memref<288xf32, #tpu.memory_space<smem>>
      %148 = vector.broadcast %147 : f32 to vector<16x16xf32>
      %149 = arith.mulf %148, %129 : vector<16x16xf32>
      %150 = arith.addf %120, %149 : vector<16x16xf32>
      %c108_i32_58 = arith.constant 108 : i32
      %151 = arith.addi %3, %c108_i32_58 : i32
      %c4_i32_59 = arith.constant 4 : i32
      %152 = arith.addi %151, %c4_i32_59 : i32
      %153 = arith.index_cast %152 : i32 to index
      %154 = memref.load %arg4[%153] : memref<288xf32, #tpu.memory_space<smem>>
      %155 = vector.broadcast %154 : f32 to vector<16x16xf32>
      %156 = arith.mulf %155, %129 : vector<16x16xf32>
      %157 = arith.addf %127, %156 : vector<16x16xf32>
      %c0_60 = arith.constant 0 : index
      %c0_61 = arith.constant 0 : index
      %c1_62 = arith.constant 1 : index
      %c2_63 = arith.constant 2 : index
      %158 = vector.load %arg1[%c0_60, %c0_61, %c1_62, %c2_63] : memref<1x4x18x18xf32, #tpu.memory_space<vmem>>, vector<1x1x16x16xf32>
      %159 = vector.shape_cast %158 : vector<1x1x16x16xf32> to vector<16x16xf32>
      %c0_i32_64 = arith.constant 0 : i32
      %160 = arith.addi %3, %c0_i32_64 : i32
      %c5_i32 = arith.constant 5 : i32
      %161 = arith.addi %160, %c5_i32 : i32
      %162 = arith.index_cast %161 : i32 to index
      %163 = memref.load %arg4[%162] : memref<288xf32, #tpu.memory_space<smem>>
      %164 = vector.broadcast %163 : f32 to vector<16x16xf32>
      %165 = arith.mulf %164, %159 : vector<16x16xf32>
      %166 = arith.addf %136, %165 : vector<16x16xf32>
      %c36_i32_65 = arith.constant 36 : i32
      %167 = arith.addi %3, %c36_i32_65 : i32
      %c5_i32_66 = arith.constant 5 : i32
      %168 = arith.addi %167, %c5_i32_66 : i32
      %169 = arith.index_cast %168 : i32 to index
      %170 = memref.load %arg4[%169] : memref<288xf32, #tpu.memory_space<smem>>
      %171 = vector.broadcast %170 : f32 to vector<16x16xf32>
      %172 = arith.mulf %171, %159 : vector<16x16xf32>
      %173 = arith.addf %143, %172 : vector<16x16xf32>
      %c72_i32_67 = arith.constant 72 : i32
      %174 = arith.addi %3, %c72_i32_67 : i32
      %c5_i32_68 = arith.constant 5 : i32
      %175 = arith.addi %174, %c5_i32_68 : i32
      %176 = arith.index_cast %175 : i32 to index
      %177 = memref.load %arg4[%176] : memref<288xf32, #tpu.memory_space<smem>>
      %178 = vector.broadcast %177 : f32 to vector<16x16xf32>
      %179 = arith.mulf %178, %159 : vector<16x16xf32>
      %180 = arith.addf %150, %179 : vector<16x16xf32>
      %c108_i32_69 = arith.constant 108 : i32
      %181 = arith.addi %3, %c108_i32_69 : i32
      %c5_i32_70 = arith.constant 5 : i32
      %182 = arith.addi %181, %c5_i32_70 : i32
      %183 = arith.index_cast %182 : i32 to index
      %184 = memref.load %arg4[%183] : memref<288xf32, #tpu.memory_space<smem>>
      %185 = vector.broadcast %184 : f32 to vector<16x16xf32>
      %186 = arith.mulf %185, %159 : vector<16x16xf32>
      %187 = arith.addf %157, %186 : vector<16x16xf32>
      %c0_71 = arith.constant 0 : index
      %c0_72 = arith.constant 0 : index
      %c2_73 = arith.constant 2 : index
      %c0_74 = arith.constant 0 : index
      %188 = vector.load %arg1[%c0_71, %c0_72, %c2_73, %c0_74] : memref<1x4x18x18xf32, #tpu.memory_space<vmem>>, vector<1x1x16x16xf32>
      %189 = vector.shape_cast %188 : vector<1x1x16x16xf32> to vector<16x16xf32>
      %c0_i32_75 = arith.constant 0 : i32
      %190 = arith.addi %3, %c0_i32_75 : i32
      %c6_i32 = arith.constant 6 : i32
      %191 = arith.addi %190, %c6_i32 : i32
      %192 = arith.index_cast %191 : i32 to index
      %193 = memref.load %arg4[%192] : memref<288xf32, #tpu.memory_space<smem>>
      %194 = vector.broadcast %193 : f32 to vector<16x16xf32>
      %195 = arith.mulf %194, %189 : vector<16x16xf32>
      %196 = arith.addf %166, %195 : vector<16x16xf32>
      %c36_i32_76 = arith.constant 36 : i32
      %197 = arith.addi %3, %c36_i32_76 : i32
      %c6_i32_77 = arith.constant 6 : i32
      %198 = arith.addi %197, %c6_i32_77 : i32
      %199 = arith.index_cast %198 : i32 to index
      %200 = memref.load %arg4[%199] : memref<288xf32, #tpu.memory_space<smem>>
      %201 = vector.broadcast %200 : f32 to vector<16x16xf32>
      %202 = arith.mulf %201, %189 : vector<16x16xf32>
      %203 = arith.addf %173, %202 : vector<16x16xf32>
      %c72_i32_78 = arith.constant 72 : i32
      %204 = arith.addi %3, %c72_i32_78 : i32
      %c6_i32_79 = arith.constant 6 : i32
      %205 = arith.addi %204, %c6_i32_79 : i32
      %206 = arith.index_cast %205 : i32 to index
      %207 = memref.load %arg4[%206] : memref<288xf32, #tpu.memory_space<smem>>
      %208 = vector.broadcast %207 : f32 to vector<16x16xf32>
      %209 = arith.mulf %208, %189 : vector<16x16xf32>
      %210 = arith.addf %180, %209 : vector<16x16xf32>
      %c108_i32_80 = arith.constant 108 : i32
      %211 = arith.addi %3, %c108_i32_80 : i32
      %c6_i32_81 = arith.constant 6 : i32
      %212 = arith.addi %211, %c6_i32_81 : i32
      %213 = arith.index_cast %212 : i32 to index
      %214 = memref.load %arg4[%213] : memref<288xf32, #tpu.memory_space<smem>>
      %215 = vector.broadcast %214 : f32 to vector<16x16xf32>
      %216 = arith.mulf %215, %189 : vector<16x16xf32>
      %217 = arith.addf %187, %216 : vector<16x16xf32>
      %c0_82 = arith.constant 0 : index
      %c0_83 = arith.constant 0 : index
      %c2_84 = arith.constant 2 : index
      %c1_85 = arith.constant 1 : index
      %218 = vector.load %arg1[%c0_82, %c0_83, %c2_84, %c1_85] : memref<1x4x18x18xf32, #tpu.memory_space<vmem>>, vector<1x1x16x16xf32>
      %219 = vector.shape_cast %218 : vector<1x1x16x16xf32> to vector<16x16xf32>
      %c0_i32_86 = arith.constant 0 : i32
      %220 = arith.addi %3, %c0_i32_86 : i32
      %c7_i32 = arith.constant 7 : i32
      %221 = arith.addi %220, %c7_i32 : i32
      %222 = arith.index_cast %221 : i32 to index
      %223 = memref.load %arg4[%222] : memref<288xf32, #tpu.memory_space<smem>>
      %224 = vector.broadcast %223 : f32 to vector<16x16xf32>
      %225 = arith.mulf %224, %219 : vector<16x16xf32>
      %226 = arith.addf %196, %225 : vector<16x16xf32>
      %c36_i32_87 = arith.constant 36 : i32
      %227 = arith.addi %3, %c36_i32_87 : i32
      %c7_i32_88 = arith.constant 7 : i32
      %228 = arith.addi %227, %c7_i32_88 : i32
      %229 = arith.index_cast %228 : i32 to index
      %230 = memref.load %arg4[%229] : memref<288xf32, #tpu.memory_space<smem>>
      %231 = vector.broadcast %230 : f32 to vector<16x16xf32>
      %232 = arith.mulf %231, %219 : vector<16x16xf32>
      %233 = arith.addf %203, %232 : vector<16x16xf32>
      %c72_i32_89 = arith.constant 72 : i32
      %234 = arith.addi %3, %c72_i32_89 : i32
      %c7_i32_90 = arith.constant 7 : i32
      %235 = arith.addi %234, %c7_i32_90 : i32
      %236 = arith.index_cast %235 : i32 to index
      %237 = memref.load %arg4[%236] : memref<288xf32, #tpu.memory_space<smem>>
      %238 = vector.broadcast %237 : f32 to vector<16x16xf32>
      %239 = arith.mulf %238, %219 : vector<16x16xf32>
      %240 = arith.addf %210, %239 : vector<16x16xf32>
      %c108_i32_91 = arith.constant 108 : i32
      %241 = arith.addi %3, %c108_i32_91 : i32
      %c7_i32_92 = arith.constant 7 : i32
      %242 = arith.addi %241, %c7_i32_92 : i32
      %243 = arith.index_cast %242 : i32 to index
      %244 = memref.load %arg4[%243] : memref<288xf32, #tpu.memory_space<smem>>
      %245 = vector.broadcast %244 : f32 to vector<16x16xf32>
      %246 = arith.mulf %245, %219 : vector<16x16xf32>
      %247 = arith.addf %217, %246 : vector<16x16xf32>
      %c0_93 = arith.constant 0 : index
      %c0_94 = arith.constant 0 : index
      %c2_95 = arith.constant 2 : index
      %c2_96 = arith.constant 2 : index
      %248 = vector.load %arg1[%c0_93, %c0_94, %c2_95, %c2_96] : memref<1x4x18x18xf32, #tpu.memory_space<vmem>>, vector<1x1x16x16xf32>
      %249 = vector.shape_cast %248 : vector<1x1x16x16xf32> to vector<16x16xf32>
      %c0_i32_97 = arith.constant 0 : i32
      %250 = arith.addi %3, %c0_i32_97 : i32
      %c8_i32 = arith.constant 8 : i32
      %251 = arith.addi %250, %c8_i32 : i32
      %252 = arith.index_cast %251 : i32 to index
      %253 = memref.load %arg4[%252] : memref<288xf32, #tpu.memory_space<smem>>
      %254 = vector.broadcast %253 : f32 to vector<16x16xf32>
      %255 = arith.mulf %254, %249 : vector<16x16xf32>
      %256 = arith.addf %226, %255 : vector<16x16xf32>
      %c36_i32_98 = arith.constant 36 : i32
      %257 = arith.addi %3, %c36_i32_98 : i32
      %c8_i32_99 = arith.constant 8 : i32
      %258 = arith.addi %257, %c8_i32_99 : i32
      %259 = arith.index_cast %258 : i32 to index
      %260 = memref.load %arg4[%259] : memref<288xf32, #tpu.memory_space<smem>>
      %261 = vector.broadcast %260 : f32 to vector<16x16xf32>
      %262 = arith.mulf %261, %249 : vector<16x16xf32>
      %263 = arith.addf %233, %262 : vector<16x16xf32>
      %c72_i32_100 = arith.constant 72 : i32
      %264 = arith.addi %3, %c72_i32_100 : i32
      %c8_i32_101 = arith.constant 8 : i32
      %265 = arith.addi %264, %c8_i32_101 : i32
      %266 = arith.index_cast %265 : i32 to index
      %267 = memref.load %arg4[%266] : memref<288xf32, #tpu.memory_space<smem>>
      %268 = vector.broadcast %267 : f32 to vector<16x16xf32>
      %269 = arith.mulf %268, %249 : vector<16x16xf32>
      %270 = arith.addf %240, %269 : vector<16x16xf32>
      %c108_i32_102 = arith.constant 108 : i32
      %271 = arith.addi %3, %c108_i32_102 : i32
      %c8_i32_103 = arith.constant 8 : i32
      %272 = arith.addi %271, %c8_i32_103 : i32
      %273 = arith.index_cast %272 : i32 to index
      %274 = memref.load %arg4[%273] : memref<288xf32, #tpu.memory_space<smem>>
      %275 = vector.broadcast %274 : f32 to vector<16x16xf32>
      %276 = arith.mulf %275, %249 : vector<16x16xf32>
      %277 = arith.addf %247, %276 : vector<16x16xf32>
      %c0_104 = arith.constant 0 : index
      %c1_105 = arith.constant 1 : index
      %c0_106 = arith.constant 0 : index
      %c0_107 = arith.constant 0 : index
      %278 = vector.load %arg1[%c0_104, %c1_105, %c0_106, %c0_107] : memref<1x4x18x18xf32, #tpu.memory_space<vmem>>, vector<1x1x16x16xf32>
      %279 = vector.shape_cast %278 : vector<1x1x16x16xf32> to vector<16x16xf32>
      %c0_i32_108 = arith.constant 0 : i32
      %280 = arith.addi %3, %c0_i32_108 : i32
      %c9_i32 = arith.constant 9 : i32
      %281 = arith.addi %280, %c9_i32 : i32
      %282 = arith.index_cast %281 : i32 to index
      %283 = memref.load %arg4[%282] : memref<288xf32, #tpu.memory_space<smem>>
      %284 = vector.broadcast %283 : f32 to vector<16x16xf32>
      %285 = arith.mulf %284, %279 : vector<16x16xf32>
      %286 = arith.addf %256, %285 : vector<16x16xf32>
      %c36_i32_109 = arith.constant 36 : i32
      %287 = arith.addi %3, %c36_i32_109 : i32
      %c9_i32_110 = arith.constant 9 : i32
      %288 = arith.addi %287, %c9_i32_110 : i32
      %289 = arith.index_cast %288 : i32 to index
      %290 = memref.load %arg4[%289] : memref<288xf32, #tpu.memory_space<smem>>
      %291 = vector.broadcast %290 : f32 to vector<16x16xf32>
      %292 = arith.mulf %291, %279 : vector<16x16xf32>
      %293 = arith.addf %263, %292 : vector<16x16xf32>
      %c72_i32_111 = arith.constant 72 : i32
      %294 = arith.addi %3, %c72_i32_111 : i32
      %c9_i32_112 = arith.constant 9 : i32
      %295 = arith.addi %294, %c9_i32_112 : i32
      %296 = arith.index_cast %295 : i32 to index
      %297 = memref.load %arg4[%296] : memref<288xf32, #tpu.memory_space<smem>>
      %298 = vector.broadcast %297 : f32 to vector<16x16xf32>
      %299 = arith.mulf %298, %279 : vector<16x16xf32>
      %300 = arith.addf %270, %299 : vector<16x16xf32>
      %c108_i32_113 = arith.constant 108 : i32
      %301 = arith.addi %3, %c108_i32_113 : i32
      %c9_i32_114 = arith.constant 9 : i32
      %302 = arith.addi %301, %c9_i32_114 : i32
      %303 = arith.index_cast %302 : i32 to index
      %304 = memref.load %arg4[%303] : memref<288xf32, #tpu.memory_space<smem>>
      %305 = vector.broadcast %304 : f32 to vector<16x16xf32>
      %306 = arith.mulf %305, %279 : vector<16x16xf32>
      %307 = arith.addf %277, %306 : vector<16x16xf32>
      %c0_115 = arith.constant 0 : index
      %c1_116 = arith.constant 1 : index
      %c0_117 = arith.constant 0 : index
      %c1_118 = arith.constant 1 : index
      %308 = vector.load %arg1[%c0_115, %c1_116, %c0_117, %c1_118] : memref<1x4x18x18xf32, #tpu.memory_space<vmem>>, vector<1x1x16x16xf32>
      %309 = vector.shape_cast %308 : vector<1x1x16x16xf32> to vector<16x16xf32>
      %c0_i32_119 = arith.constant 0 : i32
      %310 = arith.addi %3, %c0_i32_119 : i32
      %c10_i32 = arith.constant 10 : i32
      %311 = arith.addi %310, %c10_i32 : i32
      %312 = arith.index_cast %311 : i32 to index
      %313 = memref.load %arg4[%312] : memref<288xf32, #tpu.memory_space<smem>>
      %314 = vector.broadcast %313 : f32 to vector<16x16xf32>
      %315 = arith.mulf %314, %309 : vector<16x16xf32>
      %316 = arith.addf %286, %315 : vector<16x16xf32>
      %c36_i32_120 = arith.constant 36 : i32
      %317 = arith.addi %3, %c36_i32_120 : i32
      %c10_i32_121 = arith.constant 10 : i32
      %318 = arith.addi %317, %c10_i32_121 : i32
      %319 = arith.index_cast %318 : i32 to index
      %320 = memref.load %arg4[%319] : memref<288xf32, #tpu.memory_space<smem>>
      %321 = vector.broadcast %320 : f32 to vector<16x16xf32>
      %322 = arith.mulf %321, %309 : vector<16x16xf32>
      %323 = arith.addf %293, %322 : vector<16x16xf32>
      %c72_i32_122 = arith.constant 72 : i32
      %324 = arith.addi %3, %c72_i32_122 : i32
      %c10_i32_123 = arith.constant 10 : i32
      %325 = arith.addi %324, %c10_i32_123 : i32
      %326 = arith.index_cast %325 : i32 to index
      %327 = memref.load %arg4[%326] : memref<288xf32, #tpu.memory_space<smem>>
      %328 = vector.broadcast %327 : f32 to vector<16x16xf32>
      %329 = arith.mulf %328, %309 : vector<16x16xf32>
      %330 = arith.addf %300, %329 : vector<16x16xf32>
      %c108_i32_124 = arith.constant 108 : i32
      %331 = arith.addi %3, %c108_i32_124 : i32
      %c10_i32_125 = arith.constant 10 : i32
      %332 = arith.addi %331, %c10_i32_125 : i32
      %333 = arith.index_cast %332 : i32 to index
      %334 = memref.load %arg4[%333] : memref<288xf32, #tpu.memory_space<smem>>
      %335 = vector.broadcast %334 : f32 to vector<16x16xf32>
      %336 = arith.mulf %335, %309 : vector<16x16xf32>
      %337 = arith.addf %307, %336 : vector<16x16xf32>
      %c0_126 = arith.constant 0 : index
      %c1_127 = arith.constant 1 : index
      %c0_128 = arith.constant 0 : index
      %c2_129 = arith.constant 2 : index
      %338 = vector.load %arg1[%c0_126, %c1_127, %c0_128, %c2_129] : memref<1x4x18x18xf32, #tpu.memory_space<vmem>>, vector<1x1x16x16xf32>
      %339 = vector.shape_cast %338 : vector<1x1x16x16xf32> to vector<16x16xf32>
      %c0_i32_130 = arith.constant 0 : i32
      %340 = arith.addi %3, %c0_i32_130 : i32
      %c11_i32 = arith.constant 11 : i32
      %341 = arith.addi %340, %c11_i32 : i32
      %342 = arith.index_cast %341 : i32 to index
      %343 = memref.load %arg4[%342] : memref<288xf32, #tpu.memory_space<smem>>
      %344 = vector.broadcast %343 : f32 to vector<16x16xf32>
      %345 = arith.mulf %344, %339 : vector<16x16xf32>
      %346 = arith.addf %316, %345 : vector<16x16xf32>
      %c36_i32_131 = arith.constant 36 : i32
      %347 = arith.addi %3, %c36_i32_131 : i32
      %c11_i32_132 = arith.constant 11 : i32
      %348 = arith.addi %347, %c11_i32_132 : i32
      %349 = arith.index_cast %348 : i32 to index
      %350 = memref.load %arg4[%349] : memref<288xf32, #tpu.memory_space<smem>>
      %351 = vector.broadcast %350 : f32 to vector<16x16xf32>
      %352 = arith.mulf %351, %339 : vector<16x16xf32>
      %353 = arith.addf %323, %352 : vector<16x16xf32>
      %c72_i32_133 = arith.constant 72 : i32
      %354 = arith.addi %3, %c72_i32_133 : i32
      %c11_i32_134 = arith.constant 11 : i32
      %355 = arith.addi %354, %c11_i32_134 : i32
      %356 = arith.index_cast %355 : i32 to index
      %357 = memref.load %arg4[%356] : memref<288xf32, #tpu.memory_space<smem>>
      %358 = vector.broadcast %357 : f32 to vector<16x16xf32>
      %359 = arith.mulf %358, %339 : vector<16x16xf32>
      %360 = arith.addf %330, %359 : vector<16x16xf32>
      %c108_i32_135 = arith.constant 108 : i32
      %361 = arith.addi %3, %c108_i32_135 : i32
      %c11_i32_136 = arith.constant 11 : i32
      %362 = arith.addi %361, %c11_i32_136 : i32
      %363 = arith.index_cast %362 : i32 to index
      %364 = memref.load %arg4[%363] : memref<288xf32, #tpu.memory_space<smem>>
      %365 = vector.broadcast %364 : f32 to vector<16x16xf32>
      %366 = arith.mulf %365, %339 : vector<16x16xf32>
      %367 = arith.addf %337, %366 : vector<16x16xf32>
      %c0_137 = arith.constant 0 : index
      %c1_138 = arith.constant 1 : index
      %c1_139 = arith.constant 1 : index
      %c0_140 = arith.constant 0 : index
      %368 = vector.load %arg1[%c0_137, %c1_138, %c1_139, %c0_140] : memref<1x4x18x18xf32, #tpu.memory_space<vmem>>, vector<1x1x16x16xf32>
      %369 = vector.shape_cast %368 : vector<1x1x16x16xf32> to vector<16x16xf32>
      %c0_i32_141 = arith.constant 0 : i32
      %370 = arith.addi %3, %c0_i32_141 : i32
      %c12_i32 = arith.constant 12 : i32
      %371 = arith.addi %370, %c12_i32 : i32
      %372 = arith.index_cast %371 : i32 to index
      %373 = memref.load %arg4[%372] : memref<288xf32, #tpu.memory_space<smem>>
      %374 = vector.broadcast %373 : f32 to vector<16x16xf32>
      %375 = arith.mulf %374, %369 : vector<16x16xf32>
      %376 = arith.addf %346, %375 : vector<16x16xf32>
      %c36_i32_142 = arith.constant 36 : i32
      %377 = arith.addi %3, %c36_i32_142 : i32
      %c12_i32_143 = arith.constant 12 : i32
      %378 = arith.addi %377, %c12_i32_143 : i32
      %379 = arith.index_cast %378 : i32 to index
      %380 = memref.load %arg4[%379] : memref<288xf32, #tpu.memory_space<smem>>
      %381 = vector.broadcast %380 : f32 to vector<16x16xf32>
      %382 = arith.mulf %381, %369 : vector<16x16xf32>
      %383 = arith.addf %353, %382 : vector<16x16xf32>
      %c72_i32_144 = arith.constant 72 : i32
      %384 = arith.addi %3, %c72_i32_144 : i32
      %c12_i32_145 = arith.constant 12 : i32
      %385 = arith.addi %384, %c12_i32_145 : i32
      %386 = arith.index_cast %385 : i32 to index
      %387 = memref.load %arg4[%386] : memref<288xf32, #tpu.memory_space<smem>>
      %388 = vector.broadcast %387 : f32 to vector<16x16xf32>
      %389 = arith.mulf %388, %369 : vector<16x16xf32>
      %390 = arith.addf %360, %389 : vector<16x16xf32>
      %c108_i32_146 = arith.constant 108 : i32
      %391 = arith.addi %3, %c108_i32_146 : i32
      %c12_i32_147 = arith.constant 12 : i32
      %392 = arith.addi %391, %c12_i32_147 : i32
      %393 = arith.index_cast %392 : i32 to index
      %394 = memref.load %arg4[%393] : memref<288xf32, #tpu.memory_space<smem>>
      %395 = vector.broadcast %394 : f32 to vector<16x16xf32>
      %396 = arith.mulf %395, %369 : vector<16x16xf32>
      %397 = arith.addf %367, %396 : vector<16x16xf32>
      %c0_148 = arith.constant 0 : index
      %c1_149 = arith.constant 1 : index
      %c1_150 = arith.constant 1 : index
      %c1_151 = arith.constant 1 : index
      %398 = vector.load %arg1[%c0_148, %c1_149, %c1_150, %c1_151] : memref<1x4x18x18xf32, #tpu.memory_space<vmem>>, vector<1x1x16x16xf32>
      %399 = vector.shape_cast %398 : vector<1x1x16x16xf32> to vector<16x16xf32>
      %c0_i32_152 = arith.constant 0 : i32
      %400 = arith.addi %3, %c0_i32_152 : i32
      %c13_i32 = arith.constant 13 : i32
      %401 = arith.addi %400, %c13_i32 : i32
      %402 = arith.index_cast %401 : i32 to index
      %403 = memref.load %arg4[%402] : memref<288xf32, #tpu.memory_space<smem>>
      %404 = vector.broadcast %403 : f32 to vector<16x16xf32>
      %405 = arith.mulf %404, %399 : vector<16x16xf32>
      %406 = arith.addf %376, %405 : vector<16x16xf32>
      %c36_i32_153 = arith.constant 36 : i32
      %407 = arith.addi %3, %c36_i32_153 : i32
      %c13_i32_154 = arith.constant 13 : i32
      %408 = arith.addi %407, %c13_i32_154 : i32
      %409 = arith.index_cast %408 : i32 to index
      %410 = memref.load %arg4[%409] : memref<288xf32, #tpu.memory_space<smem>>
      %411 = vector.broadcast %410 : f32 to vector<16x16xf32>
      %412 = arith.mulf %411, %399 : vector<16x16xf32>
      %413 = arith.addf %383, %412 : vector<16x16xf32>
      %c72_i32_155 = arith.constant 72 : i32
      %414 = arith.addi %3, %c72_i32_155 : i32
      %c13_i32_156 = arith.constant 13 : i32
      %415 = arith.addi %414, %c13_i32_156 : i32
      %416 = arith.index_cast %415 : i32 to index
      %417 = memref.load %arg4[%416] : memref<288xf32, #tpu.memory_space<smem>>
      %418 = vector.broadcast %417 : f32 to vector<16x16xf32>
      %419 = arith.mulf %418, %399 : vector<16x16xf32>
      %420 = arith.addf %390, %419 : vector<16x16xf32>
      %c108_i32_157 = arith.constant 108 : i32
      %421 = arith.addi %3, %c108_i32_157 : i32
      %c13_i32_158 = arith.constant 13 : i32
      %422 = arith.addi %421, %c13_i32_158 : i32
      %423 = arith.index_cast %422 : i32 to index
      %424 = memref.load %arg4[%423] : memref<288xf32, #tpu.memory_space<smem>>
      %425 = vector.broadcast %424 : f32 to vector<16x16xf32>
      %426 = arith.mulf %425, %399 : vector<16x16xf32>
      %427 = arith.addf %397, %426 : vector<16x16xf32>
      %c0_159 = arith.constant 0 : index
      %c1_160 = arith.constant 1 : index
      %c1_161 = arith.constant 1 : index
      %c2_162 = arith.constant 2 : index
      %428 = vector.load %arg1[%c0_159, %c1_160, %c1_161, %c2_162] : memref<1x4x18x18xf32, #tpu.memory_space<vmem>>, vector<1x1x16x16xf32>
      %429 = vector.shape_cast %428 : vector<1x1x16x16xf32> to vector<16x16xf32>
      %c0_i32_163 = arith.constant 0 : i32
      %430 = arith.addi %3, %c0_i32_163 : i32
      %c14_i32 = arith.constant 14 : i32
      %431 = arith.addi %430, %c14_i32 : i32
      %432 = arith.index_cast %431 : i32 to index
      %433 = memref.load %arg4[%432] : memref<288xf32, #tpu.memory_space<smem>>
      %434 = vector.broadcast %433 : f32 to vector<16x16xf32>
      %435 = arith.mulf %434, %429 : vector<16x16xf32>
      %436 = arith.addf %406, %435 : vector<16x16xf32>
      %c36_i32_164 = arith.constant 36 : i32
      %437 = arith.addi %3, %c36_i32_164 : i32
      %c14_i32_165 = arith.constant 14 : i32
      %438 = arith.addi %437, %c14_i32_165 : i32
      %439 = arith.index_cast %438 : i32 to index
      %440 = memref.load %arg4[%439] : memref<288xf32, #tpu.memory_space<smem>>
      %441 = vector.broadcast %440 : f32 to vector<16x16xf32>
      %442 = arith.mulf %441, %429 : vector<16x16xf32>
      %443 = arith.addf %413, %442 : vector<16x16xf32>
      %c72_i32_166 = arith.constant 72 : i32
      %444 = arith.addi %3, %c72_i32_166 : i32
      %c14_i32_167 = arith.constant 14 : i32
      %445 = arith.addi %444, %c14_i32_167 : i32
      %446 = arith.index_cast %445 : i32 to index
      %447 = memref.load %arg4[%446] : memref<288xf32, #tpu.memory_space<smem>>
      %448 = vector.broadcast %447 : f32 to vector<16x16xf32>
      %449 = arith.mulf %448, %429 : vector<16x16xf32>
      %450 = arith.addf %420, %449 : vector<16x16xf32>
      %c108_i32_168 = arith.constant 108 : i32
      %451 = arith.addi %3, %c108_i32_168 : i32
      %c14_i32_169 = arith.constant 14 : i32
      %452 = arith.addi %451, %c14_i32_169 : i32
      %453 = arith.index_cast %452 : i32 to index
      %454 = memref.load %arg4[%453] : memref<288xf32, #tpu.memory_space<smem>>
      %455 = vector.broadcast %454 : f32 to vector<16x16xf32>
      %456 = arith.mulf %455, %429 : vector<16x16xf32>
      %457 = arith.addf %427, %456 : vector<16x16xf32>
      %c0_170 = arith.constant 0 : index
      %c1_171 = arith.constant 1 : index
      %c2_172 = arith.constant 2 : index
      %c0_173 = arith.constant 0 : index
      %458 = vector.load %arg1[%c0_170, %c1_171, %c2_172, %c0_173] : memref<1x4x18x18xf32, #tpu.memory_space<vmem>>, vector<1x1x16x16xf32>
      %459 = vector.shape_cast %458 : vector<1x1x16x16xf32> to vector<16x16xf32>
      %c0_i32_174 = arith.constant 0 : i32
      %460 = arith.addi %3, %c0_i32_174 : i32
      %c15_i32 = arith.constant 15 : i32
      %461 = arith.addi %460, %c15_i32 : i32
      %462 = arith.index_cast %461 : i32 to index
      %463 = memref.load %arg4[%462] : memref<288xf32, #tpu.memory_space<smem>>
      %464 = vector.broadcast %463 : f32 to vector<16x16xf32>
      %465 = arith.mulf %464, %459 : vector<16x16xf32>
      %466 = arith.addf %436, %465 : vector<16x16xf32>
      %c36_i32_175 = arith.constant 36 : i32
      %467 = arith.addi %3, %c36_i32_175 : i32
      %c15_i32_176 = arith.constant 15 : i32
      %468 = arith.addi %467, %c15_i32_176 : i32
      %469 = arith.index_cast %468 : i32 to index
      %470 = memref.load %arg4[%469] : memref<288xf32, #tpu.memory_space<smem>>
      %471 = vector.broadcast %470 : f32 to vector<16x16xf32>
      %472 = arith.mulf %471, %459 : vector<16x16xf32>
      %473 = arith.addf %443, %472 : vector<16x16xf32>
      %c72_i32_177 = arith.constant 72 : i32
      %474 = arith.addi %3, %c72_i32_177 : i32
      %c15_i32_178 = arith.constant 15 : i32
      %475 = arith.addi %474, %c15_i32_178 : i32
      %476 = arith.index_cast %475 : i32 to index
      %477 = memref.load %arg4[%476] : memref<288xf32, #tpu.memory_space<smem>>
      %478 = vector.broadcast %477 : f32 to vector<16x16xf32>
      %479 = arith.mulf %478, %459 : vector<16x16xf32>
      %480 = arith.addf %450, %479 : vector<16x16xf32>
      %c108_i32_179 = arith.constant 108 : i32
      %481 = arith.addi %3, %c108_i32_179 : i32
      %c15_i32_180 = arith.constant 15 : i32
      %482 = arith.addi %481, %c15_i32_180 : i32
      %483 = arith.index_cast %482 : i32 to index
      %484 = memref.load %arg4[%483] : memref<288xf32, #tpu.memory_space<smem>>
      %485 = vector.broadcast %484 : f32 to vector<16x16xf32>
      %486 = arith.mulf %485, %459 : vector<16x16xf32>
      %487 = arith.addf %457, %486 : vector<16x16xf32>
      %c0_181 = arith.constant 0 : index
      %c1_182 = arith.constant 1 : index
      %c2_183 = arith.constant 2 : index
      %c1_184 = arith.constant 1 : index
      %488 = vector.load %arg1[%c0_181, %c1_182, %c2_183, %c1_184] : memref<1x4x18x18xf32, #tpu.memory_space<vmem>>, vector<1x1x16x16xf32>
      %489 = vector.shape_cast %488 : vector<1x1x16x16xf32> to vector<16x16xf32>
      %c0_i32_185 = arith.constant 0 : i32
      %490 = arith.addi %3, %c0_i32_185 : i32
      %c16_i32 = arith.constant 16 : i32
      %491 = arith.addi %490, %c16_i32 : i32
      %492 = arith.index_cast %491 : i32 to index
      %493 = memref.load %arg4[%492] : memref<288xf32, #tpu.memory_space<smem>>
      %494 = vector.broadcast %493 : f32 to vector<16x16xf32>
      %495 = arith.mulf %494, %489 : vector<16x16xf32>
      %496 = arith.addf %466, %495 : vector<16x16xf32>
      %c36_i32_186 = arith.constant 36 : i32
      %497 = arith.addi %3, %c36_i32_186 : i32
      %c16_i32_187 = arith.constant 16 : i32
      %498 = arith.addi %497, %c16_i32_187 : i32
      %499 = arith.index_cast %498 : i32 to index
      %500 = memref.load %arg4[%499] : memref<288xf32, #tpu.memory_space<smem>>
      %501 = vector.broadcast %500 : f32 to vector<16x16xf32>
      %502 = arith.mulf %501, %489 : vector<16x16xf32>
      %503 = arith.addf %473, %502 : vector<16x16xf32>
      %c72_i32_188 = arith.constant 72 : i32
      %504 = arith.addi %3, %c72_i32_188 : i32
      %c16_i32_189 = arith.constant 16 : i32
      %505 = arith.addi %504, %c16_i32_189 : i32
      %506 = arith.index_cast %505 : i32 to index
      %507 = memref.load %arg4[%506] : memref<288xf32, #tpu.memory_space<smem>>
      %508 = vector.broadcast %507 : f32 to vector<16x16xf32>
      %509 = arith.mulf %508, %489 : vector<16x16xf32>
      %510 = arith.addf %480, %509 : vector<16x16xf32>
      %c108_i32_190 = arith.constant 108 : i32
      %511 = arith.addi %3, %c108_i32_190 : i32
      %c16_i32_191 = arith.constant 16 : i32
      %512 = arith.addi %511, %c16_i32_191 : i32
      %513 = arith.index_cast %512 : i32 to index
      %514 = memref.load %arg4[%513] : memref<288xf32, #tpu.memory_space<smem>>
      %515 = vector.broadcast %514 : f32 to vector<16x16xf32>
      %516 = arith.mulf %515, %489 : vector<16x16xf32>
      %517 = arith.addf %487, %516 : vector<16x16xf32>
      %c0_192 = arith.constant 0 : index
      %c1_193 = arith.constant 1 : index
      %c2_194 = arith.constant 2 : index
      %c2_195 = arith.constant 2 : index
      %518 = vector.load %arg1[%c0_192, %c1_193, %c2_194, %c2_195] : memref<1x4x18x18xf32, #tpu.memory_space<vmem>>, vector<1x1x16x16xf32>
      %519 = vector.shape_cast %518 : vector<1x1x16x16xf32> to vector<16x16xf32>
      %c0_i32_196 = arith.constant 0 : i32
      %520 = arith.addi %3, %c0_i32_196 : i32
      %c17_i32 = arith.constant 17 : i32
      %521 = arith.addi %520, %c17_i32 : i32
      %522 = arith.index_cast %521 : i32 to index
      %523 = memref.load %arg4[%522] : memref<288xf32, #tpu.memory_space<smem>>
      %524 = vector.broadcast %523 : f32 to vector<16x16xf32>
      %525 = arith.mulf %524, %519 : vector<16x16xf32>
      %526 = arith.addf %496, %525 : vector<16x16xf32>
      %c36_i32_197 = arith.constant 36 : i32
      %527 = arith.addi %3, %c36_i32_197 : i32
      %c17_i32_198 = arith.constant 17 : i32
      %528 = arith.addi %527, %c17_i32_198 : i32
      %529 = arith.index_cast %528 : i32 to index
      %530 = memref.load %arg4[%529] : memref<288xf32, #tpu.memory_space<smem>>
      %531 = vector.broadcast %530 : f32 to vector<16x16xf32>
      %532 = arith.mulf %531, %519 : vector<16x16xf32>
      %533 = arith.addf %503, %532 : vector<16x16xf32>
      %c72_i32_199 = arith.constant 72 : i32
      %534 = arith.addi %3, %c72_i32_199 : i32
      %c17_i32_200 = arith.constant 17 : i32
      %535 = arith.addi %534, %c17_i32_200 : i32
      %536 = arith.index_cast %535 : i32 to index
      %537 = memref.load %arg4[%536] : memref<288xf32, #tpu.memory_space<smem>>
      %538 = vector.broadcast %537 : f32 to vector<16x16xf32>
      %539 = arith.mulf %538, %519 : vector<16x16xf32>
      %540 = arith.addf %510, %539 : vector<16x16xf32>
      %c108_i32_201 = arith.constant 108 : i32
      %541 = arith.addi %3, %c108_i32_201 : i32
      %c17_i32_202 = arith.constant 17 : i32
      %542 = arith.addi %541, %c17_i32_202 : i32
      %543 = arith.index_cast %542 : i32 to index
      %544 = memref.load %arg4[%543] : memref<288xf32, #tpu.memory_space<smem>>
      %545 = vector.broadcast %544 : f32 to vector<16x16xf32>
      %546 = arith.mulf %545, %519 : vector<16x16xf32>
      %547 = arith.addf %517, %546 : vector<16x16xf32>
      %c0_203 = arith.constant 0 : index
      %c2_204 = arith.constant 2 : index
      %c0_205 = arith.constant 0 : index
      %c0_206 = arith.constant 0 : index
      %548 = vector.load %arg1[%c0_203, %c2_204, %c0_205, %c0_206] : memref<1x4x18x18xf32, #tpu.memory_space<vmem>>, vector<1x1x16x16xf32>
      %549 = vector.shape_cast %548 : vector<1x1x16x16xf32> to vector<16x16xf32>
      %c0_i32_207 = arith.constant 0 : i32
      %550 = arith.addi %3, %c0_i32_207 : i32
      %c18_i32 = arith.constant 18 : i32
      %551 = arith.addi %550, %c18_i32 : i32
      %552 = arith.index_cast %551 : i32 to index
      %553 = memref.load %arg4[%552] : memref<288xf32, #tpu.memory_space<smem>>
      %554 = vector.broadcast %553 : f32 to vector<16x16xf32>
      %555 = arith.mulf %554, %549 : vector<16x16xf32>
      %556 = arith.addf %526, %555 : vector<16x16xf32>
      %c36_i32_208 = arith.constant 36 : i32
      %557 = arith.addi %3, %c36_i32_208 : i32
      %c18_i32_209 = arith.constant 18 : i32
      %558 = arith.addi %557, %c18_i32_209 : i32
      %559 = arith.index_cast %558 : i32 to index
      %560 = memref.load %arg4[%559] : memref<288xf32, #tpu.memory_space<smem>>
      %561 = vector.broadcast %560 : f32 to vector<16x16xf32>
      %562 = arith.mulf %561, %549 : vector<16x16xf32>
      %563 = arith.addf %533, %562 : vector<16x16xf32>
      %c72_i32_210 = arith.constant 72 : i32
      %564 = arith.addi %3, %c72_i32_210 : i32
      %c18_i32_211 = arith.constant 18 : i32
      %565 = arith.addi %564, %c18_i32_211 : i32
      %566 = arith.index_cast %565 : i32 to index
      %567 = memref.load %arg4[%566] : memref<288xf32, #tpu.memory_space<smem>>
      %568 = vector.broadcast %567 : f32 to vector<16x16xf32>
      %569 = arith.mulf %568, %549 : vector<16x16xf32>
      %570 = arith.addf %540, %569 : vector<16x16xf32>
      %c108_i32_212 = arith.constant 108 : i32
      %571 = arith.addi %3, %c108_i32_212 : i32
      %c18_i32_213 = arith.constant 18 : i32
      %572 = arith.addi %571, %c18_i32_213 : i32
      %573 = arith.index_cast %572 : i32 to index
      %574 = memref.load %arg4[%573] : memref<288xf32, #tpu.memory_space<smem>>
      %575 = vector.broadcast %574 : f32 to vector<16x16xf32>
      %576 = arith.mulf %575, %549 : vector<16x16xf32>
      %577 = arith.addf %547, %576 : vector<16x16xf32>
      %c0_214 = arith.constant 0 : index
      %c2_215 = arith.constant 2 : index
      %c0_216 = arith.constant 0 : index
      %c1_217 = arith.constant 1 : index
      %578 = vector.load %arg1[%c0_214, %c2_215, %c0_216, %c1_217] : memref<1x4x18x18xf32, #tpu.memory_space<vmem>>, vector<1x1x16x16xf32>
      %579 = vector.shape_cast %578 : vector<1x1x16x16xf32> to vector<16x16xf32>
      %c0_i32_218 = arith.constant 0 : i32
      %580 = arith.addi %3, %c0_i32_218 : i32
      %c19_i32 = arith.constant 19 : i32
      %581 = arith.addi %580, %c19_i32 : i32
      %582 = arith.index_cast %581 : i32 to index
      %583 = memref.load %arg4[%582] : memref<288xf32, #tpu.memory_space<smem>>
      %584 = vector.broadcast %583 : f32 to vector<16x16xf32>
      %585 = arith.mulf %584, %579 : vector<16x16xf32>
      %586 = arith.addf %556, %585 : vector<16x16xf32>
      %c36_i32_219 = arith.constant 36 : i32
      %587 = arith.addi %3, %c36_i32_219 : i32
      %c19_i32_220 = arith.constant 19 : i32
      %588 = arith.addi %587, %c19_i32_220 : i32
      %589 = arith.index_cast %588 : i32 to index
      %590 = memref.load %arg4[%589] : memref<288xf32, #tpu.memory_space<smem>>
      %591 = vector.broadcast %590 : f32 to vector<16x16xf32>
      %592 = arith.mulf %591, %579 : vector<16x16xf32>
      %593 = arith.addf %563, %592 : vector<16x16xf32>
      %c72_i32_221 = arith.constant 72 : i32
      %594 = arith.addi %3, %c72_i32_221 : i32
      %c19_i32_222 = arith.constant 19 : i32
      %595 = arith.addi %594, %c19_i32_222 : i32
      %596 = arith.index_cast %595 : i32 to index
      %597 = memref.load %arg4[%596] : memref<288xf32, #tpu.memory_space<smem>>
      %598 = vector.broadcast %597 : f32 to vector<16x16xf32>
      %599 = arith.mulf %598, %579 : vector<16x16xf32>
      %600 = arith.addf %570, %599 : vector<16x16xf32>
      %c108_i32_223 = arith.constant 108 : i32
      %601 = arith.addi %3, %c108_i32_223 : i32
      %c19_i32_224 = arith.constant 19 : i32
      %602 = arith.addi %601, %c19_i32_224 : i32
      %603 = arith.index_cast %602 : i32 to index
      %604 = memref.load %arg4[%603] : memref<288xf32, #tpu.memory_space<smem>>
      %605 = vector.broadcast %604 : f32 to vector<16x16xf32>
      %606 = arith.mulf %605, %579 : vector<16x16xf32>
      %607 = arith.addf %577, %606 : vector<16x16xf32>
      %c0_225 = arith.constant 0 : index
      %c2_226 = arith.constant 2 : index
      %c0_227 = arith.constant 0 : index
      %c2_228 = arith.constant 2 : index
      %608 = vector.load %arg1[%c0_225, %c2_226, %c0_227, %c2_228] : memref<1x4x18x18xf32, #tpu.memory_space<vmem>>, vector<1x1x16x16xf32>
      %609 = vector.shape_cast %608 : vector<1x1x16x16xf32> to vector<16x16xf32>
      %c0_i32_229 = arith.constant 0 : i32
      %610 = arith.addi %3, %c0_i32_229 : i32
      %c20_i32 = arith.constant 20 : i32
      %611 = arith.addi %610, %c20_i32 : i32
      %612 = arith.index_cast %611 : i32 to index
      %613 = memref.load %arg4[%612] : memref<288xf32, #tpu.memory_space<smem>>
      %614 = vector.broadcast %613 : f32 to vector<16x16xf32>
      %615 = arith.mulf %614, %609 : vector<16x16xf32>
      %616 = arith.addf %586, %615 : vector<16x16xf32>
      %c36_i32_230 = arith.constant 36 : i32
      %617 = arith.addi %3, %c36_i32_230 : i32
      %c20_i32_231 = arith.constant 20 : i32
      %618 = arith.addi %617, %c20_i32_231 : i32
      %619 = arith.index_cast %618 : i32 to index
      %620 = memref.load %arg4[%619] : memref<288xf32, #tpu.memory_space<smem>>
      %621 = vector.broadcast %620 : f32 to vector<16x16xf32>
      %622 = arith.mulf %621, %609 : vector<16x16xf32>
      %623 = arith.addf %593, %622 : vector<16x16xf32>
      %c72_i32_232 = arith.constant 72 : i32
      %624 = arith.addi %3, %c72_i32_232 : i32
      %c20_i32_233 = arith.constant 20 : i32
      %625 = arith.addi %624, %c20_i32_233 : i32
      %626 = arith.index_cast %625 : i32 to index
      %627 = memref.load %arg4[%626] : memref<288xf32, #tpu.memory_space<smem>>
      %628 = vector.broadcast %627 : f32 to vector<16x16xf32>
      %629 = arith.mulf %628, %609 : vector<16x16xf32>
      %630 = arith.addf %600, %629 : vector<16x16xf32>
      %c108_i32_234 = arith.constant 108 : i32
      %631 = arith.addi %3, %c108_i32_234 : i32
      %c20_i32_235 = arith.constant 20 : i32
      %632 = arith.addi %631, %c20_i32_235 : i32
      %633 = arith.index_cast %632 : i32 to index
      %634 = memref.load %arg4[%633] : memref<288xf32, #tpu.memory_space<smem>>
      %635 = vector.broadcast %634 : f32 to vector<16x16xf32>
      %636 = arith.mulf %635, %609 : vector<16x16xf32>
      %637 = arith.addf %607, %636 : vector<16x16xf32>
      %c0_236 = arith.constant 0 : index
      %c2_237 = arith.constant 2 : index
      %c1_238 = arith.constant 1 : index
      %c0_239 = arith.constant 0 : index
      %638 = vector.load %arg1[%c0_236, %c2_237, %c1_238, %c0_239] : memref<1x4x18x18xf32, #tpu.memory_space<vmem>>, vector<1x1x16x16xf32>
      %639 = vector.shape_cast %638 : vector<1x1x16x16xf32> to vector<16x16xf32>
      %c0_i32_240 = arith.constant 0 : i32
      %640 = arith.addi %3, %c0_i32_240 : i32
      %c21_i32 = arith.constant 21 : i32
      %641 = arith.addi %640, %c21_i32 : i32
      %642 = arith.index_cast %641 : i32 to index
      %643 = memref.load %arg4[%642] : memref<288xf32, #tpu.memory_space<smem>>
      %644 = vector.broadcast %643 : f32 to vector<16x16xf32>
      %645 = arith.mulf %644, %639 : vector<16x16xf32>
      %646 = arith.addf %616, %645 : vector<16x16xf32>
      %c36_i32_241 = arith.constant 36 : i32
      %647 = arith.addi %3, %c36_i32_241 : i32
      %c21_i32_242 = arith.constant 21 : i32
      %648 = arith.addi %647, %c21_i32_242 : i32
      %649 = arith.index_cast %648 : i32 to index
      %650 = memref.load %arg4[%649] : memref<288xf32, #tpu.memory_space<smem>>
      %651 = vector.broadcast %650 : f32 to vector<16x16xf32>
      %652 = arith.mulf %651, %639 : vector<16x16xf32>
      %653 = arith.addf %623, %652 : vector<16x16xf32>
      %c72_i32_243 = arith.constant 72 : i32
      %654 = arith.addi %3, %c72_i32_243 : i32
      %c21_i32_244 = arith.constant 21 : i32
      %655 = arith.addi %654, %c21_i32_244 : i32
      %656 = arith.index_cast %655 : i32 to index
      %657 = memref.load %arg4[%656] : memref<288xf32, #tpu.memory_space<smem>>
      %658 = vector.broadcast %657 : f32 to vector<16x16xf32>
      %659 = arith.mulf %658, %639 : vector<16x16xf32>
      %660 = arith.addf %630, %659 : vector<16x16xf32>
      %c108_i32_245 = arith.constant 108 : i32
      %661 = arith.addi %3, %c108_i32_245 : i32
      %c21_i32_246 = arith.constant 21 : i32
      %662 = arith.addi %661, %c21_i32_246 : i32
      %663 = arith.index_cast %662 : i32 to index
      %664 = memref.load %arg4[%663] : memref<288xf32, #tpu.memory_space<smem>>
      %665 = vector.broadcast %664 : f32 to vector<16x16xf32>
      %666 = arith.mulf %665, %639 : vector<16x16xf32>
      %667 = arith.addf %637, %666 : vector<16x16xf32>
      %c0_247 = arith.constant 0 : index
      %c2_248 = arith.constant 2 : index
      %c1_249 = arith.constant 1 : index
      %c1_250 = arith.constant 1 : index
      %668 = vector.load %arg1[%c0_247, %c2_248, %c1_249, %c1_250] : memref<1x4x18x18xf32, #tpu.memory_space<vmem>>, vector<1x1x16x16xf32>
      %669 = vector.shape_cast %668 : vector<1x1x16x16xf32> to vector<16x16xf32>
      %c0_i32_251 = arith.constant 0 : i32
      %670 = arith.addi %3, %c0_i32_251 : i32
      %c22_i32 = arith.constant 22 : i32
      %671 = arith.addi %670, %c22_i32 : i32
      %672 = arith.index_cast %671 : i32 to index
      %673 = memref.load %arg4[%672] : memref<288xf32, #tpu.memory_space<smem>>
      %674 = vector.broadcast %673 : f32 to vector<16x16xf32>
      %675 = arith.mulf %674, %669 : vector<16x16xf32>
      %676 = arith.addf %646, %675 : vector<16x16xf32>
      %c36_i32_252 = arith.constant 36 : i32
      %677 = arith.addi %3, %c36_i32_252 : i32
      %c22_i32_253 = arith.constant 22 : i32
      %678 = arith.addi %677, %c22_i32_253 : i32
      %679 = arith.index_cast %678 : i32 to index
      %680 = memref.load %arg4[%679] : memref<288xf32, #tpu.memory_space<smem>>
      %681 = vector.broadcast %680 : f32 to vector<16x16xf32>
      %682 = arith.mulf %681, %669 : vector<16x16xf32>
      %683 = arith.addf %653, %682 : vector<16x16xf32>
      %c72_i32_254 = arith.constant 72 : i32
      %684 = arith.addi %3, %c72_i32_254 : i32
      %c22_i32_255 = arith.constant 22 : i32
      %685 = arith.addi %684, %c22_i32_255 : i32
      %686 = arith.index_cast %685 : i32 to index
      %687 = memref.load %arg4[%686] : memref<288xf32, #tpu.memory_space<smem>>
      %688 = vector.broadcast %687 : f32 to vector<16x16xf32>
      %689 = arith.mulf %688, %669 : vector<16x16xf32>
      %690 = arith.addf %660, %689 : vector<16x16xf32>
      %c108_i32_256 = arith.constant 108 : i32
      %691 = arith.addi %3, %c108_i32_256 : i32
      %c22_i32_257 = arith.constant 22 : i32
      %692 = arith.addi %691, %c22_i32_257 : i32
      %693 = arith.index_cast %692 : i32 to index
      %694 = memref.load %arg4[%693] : memref<288xf32, #tpu.memory_space<smem>>
      %695 = vector.broadcast %694 : f32 to vector<16x16xf32>
      %696 = arith.mulf %695, %669 : vector<16x16xf32>
      %697 = arith.addf %667, %696 : vector<16x16xf32>
      %c0_258 = arith.constant 0 : index
      %c2_259 = arith.constant 2 : index
      %c1_260 = arith.constant 1 : index
      %c2_261 = arith.constant 2 : index
      %698 = vector.load %arg1[%c0_258, %c2_259, %c1_260, %c2_261] : memref<1x4x18x18xf32, #tpu.memory_space<vmem>>, vector<1x1x16x16xf32>
      %699 = vector.shape_cast %698 : vector<1x1x16x16xf32> to vector<16x16xf32>
      %c0_i32_262 = arith.constant 0 : i32
      %700 = arith.addi %3, %c0_i32_262 : i32
      %c23_i32 = arith.constant 23 : i32
      %701 = arith.addi %700, %c23_i32 : i32
      %702 = arith.index_cast %701 : i32 to index
      %703 = memref.load %arg4[%702] : memref<288xf32, #tpu.memory_space<smem>>
      %704 = vector.broadcast %703 : f32 to vector<16x16xf32>
      %705 = arith.mulf %704, %699 : vector<16x16xf32>
      %706 = arith.addf %676, %705 : vector<16x16xf32>
      %c36_i32_263 = arith.constant 36 : i32
      %707 = arith.addi %3, %c36_i32_263 : i32
      %c23_i32_264 = arith.constant 23 : i32
      %708 = arith.addi %707, %c23_i32_264 : i32
      %709 = arith.index_cast %708 : i32 to index
      %710 = memref.load %arg4[%709] : memref<288xf32, #tpu.memory_space<smem>>
      %711 = vector.broadcast %710 : f32 to vector<16x16xf32>
      %712 = arith.mulf %711, %699 : vector<16x16xf32>
      %713 = arith.addf %683, %712 : vector<16x16xf32>
      %c72_i32_265 = arith.constant 72 : i32
      %714 = arith.addi %3, %c72_i32_265 : i32
      %c23_i32_266 = arith.constant 23 : i32
      %715 = arith.addi %714, %c23_i32_266 : i32
      %716 = arith.index_cast %715 : i32 to index
      %717 = memref.load %arg4[%716] : memref<288xf32, #tpu.memory_space<smem>>
      %718 = vector.broadcast %717 : f32 to vector<16x16xf32>
      %719 = arith.mulf %718, %699 : vector<16x16xf32>
      %720 = arith.addf %690, %719 : vector<16x16xf32>
      %c108_i32_267 = arith.constant 108 : i32
      %721 = arith.addi %3, %c108_i32_267 : i32
      %c23_i32_268 = arith.constant 23 : i32
      %722 = arith.addi %721, %c23_i32_268 : i32
      %723 = arith.index_cast %722 : i32 to index
      %724 = memref.load %arg4[%723] : memref<288xf32, #tpu.memory_space<smem>>
      %725 = vector.broadcast %724 : f32 to vector<16x16xf32>
      %726 = arith.mulf %725, %699 : vector<16x16xf32>
      %727 = arith.addf %697, %726 : vector<16x16xf32>
      %c0_269 = arith.constant 0 : index
      %c2_270 = arith.constant 2 : index
      %c2_271 = arith.constant 2 : index
      %c0_272 = arith.constant 0 : index
      %728 = vector.load %arg1[%c0_269, %c2_270, %c2_271, %c0_272] : memref<1x4x18x18xf32, #tpu.memory_space<vmem>>, vector<1x1x16x16xf32>
      %729 = vector.shape_cast %728 : vector<1x1x16x16xf32> to vector<16x16xf32>
      %c0_i32_273 = arith.constant 0 : i32
      %730 = arith.addi %3, %c0_i32_273 : i32
      %c24_i32 = arith.constant 24 : i32
      %731 = arith.addi %730, %c24_i32 : i32
      %732 = arith.index_cast %731 : i32 to index
      %733 = memref.load %arg4[%732] : memref<288xf32, #tpu.memory_space<smem>>
      %734 = vector.broadcast %733 : f32 to vector<16x16xf32>
      %735 = arith.mulf %734, %729 : vector<16x16xf32>
      %736 = arith.addf %706, %735 : vector<16x16xf32>
      %c36_i32_274 = arith.constant 36 : i32
      %737 = arith.addi %3, %c36_i32_274 : i32
      %c24_i32_275 = arith.constant 24 : i32
      %738 = arith.addi %737, %c24_i32_275 : i32
      %739 = arith.index_cast %738 : i32 to index
      %740 = memref.load %arg4[%739] : memref<288xf32, #tpu.memory_space<smem>>
      %741 = vector.broadcast %740 : f32 to vector<16x16xf32>
      %742 = arith.mulf %741, %729 : vector<16x16xf32>
      %743 = arith.addf %713, %742 : vector<16x16xf32>
      %c72_i32_276 = arith.constant 72 : i32
      %744 = arith.addi %3, %c72_i32_276 : i32
      %c24_i32_277 = arith.constant 24 : i32
      %745 = arith.addi %744, %c24_i32_277 : i32
      %746 = arith.index_cast %745 : i32 to index
      %747 = memref.load %arg4[%746] : memref<288xf32, #tpu.memory_space<smem>>
      %748 = vector.broadcast %747 : f32 to vector<16x16xf32>
      %749 = arith.mulf %748, %729 : vector<16x16xf32>
      %750 = arith.addf %720, %749 : vector<16x16xf32>
      %c108_i32_278 = arith.constant 108 : i32
      %751 = arith.addi %3, %c108_i32_278 : i32
      %c24_i32_279 = arith.constant 24 : i32
      %752 = arith.addi %751, %c24_i32_279 : i32
      %753 = arith.index_cast %752 : i32 to index
      %754 = memref.load %arg4[%753] : memref<288xf32, #tpu.memory_space<smem>>
      %755 = vector.broadcast %754 : f32 to vector<16x16xf32>
      %756 = arith.mulf %755, %729 : vector<16x16xf32>
      %757 = arith.addf %727, %756 : vector<16x16xf32>
      %c0_280 = arith.constant 0 : index
      %c2_281 = arith.constant 2 : index
      %c2_282 = arith.constant 2 : index
      %c1_283 = arith.constant 1 : index
      %758 = vector.load %arg1[%c0_280, %c2_281, %c2_282, %c1_283] : memref<1x4x18x18xf32, #tpu.memory_space<vmem>>, vector<1x1x16x16xf32>
      %759 = vector.shape_cast %758 : vector<1x1x16x16xf32> to vector<16x16xf32>
      %c0_i32_284 = arith.constant 0 : i32
      %760 = arith.addi %3, %c0_i32_284 : i32
      %c25_i32 = arith.constant 25 : i32
      %761 = arith.addi %760, %c25_i32 : i32
      %762 = arith.index_cast %761 : i32 to index
      %763 = memref.load %arg4[%762] : memref<288xf32, #tpu.memory_space<smem>>
      %764 = vector.broadcast %763 : f32 to vector<16x16xf32>
      %765 = arith.mulf %764, %759 : vector<16x16xf32>
      %766 = arith.addf %736, %765 : vector<16x16xf32>
      %c36_i32_285 = arith.constant 36 : i32
      %767 = arith.addi %3, %c36_i32_285 : i32
      %c25_i32_286 = arith.constant 25 : i32
      %768 = arith.addi %767, %c25_i32_286 : i32
      %769 = arith.index_cast %768 : i32 to index
      %770 = memref.load %arg4[%769] : memref<288xf32, #tpu.memory_space<smem>>
      %771 = vector.broadcast %770 : f32 to vector<16x16xf32>
      %772 = arith.mulf %771, %759 : vector<16x16xf32>
      %773 = arith.addf %743, %772 : vector<16x16xf32>
      %c72_i32_287 = arith.constant 72 : i32
      %774 = arith.addi %3, %c72_i32_287 : i32
      %c25_i32_288 = arith.constant 25 : i32
      %775 = arith.addi %774, %c25_i32_288 : i32
      %776 = arith.index_cast %775 : i32 to index
      %777 = memref.load %arg4[%776] : memref<288xf32, #tpu.memory_space<smem>>
      %778 = vector.broadcast %777 : f32 to vector<16x16xf32>
      %779 = arith.mulf %778, %759 : vector<16x16xf32>
      %780 = arith.addf %750, %779 : vector<16x16xf32>
      %c108_i32_289 = arith.constant 108 : i32
      %781 = arith.addi %3, %c108_i32_289 : i32
      %c25_i32_290 = arith.constant 25 : i32
      %782 = arith.addi %781, %c25_i32_290 : i32
      %783 = arith.index_cast %782 : i32 to index
      %784 = memref.load %arg4[%783] : memref<288xf32, #tpu.memory_space<smem>>
      %785 = vector.broadcast %784 : f32 to vector<16x16xf32>
      %786 = arith.mulf %785, %759 : vector<16x16xf32>
      %787 = arith.addf %757, %786 : vector<16x16xf32>
      %c0_291 = arith.constant 0 : index
      %c2_292 = arith.constant 2 : index
      %c2_293 = arith.constant 2 : index
      %c2_294 = arith.constant 2 : index
      %788 = vector.load %arg1[%c0_291, %c2_292, %c2_293, %c2_294] : memref<1x4x18x18xf32, #tpu.memory_space<vmem>>, vector<1x1x16x16xf32>
      %789 = vector.shape_cast %788 : vector<1x1x16x16xf32> to vector<16x16xf32>
      %c0_i32_295 = arith.constant 0 : i32
      %790 = arith.addi %3, %c0_i32_295 : i32
      %c26_i32 = arith.constant 26 : i32
      %791 = arith.addi %790, %c26_i32 : i32
      %792 = arith.index_cast %791 : i32 to index
      %793 = memref.load %arg4[%792] : memref<288xf32, #tpu.memory_space<smem>>
      %794 = vector.broadcast %793 : f32 to vector<16x16xf32>
      %795 = arith.mulf %794, %789 : vector<16x16xf32>
      %796 = arith.addf %766, %795 : vector<16x16xf32>
      %c36_i32_296 = arith.constant 36 : i32
      %797 = arith.addi %3, %c36_i32_296 : i32
      %c26_i32_297 = arith.constant 26 : i32
      %798 = arith.addi %797, %c26_i32_297 : i32
      %799 = arith.index_cast %798 : i32 to index
      %800 = memref.load %arg4[%799] : memref<288xf32, #tpu.memory_space<smem>>
      %801 = vector.broadcast %800 : f32 to vector<16x16xf32>
      %802 = arith.mulf %801, %789 : vector<16x16xf32>
      %803 = arith.addf %773, %802 : vector<16x16xf32>
      %c72_i32_298 = arith.constant 72 : i32
      %804 = arith.addi %3, %c72_i32_298 : i32
      %c26_i32_299 = arith.constant 26 : i32
      %805 = arith.addi %804, %c26_i32_299 : i32
      %806 = arith.index_cast %805 : i32 to index
      %807 = memref.load %arg4[%806] : memref<288xf32, #tpu.memory_space<smem>>
      %808 = vector.broadcast %807 : f32 to vector<16x16xf32>
      %809 = arith.mulf %808, %789 : vector<16x16xf32>
      %810 = arith.addf %780, %809 : vector<16x16xf32>
      %c108_i32_300 = arith.constant 108 : i32
      %811 = arith.addi %3, %c108_i32_300 : i32
      %c26_i32_301 = arith.constant 26 : i32
      %812 = arith.addi %811, %c26_i32_301 : i32
      %813 = arith.index_cast %812 : i32 to index
      %814 = memref.load %arg4[%813] : memref<288xf32, #tpu.memory_space<smem>>
      %815 = vector.broadcast %814 : f32 to vector<16x16xf32>
      %816 = arith.mulf %815, %789 : vector<16x16xf32>
      %817 = arith.addf %787, %816 : vector<16x16xf32>
      %c0_302 = arith.constant 0 : index
      %c3 = arith.constant 3 : index
      %c0_303 = arith.constant 0 : index
      %c0_304 = arith.constant 0 : index
      %818 = vector.load %arg1[%c0_302, %c3, %c0_303, %c0_304] : memref<1x4x18x18xf32, #tpu.memory_space<vmem>>, vector<1x1x16x16xf32>
      %819 = vector.shape_cast %818 : vector<1x1x16x16xf32> to vector<16x16xf32>
      %c0_i32_305 = arith.constant 0 : i32
      %820 = arith.addi %3, %c0_i32_305 : i32
      %c27_i32 = arith.constant 27 : i32
      %821 = arith.addi %820, %c27_i32 : i32
      %822 = arith.index_cast %821 : i32 to index
      %823 = memref.load %arg4[%822] : memref<288xf32, #tpu.memory_space<smem>>
      %824 = vector.broadcast %823 : f32 to vector<16x16xf32>
      %825 = arith.mulf %824, %819 : vector<16x16xf32>
      %826 = arith.addf %796, %825 : vector<16x16xf32>
      %c36_i32_306 = arith.constant 36 : i32
      %827 = arith.addi %3, %c36_i32_306 : i32
      %c27_i32_307 = arith.constant 27 : i32
      %828 = arith.addi %827, %c27_i32_307 : i32
      %829 = arith.index_cast %828 : i32 to index
      %830 = memref.load %arg4[%829] : memref<288xf32, #tpu.memory_space<smem>>
      %831 = vector.broadcast %830 : f32 to vector<16x16xf32>
      %832 = arith.mulf %831, %819 : vector<16x16xf32>
      %833 = arith.addf %803, %832 : vector<16x16xf32>
      %c72_i32_308 = arith.constant 72 : i32
      %834 = arith.addi %3, %c72_i32_308 : i32
      %c27_i32_309 = arith.constant 27 : i32
      %835 = arith.addi %834, %c27_i32_309 : i32
      %836 = arith.index_cast %835 : i32 to index
      %837 = memref.load %arg4[%836] : memref<288xf32, #tpu.memory_space<smem>>
      %838 = vector.broadcast %837 : f32 to vector<16x16xf32>
      %839 = arith.mulf %838, %819 : vector<16x16xf32>
      %840 = arith.addf %810, %839 : vector<16x16xf32>
      %c108_i32_310 = arith.constant 108 : i32
      %841 = arith.addi %3, %c108_i32_310 : i32
      %c27_i32_311 = arith.constant 27 : i32
      %842 = arith.addi %841, %c27_i32_311 : i32
      %843 = arith.index_cast %842 : i32 to index
      %844 = memref.load %arg4[%843] : memref<288xf32, #tpu.memory_space<smem>>
      %845 = vector.broadcast %844 : f32 to vector<16x16xf32>
      %846 = arith.mulf %845, %819 : vector<16x16xf32>
      %847 = arith.addf %817, %846 : vector<16x16xf32>
      %c0_312 = arith.constant 0 : index
      %c3_313 = arith.constant 3 : index
      %c0_314 = arith.constant 0 : index
      %c1_315 = arith.constant 1 : index
      %848 = vector.load %arg1[%c0_312, %c3_313, %c0_314, %c1_315] : memref<1x4x18x18xf32, #tpu.memory_space<vmem>>, vector<1x1x16x16xf32>
      %849 = vector.shape_cast %848 : vector<1x1x16x16xf32> to vector<16x16xf32>
      %c0_i32_316 = arith.constant 0 : i32
      %850 = arith.addi %3, %c0_i32_316 : i32
      %c28_i32 = arith.constant 28 : i32
      %851 = arith.addi %850, %c28_i32 : i32
      %852 = arith.index_cast %851 : i32 to index
      %853 = memref.load %arg4[%852] : memref<288xf32, #tpu.memory_space<smem>>
      %854 = vector.broadcast %853 : f32 to vector<16x16xf32>
      %855 = arith.mulf %854, %849 : vector<16x16xf32>
      %856 = arith.addf %826, %855 : vector<16x16xf32>
      %c36_i32_317 = arith.constant 36 : i32
      %857 = arith.addi %3, %c36_i32_317 : i32
      %c28_i32_318 = arith.constant 28 : i32
      %858 = arith.addi %857, %c28_i32_318 : i32
      %859 = arith.index_cast %858 : i32 to index
      %860 = memref.load %arg4[%859] : memref<288xf32, #tpu.memory_space<smem>>
      %861 = vector.broadcast %860 : f32 to vector<16x16xf32>
      %862 = arith.mulf %861, %849 : vector<16x16xf32>
      %863 = arith.addf %833, %862 : vector<16x16xf32>
      %c72_i32_319 = arith.constant 72 : i32
      %864 = arith.addi %3, %c72_i32_319 : i32
      %c28_i32_320 = arith.constant 28 : i32
      %865 = arith.addi %864, %c28_i32_320 : i32
      %866 = arith.index_cast %865 : i32 to index
      %867 = memref.load %arg4[%866] : memref<288xf32, #tpu.memory_space<smem>>
      %868 = vector.broadcast %867 : f32 to vector<16x16xf32>
      %869 = arith.mulf %868, %849 : vector<16x16xf32>
      %870 = arith.addf %840, %869 : vector<16x16xf32>
      %c108_i32_321 = arith.constant 108 : i32
      %871 = arith.addi %3, %c108_i32_321 : i32
      %c28_i32_322 = arith.constant 28 : i32
      %872 = arith.addi %871, %c28_i32_322 : i32
      %873 = arith.index_cast %872 : i32 to index
      %874 = memref.load %arg4[%873] : memref<288xf32, #tpu.memory_space<smem>>
      %875 = vector.broadcast %874 : f32 to vector<16x16xf32>
      %876 = arith.mulf %875, %849 : vector<16x16xf32>
      %877 = arith.addf %847, %876 : vector<16x16xf32>
      %c0_323 = arith.constant 0 : index
      %c3_324 = arith.constant 3 : index
      %c0_325 = arith.constant 0 : index
      %c2_326 = arith.constant 2 : index
      %878 = vector.load %arg1[%c0_323, %c3_324, %c0_325, %c2_326] : memref<1x4x18x18xf32, #tpu.memory_space<vmem>>, vector<1x1x16x16xf32>
      %879 = vector.shape_cast %878 : vector<1x1x16x16xf32> to vector<16x16xf32>
      %c0_i32_327 = arith.constant 0 : i32
      %880 = arith.addi %3, %c0_i32_327 : i32
      %c29_i32 = arith.constant 29 : i32
      %881 = arith.addi %880, %c29_i32 : i32
      %882 = arith.index_cast %881 : i32 to index
      %883 = memref.load %arg4[%882] : memref<288xf32, #tpu.memory_space<smem>>
      %884 = vector.broadcast %883 : f32 to vector<16x16xf32>
      %885 = arith.mulf %884, %879 : vector<16x16xf32>
      %886 = arith.addf %856, %885 : vector<16x16xf32>
      %c36_i32_328 = arith.constant 36 : i32
      %887 = arith.addi %3, %c36_i32_328 : i32
      %c29_i32_329 = arith.constant 29 : i32
      %888 = arith.addi %887, %c29_i32_329 : i32
      %889 = arith.index_cast %888 : i32 to index
      %890 = memref.load %arg4[%889] : memref<288xf32, #tpu.memory_space<smem>>
      %891 = vector.broadcast %890 : f32 to vector<16x16xf32>
      %892 = arith.mulf %891, %879 : vector<16x16xf32>
      %893 = arith.addf %863, %892 : vector<16x16xf32>
      %c72_i32_330 = arith.constant 72 : i32
      %894 = arith.addi %3, %c72_i32_330 : i32
      %c29_i32_331 = arith.constant 29 : i32
      %895 = arith.addi %894, %c29_i32_331 : i32
      %896 = arith.index_cast %895 : i32 to index
      %897 = memref.load %arg4[%896] : memref<288xf32, #tpu.memory_space<smem>>
      %898 = vector.broadcast %897 : f32 to vector<16x16xf32>
      %899 = arith.mulf %898, %879 : vector<16x16xf32>
      %900 = arith.addf %870, %899 : vector<16x16xf32>
      %c108_i32_332 = arith.constant 108 : i32
      %901 = arith.addi %3, %c108_i32_332 : i32
      %c29_i32_333 = arith.constant 29 : i32
      %902 = arith.addi %901, %c29_i32_333 : i32
      %903 = arith.index_cast %902 : i32 to index
      %904 = memref.load %arg4[%903] : memref<288xf32, #tpu.memory_space<smem>>
      %905 = vector.broadcast %904 : f32 to vector<16x16xf32>
      %906 = arith.mulf %905, %879 : vector<16x16xf32>
      %907 = arith.addf %877, %906 : vector<16x16xf32>
      %c0_334 = arith.constant 0 : index
      %c3_335 = arith.constant 3 : index
      %c1_336 = arith.constant 1 : index
      %c0_337 = arith.constant 0 : index
      %908 = vector.load %arg1[%c0_334, %c3_335, %c1_336, %c0_337] : memref<1x4x18x18xf32, #tpu.memory_space<vmem>>, vector<1x1x16x16xf32>
      %909 = vector.shape_cast %908 : vector<1x1x16x16xf32> to vector<16x16xf32>
      %c0_i32_338 = arith.constant 0 : i32
      %910 = arith.addi %3, %c0_i32_338 : i32
      %c30_i32 = arith.constant 30 : i32
      %911 = arith.addi %910, %c30_i32 : i32
      %912 = arith.index_cast %911 : i32 to index
      %913 = memref.load %arg4[%912] : memref<288xf32, #tpu.memory_space<smem>>
      %914 = vector.broadcast %913 : f32 to vector<16x16xf32>
      %915 = arith.mulf %914, %909 : vector<16x16xf32>
      %916 = arith.addf %886, %915 : vector<16x16xf32>
      %c36_i32_339 = arith.constant 36 : i32
      %917 = arith.addi %3, %c36_i32_339 : i32
      %c30_i32_340 = arith.constant 30 : i32
      %918 = arith.addi %917, %c30_i32_340 : i32
      %919 = arith.index_cast %918 : i32 to index
      %920 = memref.load %arg4[%919] : memref<288xf32, #tpu.memory_space<smem>>
      %921 = vector.broadcast %920 : f32 to vector<16x16xf32>
      %922 = arith.mulf %921, %909 : vector<16x16xf32>
      %923 = arith.addf %893, %922 : vector<16x16xf32>
      %c72_i32_341 = arith.constant 72 : i32
      %924 = arith.addi %3, %c72_i32_341 : i32
      %c30_i32_342 = arith.constant 30 : i32
      %925 = arith.addi %924, %c30_i32_342 : i32
      %926 = arith.index_cast %925 : i32 to index
      %927 = memref.load %arg4[%926] : memref<288xf32, #tpu.memory_space<smem>>
      %928 = vector.broadcast %927 : f32 to vector<16x16xf32>
      %929 = arith.mulf %928, %909 : vector<16x16xf32>
      %930 = arith.addf %900, %929 : vector<16x16xf32>
      %c108_i32_343 = arith.constant 108 : i32
      %931 = arith.addi %3, %c108_i32_343 : i32
      %c30_i32_344 = arith.constant 30 : i32
      %932 = arith.addi %931, %c30_i32_344 : i32
      %933 = arith.index_cast %932 : i32 to index
      %934 = memref.load %arg4[%933] : memref<288xf32, #tpu.memory_space<smem>>
      %935 = vector.broadcast %934 : f32 to vector<16x16xf32>
      %936 = arith.mulf %935, %909 : vector<16x16xf32>
      %937 = arith.addf %907, %936 : vector<16x16xf32>
      %c0_345 = arith.constant 0 : index
      %c3_346 = arith.constant 3 : index
      %c1_347 = arith.constant 1 : index
      %c1_348 = arith.constant 1 : index
      %938 = vector.load %arg1[%c0_345, %c3_346, %c1_347, %c1_348] : memref<1x4x18x18xf32, #tpu.memory_space<vmem>>, vector<1x1x16x16xf32>
      %939 = vector.shape_cast %938 : vector<1x1x16x16xf32> to vector<16x16xf32>
      %c0_i32_349 = arith.constant 0 : i32
      %940 = arith.addi %3, %c0_i32_349 : i32
      %c31_i32 = arith.constant 31 : i32
      %941 = arith.addi %940, %c31_i32 : i32
      %942 = arith.index_cast %941 : i32 to index
      %943 = memref.load %arg4[%942] : memref<288xf32, #tpu.memory_space<smem>>
      %944 = vector.broadcast %943 : f32 to vector<16x16xf32>
      %945 = arith.mulf %944, %939 : vector<16x16xf32>
      %946 = arith.addf %916, %945 : vector<16x16xf32>
      %c36_i32_350 = arith.constant 36 : i32
      %947 = arith.addi %3, %c36_i32_350 : i32
      %c31_i32_351 = arith.constant 31 : i32
      %948 = arith.addi %947, %c31_i32_351 : i32
      %949 = arith.index_cast %948 : i32 to index
      %950 = memref.load %arg4[%949] : memref<288xf32, #tpu.memory_space<smem>>
      %951 = vector.broadcast %950 : f32 to vector<16x16xf32>
      %952 = arith.mulf %951, %939 : vector<16x16xf32>
      %953 = arith.addf %923, %952 : vector<16x16xf32>
      %c72_i32_352 = arith.constant 72 : i32
      %954 = arith.addi %3, %c72_i32_352 : i32
      %c31_i32_353 = arith.constant 31 : i32
      %955 = arith.addi %954, %c31_i32_353 : i32
      %956 = arith.index_cast %955 : i32 to index
      %957 = memref.load %arg4[%956] : memref<288xf32, #tpu.memory_space<smem>>
      %958 = vector.broadcast %957 : f32 to vector<16x16xf32>
      %959 = arith.mulf %958, %939 : vector<16x16xf32>
      %960 = arith.addf %930, %959 : vector<16x16xf32>
      %c108_i32_354 = arith.constant 108 : i32
      %961 = arith.addi %3, %c108_i32_354 : i32
      %c31_i32_355 = arith.constant 31 : i32
      %962 = arith.addi %961, %c31_i32_355 : i32
      %963 = arith.index_cast %962 : i32 to index
      %964 = memref.load %arg4[%963] : memref<288xf32, #tpu.memory_space<smem>>
      %965 = vector.broadcast %964 : f32 to vector<16x16xf32>
      %966 = arith.mulf %965, %939 : vector<16x16xf32>
      %967 = arith.addf %937, %966 : vector<16x16xf32>
      %c0_356 = arith.constant 0 : index
      %c3_357 = arith.constant 3 : index
      %c1_358 = arith.constant 1 : index
      %c2_359 = arith.constant 2 : index
      %968 = vector.load %arg1[%c0_356, %c3_357, %c1_358, %c2_359] : memref<1x4x18x18xf32, #tpu.memory_space<vmem>>, vector<1x1x16x16xf32>
      %969 = vector.shape_cast %968 : vector<1x1x16x16xf32> to vector<16x16xf32>
      %c0_i32_360 = arith.constant 0 : i32
      %970 = arith.addi %3, %c0_i32_360 : i32
      %c32_i32 = arith.constant 32 : i32
      %971 = arith.addi %970, %c32_i32 : i32
      %972 = arith.index_cast %971 : i32 to index
      %973 = memref.load %arg4[%972] : memref<288xf32, #tpu.memory_space<smem>>
      %974 = vector.broadcast %973 : f32 to vector<16x16xf32>
      %975 = arith.mulf %974, %969 : vector<16x16xf32>
      %976 = arith.addf %946, %975 : vector<16x16xf32>
      %c36_i32_361 = arith.constant 36 : i32
      %977 = arith.addi %3, %c36_i32_361 : i32
      %c32_i32_362 = arith.constant 32 : i32
      %978 = arith.addi %977, %c32_i32_362 : i32
      %979 = arith.index_cast %978 : i32 to index
      %980 = memref.load %arg4[%979] : memref<288xf32, #tpu.memory_space<smem>>
      %981 = vector.broadcast %980 : f32 to vector<16x16xf32>
      %982 = arith.mulf %981, %969 : vector<16x16xf32>
      %983 = arith.addf %953, %982 : vector<16x16xf32>
      %c72_i32_363 = arith.constant 72 : i32
      %984 = arith.addi %3, %c72_i32_363 : i32
      %c32_i32_364 = arith.constant 32 : i32
      %985 = arith.addi %984, %c32_i32_364 : i32
      %986 = arith.index_cast %985 : i32 to index
      %987 = memref.load %arg4[%986] : memref<288xf32, #tpu.memory_space<smem>>
      %988 = vector.broadcast %987 : f32 to vector<16x16xf32>
      %989 = arith.mulf %988, %969 : vector<16x16xf32>
      %990 = arith.addf %960, %989 : vector<16x16xf32>
      %c108_i32_365 = arith.constant 108 : i32
      %991 = arith.addi %3, %c108_i32_365 : i32
      %c32_i32_366 = arith.constant 32 : i32
      %992 = arith.addi %991, %c32_i32_366 : i32
      %993 = arith.index_cast %992 : i32 to index
      %994 = memref.load %arg4[%993] : memref<288xf32, #tpu.memory_space<smem>>
      %995 = vector.broadcast %994 : f32 to vector<16x16xf32>
      %996 = arith.mulf %995, %969 : vector<16x16xf32>
      %997 = arith.addf %967, %996 : vector<16x16xf32>
      %c0_367 = arith.constant 0 : index
      %c3_368 = arith.constant 3 : index
      %c2_369 = arith.constant 2 : index
      %c0_370 = arith.constant 0 : index
      %998 = vector.load %arg1[%c0_367, %c3_368, %c2_369, %c0_370] : memref<1x4x18x18xf32, #tpu.memory_space<vmem>>, vector<1x1x16x16xf32>
      %999 = vector.shape_cast %998 : vector<1x1x16x16xf32> to vector<16x16xf32>
      %c0_i32_371 = arith.constant 0 : i32
      %1000 = arith.addi %3, %c0_i32_371 : i32
      %c33_i32 = arith.constant 33 : i32
      %1001 = arith.addi %1000, %c33_i32 : i32
      %1002 = arith.index_cast %1001 : i32 to index
      %1003 = memref.load %arg4[%1002] : memref<288xf32, #tpu.memory_space<smem>>
      %1004 = vector.broadcast %1003 : f32 to vector<16x16xf32>
      %1005 = arith.mulf %1004, %999 : vector<16x16xf32>
      %1006 = arith.addf %976, %1005 : vector<16x16xf32>
      %c36_i32_372 = arith.constant 36 : i32
      %1007 = arith.addi %3, %c36_i32_372 : i32
      %c33_i32_373 = arith.constant 33 : i32
      %1008 = arith.addi %1007, %c33_i32_373 : i32
      %1009 = arith.index_cast %1008 : i32 to index
      %1010 = memref.load %arg4[%1009] : memref<288xf32, #tpu.memory_space<smem>>
      %1011 = vector.broadcast %1010 : f32 to vector<16x16xf32>
      %1012 = arith.mulf %1011, %999 : vector<16x16xf32>
      %1013 = arith.addf %983, %1012 : vector<16x16xf32>
      %c72_i32_374 = arith.constant 72 : i32
      %1014 = arith.addi %3, %c72_i32_374 : i32
      %c33_i32_375 = arith.constant 33 : i32
      %1015 = arith.addi %1014, %c33_i32_375 : i32
      %1016 = arith.index_cast %1015 : i32 to index
      %1017 = memref.load %arg4[%1016] : memref<288xf32, #tpu.memory_space<smem>>
      %1018 = vector.broadcast %1017 : f32 to vector<16x16xf32>
      %1019 = arith.mulf %1018, %999 : vector<16x16xf32>
      %1020 = arith.addf %990, %1019 : vector<16x16xf32>
      %c108_i32_376 = arith.constant 108 : i32
      %1021 = arith.addi %3, %c108_i32_376 : i32
      %c33_i32_377 = arith.constant 33 : i32
      %1022 = arith.addi %1021, %c33_i32_377 : i32
      %1023 = arith.index_cast %1022 : i32 to index
      %1024 = memref.load %arg4[%1023] : memref<288xf32, #tpu.memory_space<smem>>
      %1025 = vector.broadcast %1024 : f32 to vector<16x16xf32>
      %1026 = arith.mulf %1025, %999 : vector<16x16xf32>
      %1027 = arith.addf %997, %1026 : vector<16x16xf32>
      %c0_378 = arith.constant 0 : index
      %c3_379 = arith.constant 3 : index
      %c2_380 = arith.constant 2 : index
      %c1_381 = arith.constant 1 : index
      %1028 = vector.load %arg1[%c0_378, %c3_379, %c2_380, %c1_381] : memref<1x4x18x18xf32, #tpu.memory_space<vmem>>, vector<1x1x16x16xf32>
      %1029 = vector.shape_cast %1028 : vector<1x1x16x16xf32> to vector<16x16xf32>
      %c0_i32_382 = arith.constant 0 : i32
      %1030 = arith.addi %3, %c0_i32_382 : i32
      %c34_i32 = arith.constant 34 : i32
      %1031 = arith.addi %1030, %c34_i32 : i32
      %1032 = arith.index_cast %1031 : i32 to index
      %1033 = memref.load %arg4[%1032] : memref<288xf32, #tpu.memory_space<smem>>
      %1034 = vector.broadcast %1033 : f32 to vector<16x16xf32>
      %1035 = arith.mulf %1034, %1029 : vector<16x16xf32>
      %1036 = arith.addf %1006, %1035 : vector<16x16xf32>
      %c36_i32_383 = arith.constant 36 : i32
      %1037 = arith.addi %3, %c36_i32_383 : i32
      %c34_i32_384 = arith.constant 34 : i32
      %1038 = arith.addi %1037, %c34_i32_384 : i32
      %1039 = arith.index_cast %1038 : i32 to index
      %1040 = memref.load %arg4[%1039] : memref<288xf32, #tpu.memory_space<smem>>
      %1041 = vector.broadcast %1040 : f32 to vector<16x16xf32>
      %1042 = arith.mulf %1041, %1029 : vector<16x16xf32>
      %1043 = arith.addf %1013, %1042 : vector<16x16xf32>
      %c72_i32_385 = arith.constant 72 : i32
      %1044 = arith.addi %3, %c72_i32_385 : i32
      %c34_i32_386 = arith.constant 34 : i32
      %1045 = arith.addi %1044, %c34_i32_386 : i32
      %1046 = arith.index_cast %1045 : i32 to index
      %1047 = memref.load %arg4[%1046] : memref<288xf32, #tpu.memory_space<smem>>
      %1048 = vector.broadcast %1047 : f32 to vector<16x16xf32>
      %1049 = arith.mulf %1048, %1029 : vector<16x16xf32>
      %1050 = arith.addf %1020, %1049 : vector<16x16xf32>
      %c108_i32_387 = arith.constant 108 : i32
      %1051 = arith.addi %3, %c108_i32_387 : i32
      %c34_i32_388 = arith.constant 34 : i32
      %1052 = arith.addi %1051, %c34_i32_388 : i32
      %1053 = arith.index_cast %1052 : i32 to index
      %1054 = memref.load %arg4[%1053] : memref<288xf32, #tpu.memory_space<smem>>
      %1055 = vector.broadcast %1054 : f32 to vector<16x16xf32>
      %1056 = arith.mulf %1055, %1029 : vector<16x16xf32>
      %1057 = arith.addf %1027, %1056 : vector<16x16xf32>
      %c0_389 = arith.constant 0 : index
      %c3_390 = arith.constant 3 : index
      %c2_391 = arith.constant 2 : index
      %c2_392 = arith.constant 2 : index
      %1058 = vector.load %arg1[%c0_389, %c3_390, %c2_391, %c2_392] : memref<1x4x18x18xf32, #tpu.memory_space<vmem>>, vector<1x1x16x16xf32>
      %1059 = vector.shape_cast %1058 : vector<1x1x16x16xf32> to vector<16x16xf32>
      %c0_i32_393 = arith.constant 0 : i32
      %1060 = arith.addi %3, %c0_i32_393 : i32
      %c35_i32 = arith.constant 35 : i32
      %1061 = arith.addi %1060, %c35_i32 : i32
      %1062 = arith.index_cast %1061 : i32 to index
      %1063 = memref.load %arg4[%1062] : memref<288xf32, #tpu.memory_space<smem>>
      %1064 = vector.broadcast %1063 : f32 to vector<16x16xf32>
      %1065 = arith.mulf %1064, %1059 : vector<16x16xf32>
      %1066 = arith.addf %1036, %1065 : vector<16x16xf32>
      %c36_i32_394 = arith.constant 36 : i32
      %1067 = arith.addi %3, %c36_i32_394 : i32
      %c35_i32_395 = arith.constant 35 : i32
      %1068 = arith.addi %1067, %c35_i32_395 : i32
      %1069 = arith.index_cast %1068 : i32 to index
      %1070 = memref.load %arg4[%1069] : memref<288xf32, #tpu.memory_space<smem>>
      %1071 = vector.broadcast %1070 : f32 to vector<16x16xf32>
      %1072 = arith.mulf %1071, %1059 : vector<16x16xf32>
      %1073 = arith.addf %1043, %1072 : vector<16x16xf32>
      %c72_i32_396 = arith.constant 72 : i32
      %1074 = arith.addi %3, %c72_i32_396 : i32
      %c35_i32_397 = arith.constant 35 : i32
      %1075 = arith.addi %1074, %c35_i32_397 : i32
      %1076 = arith.index_cast %1075 : i32 to index
      %1077 = memref.load %arg4[%1076] : memref<288xf32, #tpu.memory_space<smem>>
      %1078 = vector.broadcast %1077 : f32 to vector<16x16xf32>
      %1079 = arith.mulf %1078, %1059 : vector<16x16xf32>
      %1080 = arith.addf %1050, %1079 : vector<16x16xf32>
      %c108_i32_398 = arith.constant 108 : i32
      %1081 = arith.addi %3, %c108_i32_398 : i32
      %c35_i32_399 = arith.constant 35 : i32
      %1082 = arith.addi %1081, %c35_i32_399 : i32
      %1083 = arith.index_cast %1082 : i32 to index
      %1084 = memref.load %arg4[%1083] : memref<288xf32, #tpu.memory_space<smem>>
      %1085 = vector.broadcast %1084 : f32 to vector<16x16xf32>
      %1086 = arith.mulf %1085, %1059 : vector<16x16xf32>
      %1087 = arith.addf %1057, %1086 : vector<16x16xf32>
      %cst_400 = arith.constant dense<0.000000e+00> : vector<16x32xf32>
      %1088 = tpu.matmul %1066, %0, %cst_400 {dimension_numbers = #tpu.dot_dimension_numbers<[1], [0], [0], [1], [0, 0, 1, 1], [], []>, precision = #tpu.contract_precision<fp32>} : vector<16x16xf32>, vector<16x32xf32>, vector<16x32xf32> -> vector<16x32xf32>
      %cst_401 = arith.constant dense<0.000000e+00> : vector<16x32xf32>
      %1089 = tpu.matmul %1073, %1, %cst_401 {dimension_numbers = #tpu.dot_dimension_numbers<[1], [0], [0], [1], [0, 0, 1, 1], [], []>, precision = #tpu.contract_precision<fp32>} : vector<16x16xf32>, vector<16x32xf32>, vector<16x32xf32> -> vector<16x32xf32>
      %1090 = arith.addf %1088, %1089 : vector<16x32xf32>
      %cst_402 = arith.constant dense<0.000000e+00> : vector<16x32xf32>
      %1091 = tpu.matmul %1080, %0, %cst_402 {dimension_numbers = #tpu.dot_dimension_numbers<[1], [0], [0], [1], [0, 0, 1, 1], [], []>, precision = #tpu.contract_precision<fp32>} : vector<16x16xf32>, vector<16x32xf32>, vector<16x32xf32> -> vector<16x32xf32>
      %cst_403 = arith.constant dense<0.000000e+00> : vector<16x32xf32>
      %1092 = tpu.matmul %1087, %1, %cst_403 {dimension_numbers = #tpu.dot_dimension_numbers<[1], [0], [0], [1], [0, 0, 1, 1], [], []>, precision = #tpu.contract_precision<fp32>} : vector<16x16xf32>, vector<16x32xf32>, vector<16x32xf32> -> vector<16x32xf32>
      %1093 = arith.addf %1091, %1092 : vector<16x32xf32>
      %c0_404 = arith.constant 0 : index
      %1094 = arith.index_cast %arg6 : i32 to index
      %c0_405 = arith.constant 0 : index
      %c0_406 = arith.constant 0 : index
      %1095 = vector.load %arg5[%c0_404, %1094, %c0_405, %c0_406] : memref<1x2x16x64xf32, #tpu.memory_space<vmem>>, vector<1x1x16x32xf32>
      %1096 = vector.shape_cast %1095 : vector<1x1x16x32xf32> to vector<16x32xf32>
      %1097 = vector.shape_cast %1090 : vector<16x32xf32> to vector<1x1x16x32xf32>
      tpu.vector_store %arg5[%c0_404, %1094, %c0_405, %c0_406], %1097 {strides = array<i32>} : memref<1x2x16x64xf32, #tpu.memory_space<vmem>>, vector<1x1x16x32xf32>,
      %c0_407 = arith.constant 0 : index
      %1098 = arith.index_cast %arg6 : i32 to index
      %c0_408 = arith.constant 0 : index
      %c32 = arith.constant 32 : index
      %1099 = vector.load %arg5[%c0_407, %1098, %c0_408, %c32] : memref<1x2x16x64xf32, #tpu.memory_space<vmem>>, vector<1x1x16x32xf32>
      %1100 = vector.shape_cast %1099 : vector<1x1x16x32xf32> to vector<16x32xf32>
      %1101 = vector.shape_cast %1093 : vector<16x32xf32> to vector<1x1x16x32xf32>
      tpu.vector_store %arg5[%c0_407, %1098, %c0_408, %c32], %1101 {strides = array<i32>} : memref<1x2x16x64xf32, #tpu.memory_space<vmem>>, vector<1x1x16x32xf32>,
    }
    %c2_i32_3 = arith.constant 2 : i32
    return
  }
  func.func @transform_0(%arg0: i32) -> (i32, i32, i32, i32) {
    %c0_i32 = arith.constant 0 : i32
    %c0_i32_0 = arith.constant 0 : i32
    %c0_i32_1 = arith.constant 0 : i32
    %c0_i32_2 = arith.constant 0 : i32
    return %arg0, %c0_i32, %c0_i32_0, %c0_i32_1 : i32, i32, i32, i32
  }
  func.func @transform_1(%arg0: i32) -> (i32, i32) {
    %c0_i32 = arith.constant 0 : i32
    %c0_i32_0 = arith.constant 0 : i32
    %c0_i32_1 = arith.constant 0 : i32
    return %c0_i32, %c0_i32_0 : i32, i32
  }
  func.func @transform_2(%arg0: i32) -> (i32, i32) {
    %c0_i32 = arith.constant 0 : i32
    %c0_i32_0 = arith.constant 0 : i32
    %c0_i32_1 = arith.constant 0 : i32
    return %c0_i32, %c0_i32_0 : i32, i32
  }
  func.func @transform_3(%arg0: i32) -> i32 {
    %c0_i32 = arith.constant 0 : i32
    %c0_i32_0 = arith.constant 0 : i32
    return %c0_i32 : i32
  }
  func.func @transform_4(%arg0: i32) -> (i32, i32, i32, i32) {
    %c0_i32 = arith.constant 0 : i32
    %c0_i32_0 = arith.constant 0 : i32
    %c0_i32_1 = arith.constant 0 : i32
    %c0_i32_2 = arith.constant 0 : i32
    return %arg0, %c0_i32, %c0_i32_0, %c0_i32_1 : i32, i32, i32, i32
  }
}

</mosaic_0001>

<llo_original>
// kernel: tpu_custom_call.1
$region0: #{tpu_custom_call.1}
  #allocation0 [shape = 'u32[]', space=smem, size = 0x4, offset = 0x4, fixed_abs, tag = 'smem constant byte address 0x4 - core index']
  #allocation1 [shape = 'u32[72,128]{1,0:T(1,128)}', space=vmem, size = 0x9000, scoped, tag = 'internal scratch']
  %s0 = inlined_call_operand.vmem [shape: f32[2,4,18,18], index: 0, kind: input, shape index: {}]
  %s1 = inlined_call_operand.vmem [shape: f32[16,32], index: 1, kind: input, shape index: {}]
  %s2 = inlined_call_operand.vmem [shape: f32[16,32], index: 2, kind: input, shape index: {}]
  %s3 = inlined_call_operand.vmem [shape: f32[288], index: 3, kind: input, shape index: {}]
  %s4 = inlined_call_operand.hbm [shape: f32[2,2,16,64], index: 4, kind: output, shape index: {}]
  %s5 = sld [smem:[#allocation0]]
  $region60: #{tpu_custom_call.1} parent=0
    _
  %s7 = ssub.s32 1, %s5
  %s8 = scalar_select 0, %s7, %s5
  $region1: #{tpu_custom_call.1} parent=0
    #allocation2 [shape = 'u8[1536]{0}', space=smem, size = 0x600, scoped, tag = 'input window, operand 3, single buffered']
    #allocation3 [shape = 's32[2]{0}', space=sflag, size = 0x8, scoped, tag = 'scoped memory for tpu_custom_call.1']
    #allocation4 [shape = 's32[2]{0}', space=sflag, size = 0x8, scoped, tag = 'scoped memory for tpu_custom_call.1']
    #allocation5 [shape = 'u8[32768]{0}', space=vmem, size = 0x8000, scoped, tag = 'output window, operand 0']
    %9 = vsyncpa [#allocation4], 0
    %10 = vsyncpa [#allocation3], 0
    %s11 = scalar_lea.sflag [#allocation3], 1
    %12 = vsyncpa %s11, 0
    loop: start=0, step=1, limit=4
    $region2: #{tpu_custom_call.1} parent=1 // loop_pre_header
      _
    $region3: #{tpu_custom_call.1} parent=1 // loop_header
      %s14 = sphi 0, %s18
      %p15 = scmp.ge.s32.totalorder %s14, 4
      %s24 = sphi 0, %s26
      %s27 = sphi 0, %s24
      %s28 = sphi 0, %s27
      %s44 = sphi 0, %s28
      %s48 = sphi 0, %s48
      %s50 = sphi 0, %s48
      %s51 = sphi 0, %s50
      %s65 = sphi 0, %s51
      %s69 = sphi 0, %s69
      %s71 = sphi 0, %s69
      %s72 = sphi 0, %s71
      %s86 = sphi 0, %s72
      %s90 = sphi 0, %s90
      %s92 = sphi 0, %s90
      %s93 = sphi 0, %s92
      %s107 = sphi 0, %s93
      %s113 = sphi 0, %s115
      %s116 = sphi 0, %s113
      %s117 = sphi 0, %s116
      %s133 = sphi 0, %s117
    $region4: #{tpu_custom_call.1} parent=1 // loop_header_branch
      %17 = sbr.rel (%p15) target = $region8
    $region5: #{tpu_custom_call.1} parent=1 // loop_body
      %s19 = ssub.s32 %s14, 1
      %s20 = ssub.s32 %s14, 2
      %s21 = sadd.s32 %s14, 1
      %s22 = ssub.s32 %s14, %s21
      %p23 = scmp.eq.s32.totalorder %s22, 0
      %s25 = sadd.s32 %s24, 1
      %s26 = scalar_select %p23, %s24, %s25
      %p29 = pneg %p23
      %p30 = scmp.eq.s32.totalorder %s14, 1
      %p31 = por %p29, %p30
      %p32 = scmp.ne.s32.totalorder %s24, %s27
      %p33 = scmp.eq.s32.totalorder %s14, 0
      %p34 = por %p32, %p33
      %p35 = scmp.ne.s32.totalorder %s24, %s27
      %p36 = scmp.eq.s32.totalorder %s19, 1
      %p37 = por %p35, %p36
      %p38 = scmp.ne.s32.totalorder %s27, %s28
      %p39 = scmp.eq.s32.totalorder %s19, 0
      %p40 = por %p38, %p39
      %p41 = scmp.ne.s32.totalorder %s27, %s28
      %p42 = scmp.eq.s32.totalorder %s20, 1
      %p43 = por %p41, %p42
      %p45 = scmp.ne.s32.totalorder %s28, %s44
      %p46 = scmp.eq.s32.totalorder %s20, 0
      %p47 = por %p45, %p46
      %s49 = sadd.s32 %s48, 1
      %p52 = scmp.eq.s32.totalorder %s14, 1
      %p53 = scmp.ne.s32.totalorder %s48, %s50
      %p54 = scmp.eq.s32.totalorder %s14, 0
      %p55 = por %p53, %p54
      %p56 = scmp.ne.s32.totalorder %s48, %s50
      %p57 = scmp.eq.s32.totalorder %s19, 1
      %p58 = por %p56, %p57
      %p59 = scmp.ne.s32.totalorder %s50, %s51
      %p60 = scmp.eq.s32.totalorder %s19, 0
      %p61 = por %p59, %p60
      %p62 = scmp.ne.s32.totalorder %s50, %s51
      %p63 = scmp.eq.s32.totalorder %s20, 1
      %p64 = por %p62, %p63
      %p66 = scmp.ne.s32.totalorder %s51, %s65
      %p67 = scmp.eq.s32.totalorder %s20, 0
      %p68 = por %p66, %p67
      %s70 = sadd.s32 %s69, 1
      %p73 = scmp.eq.s32.totalorder %s14, 1
      %p74 = scmp.ne.s32.totalorder %s69, %s71
      %p75 = scmp.eq.s32.totalorder %s14, 0
      %p76 = por %p74, %p75
      %p77 = scmp.ne.s32.totalorder %s69, %s71
      %p78 = scmp.eq.s32.totalorder %s19, 1
      %p79 = por %p77, %p78
      %p80 = scmp.ne.s32.totalorder %s71, %s72
      %p81 = scmp.eq.s32.totalorder %s19, 0
      %p82 = por %p80, %p81
      %p83 = scmp.ne.s32.totalorder %s71, %s72
      %p84 = scmp.eq.s32.totalorder %s20, 1
      %p85 = por %p83, %p84
      %p87 = scmp.ne.s32.totalorder %s72, %s86
      %p88 = scmp.eq.s32.totalorder %s20, 0
      %p89 = por %p87, %p88
      %s91 = sadd.s32 %s90, 1
      %p94 = scmp.eq.s32.totalorder %s14, 1
      %p95 = scmp.ne.s32.totalorder %s90, %s92
      %p96 = scmp.eq.s32.totalorder %s14, 0
      %p97 = por %p95, %p96
      %p98 = scmp.ne.s32.totalorder %s90, %s92
      %p99 = scmp.eq.s32.totalorder %s19, 1
      %p100 = por %p98, %p99
      %p101 = scmp.ne.s32.totalorder %s92, %s93
      %p102 = scmp.eq.s32.totalorder %s19, 0
      %p103 = por %p101, %p102
      %p104 = scmp.ne.s32.totalorder %s92, %s93
      %p105 = scmp.eq.s32.totalorder %s20, 1
      %p106 = por %p104, %p105
      %p108 = scmp.ne.s32.totalorder %s93, %s107
      %p109 = scmp.eq.s32.totalorder %s20, 0
      %p110 = por %p108, %p109
      %s111 = ssub.s32 %s14, %s21
      %p112 = scmp.eq.s32.totalorder %s111, 0
      %s114 = sadd.s32 %s113, 1
      %s115 = scalar_select %p112, %s113, %s114
      %p118 = pneg %p112
      %p119 = scmp.eq.s32.totalorder %s14, 1
      %p120 = por %p118, %p119
      %p121 = scmp.ne.s32.totalorder %s113, %s116
      %p122 = scmp.eq.s32.totalorder %s14, 0
      %p123 = por %p121, %p122
      %p124 = scmp.ne.s32.totalorder %s113, %s116
      %p125 = scmp.eq.s32.totalorder %s19, 1
      %p126 = por %p124, %p125
      %p127 = scmp.ne.s32.totalorder %s116, %s117
      %p128 = scmp.eq.s32.totalorder %s19, 0
      %p129 = por %p127, %p128
      %p130 = scmp.ne.s32.totalorder %s116, %s117
      %p131 = scmp.eq.s32.totalorder %s20, 1
      %p132 = por %p130, %p131
      %p134 = scmp.ne.s32.totalorder %s117, %s133
      %p135 = scmp.eq.s32.totalorder %s20, 0
      %p136 = por %p134, %p135
      %p137 = scmp.le.s32.totalorder 1, %s14
      %p138 = scmp.lt.s32.totalorder %s14, 3
      %p139 = pnand %p137, %p138
      %p140 = pneg %p139
      // Predicated region
      $region9: #{tpu_custom_call.1} parent=5 // pred_check
        _
      $region10: #{tpu_custom_call.1} parent=5 // pred_check_branch
        %142 = sbr.rel (%p139) target = $region12
      $region11: #{tpu_custom_call.1} parent=5 // pred_region
        %s143 = ssub.s32 %s14, 1
        // Predicated region
        $region13: #{tpu_custom_call.1} parent=11 // pred_check
          %p144 = pneg %p61
        $region14: #{tpu_custom_call.1} parent=11 // pred_check_branch
          %146 = sbr.rel (%p144) target = $region16
        $region15: #{tpu_custom_call.1} parent=11 // pred_region
          _
        $region16: #{tpu_custom_call.1} parent=11 // pred_fallthru
          _
        // Predicated region
        $region17: #{tpu_custom_call.1} parent=11 // pred_check
          %p147 = pneg %p82
        $region18: #{tpu_custom_call.1} parent=11 // pred_check_branch
          %149 = sbr.rel (%p147) target = $region20
        $region19: #{tpu_custom_call.1} parent=11 // pred_region
          _
        $region20: #{tpu_custom_call.1} parent=11 // pred_fallthru
          _
        // Predicated region
        $region21: #{tpu_custom_call.1} parent=11 // pred_check
          %p150 = pneg %p103
        $region22: #{tpu_custom_call.1} parent=11 // pred_check_branch
          %152 = sbr.rel (%p150) target = $region24
        $region23: #{tpu_custom_call.1} parent=11 // pred_region
          %154 = vsyncadd [#allocation4], 0
          %s156 = sshll.u32 %s3, 4
          %s157 = int_to_ptr.vmem [resolvable:$true] %s156
          %159 = dma.vmem_to_smem %s157, 48, [#allocation2], [#allocation4]
        $region24: #{tpu_custom_call.1} parent=11 // pred_fallthru
          _
      $region12: #{tpu_custom_call.1} parent=5 // pred_fallthru
        _
      %p160 = scmp.lt.s32.totalorder %s14, 2
      // Predicated region
      $region25: #{tpu_custom_call.1} parent=5 // pred_check
        %p161 = pneg %p160
      $region26: #{tpu_custom_call.1} parent=5 // pred_check_branch
        %163 = sbr.rel (%p161) target = $region28
      $region27: #{tpu_custom_call.1} parent=5 // pred_region
        // Predicated region
        $region29: #{tpu_custom_call.1} parent=27 // pred_check
          %p164 = pneg %p34
        $region30: #{tpu_custom_call.1} parent=27 // pred_check_branch
          %166 = sbr.rel (%p164) target = $region32
        $region31: #{tpu_custom_call.1} parent=27 // pred_region
          %p167 = scmp.lt.s32.totalorder %s14, 1
          %s168 = scalar_select %p167, %s14, 1
          %s169 = smul.addr %s168, 12
          %s170 = smul.addr %s169, 8
          %s171 = scalar_lea.vmem %s0, %s170
        $region32: #{tpu_custom_call.1} parent=27 // pred_fallthru
          _
      $region28: #{tpu_custom_call.1} parent=5 // pred_fallthru
        _
      %p172 = scmp.le.s32.totalorder 1, %s14
      %p173 = scmp.lt.s32.totalorder %s14, 3
      %p174 = pnand %p172, %p173
      %p175 = pneg %p174
      // Predicated region
      $region33: #{tpu_custom_call.1} parent=5 // pred_check
        _
      $region34: #{tpu_custom_call.1} parent=5 // pred_check_branch
        %177 = sbr.rel (%p174) target = $region36
      $region35: #{tpu_custom_call.1} parent=5 // pred_region
        %s178 = ssub.s32 %s14, 1
        // Predicated region
        $region37: #{tpu_custom_call.1} parent=35 // pred_check
          %p179 = pneg %p103
        $region38: #{tpu_custom_call.1} parent=35 // pred_check_branch
          %181 = sbr.rel (%p179) target = $region40
        $region39: #{tpu_custom_call.1} parent=35 // pred_region
          %183 = dma.done [#allocation4], 48
        $region40: #{tpu_custom_call.1} parent=35 // pred_fallthru
          _
        %184 = sfence
        %p185 = scmp.lt.s32.totalorder %s19, 1
        %s186 = scalar_select %p185, %s19, 1
        %s187 = smul.addr %s186, 12
        %s188 = smul.addr %s187, 8
        %s189 = scalar_lea.vmem %s0, %s188
        %p190 = pneg %p40
        %p191 = pneg %p37
        %p192 = pneg %p61
        %p193 = pneg %p58
        %p194 = pneg %p82
        %p195 = pneg %p79
        %p196 = pneg %p103
        %p197 = pneg %p100
        %p198 = pneg %p129
        %p199 = pneg %p126
        %s200 = sand.u32 %s116, 1
        %s201 = scalar_lea.sflag [#allocation3], %s200
        %s202 = sand.u32 %s116, 1
        %s203 = smul.addr %s202, 32
        %s204 = scalar_lea.vmem [#allocation5], %s203
        %p205 = scmp.lt.s32.totalorder %s19, 1
        %s206 = scalar_select %p205, %s19, 1
        %s207 = smul.addr %s206, 12
        %s208 = smul.addr %s207, 8
        %s209 = scalar_lea.vmem %s0, %s208
        %v210 = vld [vmem:[%s1] sm:$0xff]
        %v211 = vld [vmem:[%s1 + $0x8] sm:$0xff]
        %v212 = vld [vmem:[%s2] sm:$0xff]
        %v213 = vld [vmem:[%s2 + $0x8] sm:$0xff]
        loop: start=0, step=1, limit=2
        $region41: #{tpu_custom_call.1} parent=35 // loop_pre_header
          _
        $region42: #{tpu_custom_call.1} parent=35 // loop_header
          %s215 = sphi 0, %s219
          %p216 = scmp.ge.s32.totalorder %s215, 2
        $region43: #{tpu_custom_call.1} parent=35 // loop_header_branch
          %218 = sbr.rel (%p216) target = $region47
        $region44: #{tpu_custom_call.1} parent=35 // loop_body
          %s220 = smul.u32 %s215, 144
          %v221 = vld [vmem:[%s209] sm:$0xff]
          %v222 = vld [vmem:[%s209 + $0x8] sm:$0xff]
          %s223 = sld [smem:[#allocation2 + %s220]]
          %v224 = vstv %s223
          %v225 = vmul.f32 %v224, %v221
          %v226 = vmul.f32 %v224, %v222
          %v227 = vadd.f32 %v225, 0.0
          %v228 = vadd.f32 %v226, 0.0
          %s229 = sadd.s32 %s220, 36
          %s230 = sld [smem:[#allocation2 + %s229]]
          %v231 = vstv %s230
          %v232 = vmul.f32 %v231, %v221
          %v233 = vmul.f32 %v231, %v222
          %v234 = vadd.f32 %v232, 0.0
          %v235 = vadd.f32 %v233, 0.0
          %s236 = sadd.s32 %s220, 72
          %s237 = sld [smem:[#allocation2 + %s236]]
          %v238 = vstv %s237
          %v239 = vmul.f32 %v238, %v221
          %v240 = vmul.f32 %v238, %v222
          %v241 = vadd.f32 %v239, 0.0
          %v242 = vadd.f32 %v240, 0.0
          %s243 = sadd.s32 %s220, 108
          %s244 = sld [smem:[#allocation2 + %s243]]
          %v245 = vstv %s244
          %v246 = vmul.f32 %v245, %v221
          %v247 = vmul.f32 %v245, %v222
          %v248 = vadd.f32 %v246, 0.0
          %v249 = vadd.f32 %v247, 0.0
          %s250 = sadd.s32 %s220, 1
          %s251 = sld [smem:[#allocation2 + %s250]]
          %v252 = vstv %s251
          %v253 = vmul.f32 %v252, %v221
          %v254 = vmul.f32 %v252, %v222
          %257 = vrot.lane.b32.xlu0 %v253, 127
          %v258 = vpop.permute.xlu0 %257
          %259 = vrot.lane.b32.xlu0 %v254, 127
          %v260 = vpop.permute.xlu0 %259
          %v263 = vadd.f32 %v227, %v258
          %v264 = vadd.f32 %v228, %v260
          %s265 = sadd.s32 %s220, 37
          %s266 = sld [smem:[#allocation2 + %s265]]
          %v267 = vstv %s266
          %v268 = vmul.f32 %v267, %v221
          %v269 = vmul.f32 %v267, %v222
          %272 = vrot.lane.b32.xlu0 %v268, 127
          %v273 = vpop.permute.xlu0 %272
          %274 = vrot.lane.b32.xlu0 %v269, 127
          %v275 = vpop.permute.xlu0 %274
          %v278 = vadd.f32 %v234, %v273
          %v279 = vadd.f32 %v235, %v275
          %s280 = sadd.s32 %s220, 73
          %s281 = sld [smem:[#allocation2 + %s280]]
          %v282 = vstv %s281
          %v283 = vmul.f32 %v282, %v221
          %v284 = vmul.f32 %v282, %v222
          %287 = vrot.lane.b32.xlu0 %v283, 127
          %v288 = vpop.permute.xlu0 %287
          %289 = vrot.lane.b32.xlu0 %v284, 127
          %v290 = vpop.permute.xlu0 %289
          %v293 = vadd.f32 %v241, %v288
          %v294 = vadd.f32 %v242, %v290
          %s295 = sadd.s32 %s220, 109
          %s296 = sld [smem:[#allocation2 + %s295]]
          %v297 = vstv %s296
          %v298 = vmul.f32 %v297, %v221
          %v299 = vmul.f32 %v297, %v222
          %302 = vrot.lane.b32.xlu0 %v298, 127
          %v303 = vpop.permute.xlu0 %302
          %304 = vrot.lane.b32.xlu0 %v299, 127
          %v305 = vpop.permute.xlu0 %304
          %v308 = vadd.f32 %v248, %v303
          %v309 = vadd.f32 %v249, %v305
          %s310 = sadd.s32 %s220, 2
          %s311 = sld [smem:[#allocation2 + %s310]]
          %v312 = vstv %s311
          %v313 = vmul.f32 %v312, %v221
          %v314 = vmul.f32 %v312, %v222
          %317 = vrot.lane.b32.xlu0 %v313, 126
          %v318 = vpop.permute.xlu0 %317
          %319 = vrot.lane.b32.xlu0 %v314, 126
          %v320 = vpop.permute.xlu0 %319
          %v323 = vadd.f32 %v263, %v318
          %v324 = vadd.f32 %v264, %v320
          %s325 = sadd.s32 %s220, 38
          %s326 = sld [smem:[#allocation2 + %s325]]
          %v327 = vstv %s326
          %v328 = vmul.f32 %v327, %v221
          %v329 = vmul.f32 %v327, %v222
          %332 = vrot.lane.b32.xlu0 %v328, 126
          %v333 = vpop.permute.xlu0 %332
          %334 = vrot.lane.b32.xlu0 %v329, 126
          %v335 = vpop.permute.xlu0 %334
          %v338 = vadd.f32 %v278, %v333
          %v339 = vadd.f32 %v279, %v335
          %s340 = sadd.s32 %s220, 74
          %s341 = sld [smem:[#allocation2 + %s340]]
          %v342 = vstv %s341
          %v343 = vmul.f32 %v342, %v221
          %v344 = vmul.f32 %v342, %v222
          %347 = vrot.lane.b32.xlu0 %v343, 126
          %v348 = vpop.permute.xlu0 %347
          %349 = vrot.lane.b32.xlu0 %v344, 126
          %v350 = vpop.permute.xlu0 %349
          %v353 = vadd.f32 %v293, %v348
          %v354 = vadd.f32 %v294, %v350
          %s355 = sadd.s32 %s220, 110
          %s356 = sld [smem:[#allocation2 + %s355]]
          %v357 = vstv %s356
          %v358 = vmul.f32 %v357, %v221
          %v359 = vmul.f32 %v357, %v222
          %362 = vrot.lane.b32.xlu0 %v358, 126
          %v363 = vpop.permute.xlu0 %362
          %364 = vrot.lane.b32.xlu0 %v359, 126
          %v365 = vpop.permute.xlu0 %364
          %v368 = vadd.f32 %v308, %v363
          %v369 = vadd.f32 %v309, %v365
          %v370 = vld [vmem:[%s209 + $0x1] sm:$0xff]
          %v371 = vld [vmem:[%s209 + $0x9] sm:$0xff]
          %s372 = sadd.s32 %s220, 3
          %s373 = sld [smem:[#allocation2 + %s372]]
          %v374 = vstv %s373
          %v375 = vmul.f32 %v374, %v370
          %v376 = vmul.f32 %v374, %v371
          %v377 = vadd.f32 %v323, %v375
          %v378 = vadd.f32 %v324, %v376
          %s379 = sadd.s32 %s220, 39
          %s380 = sld [smem:[#allocation2 + %s379]]
          %v381 = vstv %s380
          %v382 = vmul.f32 %v381, %v370
          %v383 = vmul.f32 %v381, %v371
          %v384 = vadd.f32 %v338, %v382
          %v385 = vadd.f32 %v339, %v383
          %s386 = sadd.s32 %s220, 75
          %s387 = sld [smem:[#allocation2 + %s386]]
          %v388 = vstv %s387
          %v389 = vmul.f32 %v388, %v370
          %v390 = vmul.f32 %v388, %v371
          %v391 = vadd.f32 %v353, %v389
          %v392 = vadd.f32 %v354, %v390
          %s393 = sadd.s32 %s220, 111
          %s394 = sld [smem:[#allocation2 + %s393]]
          %v395 = vstv %s394
          %v396 = vmul.f32 %v395, %v370
          %v397 = vmul.f32 %v395, %v371
          %v398 = vadd.f32 %v368, %v396
          %v399 = vadd.f32 %v369, %v397
          %s400 = sadd.s32 %s220, 4
          %s401 = sld [smem:[#allocation2 + %s400]]
          %v402 = vstv %s401
          %v403 = vmul.f32 %v402, %v370
          %v404 = vmul.f32 %v402, %v371
          %407 = vrot.lane.b32.xlu0 %v403, 127
          %v408 = vpop.permute.xlu0 %407
          %409 = vrot.lane.b32.xlu0 %v404, 127
          %v410 = vpop.permute.xlu0 %409
          %v413 = vadd.f32 %v377, %v408
          %v414 = vadd.f32 %v378, %v410
          %s415 = sadd.s32 %s220, 40
          %s416 = sld [smem:[#allocation2 + %s415]]
          %v417 = vstv %s416
          %v418 = vmul.f32 %v417, %v370
          %v419 = vmul.f32 %v417, %v371
          %422 = vrot.lane.b32.xlu0 %v418, 127
          %v423 = vpop.permute.xlu0 %422
          %424 = vrot.lane.b32.xlu0 %v419, 127
          %v425 = vpop.permute.xlu0 %424
          %v428 = vadd.f32 %v384, %v423
          %v429 = vadd.f32 %v385, %v425
          %s430 = sadd.s32 %s220, 76
          %s431 = sld [smem:[#allocation2 + %s430]]
          %v432 = vstv %s431
          %v433 = vmul.f32 %v432, %v370
          %v434 = vmul.f32 %v432, %v371
          %437 = vrot.lane.b32.xlu0 %v433, 127
          %v438 = vpop.permute.xlu0 %437
          %439 = vrot.lane.b32.xlu0 %v434, 127
          %v440 = vpop.permute.xlu0 %439
          %v443 = vadd.f32 %v391, %v438
          %v444 = vadd.f32 %v392, %v440
          %s445 = sadd.s32 %s220, 112
          %s446 = sld [smem:[#allocation2 + %s445]]
          %v447 = vstv %s446
          %v448 = vmul.f32 %v447, %v370
          %v449 = vmul.f32 %v447, %v371
          %452 = vrot.lane.b32.xlu0 %v448, 127
          %v453 = vpop.permute.xlu0 %452
          %454 = vrot.lane.b32.xlu0 %v449, 127
          %v455 = vpop.permute.xlu0 %454
          %v458 = vadd.f32 %v398, %v453
          %v459 = vadd.f32 %v399, %v455
          %s460 = sadd.s32 %s220, 5
          %s461 = sld [smem:[#allocation2 + %s460]]
          %v462 = vstv %s461
          %v463 = vmul.f32 %v462, %v370
          %v464 = vmul.f32 %v462, %v371
          %467 = vrot.lane.b32.xlu0 %v463, 126
          %v468 = vpop.permute.xlu0 %467
          %469 = vrot.lane.b32.xlu0 %v464, 126
          %v470 = vpop.permute.xlu0 %469
          %v473 = vadd.f32 %v413, %v468
          %v474 = vadd.f32 %v414, %v470
          %s475 = sadd.s32 %s220, 41
          %s476 = sld [smem:[#allocation2 + %s475]]
          %v477 = vstv %s476
          %v478 = vmul.f32 %v477, %v370
          %v479 = vmul.f32 %v477, %v371
          %482 = vrot.lane.b32.xlu0 %v478, 126
          %v483 = vpop.permute.xlu0 %482
          %484 = vrot.lane.b32.xlu0 %v479, 126
          %v485 = vpop.permute.xlu0 %484
          %v488 = vadd.f32 %v428, %v483
          %v489 = vadd.f32 %v429, %v485
          %s490 = sadd.s32 %s220, 77
          %s491 = sld [smem:[#allocation2 + %s490]]
          %v492 = vstv %s491
          %v493 = vmul.f32 %v492, %v370
          %v494 = vmul.f32 %v492, %v371
          %497 = vrot.lane.b32.xlu0 %v493, 126
          %v498 = vpop.permute.xlu0 %497
          %499 = vrot.lane.b32.xlu0 %v494, 126
          %v500 = vpop.permute.xlu0 %499
          %v503 = vadd.f32 %v443, %v498
          %v504 = vadd.f32 %v444, %v500
          %s505 = sadd.s32 %s220, 113
          %s506 = sld [smem:[#allocation2 + %s505]]
          %v507 = vstv %s506
          %v508 = vmul.f32 %v507, %v370
          %v509 = vmul.f32 %v507, %v371
          %512 = vrot.lane.b32.xlu0 %v508, 126
          %v513 = vpop.permute.xlu0 %512
          %514 = vrot.lane.b32.xlu0 %v509, 126
          %v515 = vpop.permute.xlu0 %514
          %v518 = vadd.f32 %v458, %v513
          %v519 = vadd.f32 %v459, %v515
          %v520 = vld [vmem:[%s209 + $0x2] sm:$0xff]
          %v521 = vld [vmem:[%s209 + $0xa] sm:$0xff]
          %s522 = sadd.s32 %s220, 6
          %s523 = sld [smem:[#allocation2 + %s522]]
          %v524 = vstv %s523
          %v525 = vmul.f32 %v524, %v520
          %v526 = vmul.f32 %v524, %v521
          %v527 = vadd.f32 %v473, %v525
          %v528 = vadd.f32 %v474, %v526
          %s529 = sadd.s32 %s220, 42
          %s530 = sld [smem:[#allocation2 + %s529]]
          %v531 = vstv %s530
          %v532 = vmul.f32 %v531, %v520
          %v533 = vmul.f32 %v531, %v521
          %v534 = vadd.f32 %v488, %v532
          %v535 = vadd.f32 %v489, %v533
          %s536 = sadd.s32 %s220, 78
          %s537 = sld [smem:[#allocation2 + %s536]]
          %v538 = vstv %s537
          %v539 = vmul.f32 %v538, %v520
          %v540 = vmul.f32 %v538, %v521
          %v541 = vadd.f32 %v503, %v539
          %v542 = vadd.f32 %v504, %v540
          %s543 = sadd.s32 %s220, 114
          %s544 = sld [smem:[#allocation2 + %s543]]
          %v545 = vstv %s544
          %v546 = vmul.f32 %v545, %v520
          %v547 = vmul.f32 %v545, %v521
          %v548 = vadd.f32 %v518, %v546
          %v549 = vadd.f32 %v519, %v547
          %s550 = sadd.s32 %s220, 7
          %s551 = sld [smem:[#allocation2 + %s550]]
          %v552 = vstv %s551
          %v553 = vmul.f32 %v552, %v520
          %v554 = vmul.f32 %v552, %v521
          %557 = vrot.lane.b32.xlu0 %v553, 127
          %v558 = vpop.permute.xlu0 %557
          %559 = vrot.lane.b32.xlu0 %v554, 127
          %v560 = vpop.permute.xlu0 %559
          %v563 = vadd.f32 %v527, %v558
          %v564 = vadd.f32 %v528, %v560
          %s565 = sadd.s32 %s220, 43
          %s566 = sld [smem:[#allocation2 + %s565]]
          %v567 = vstv %s566
          %v568 = vmul.f32 %v567, %v520
          %v569 = vmul.f32 %v567, %v521
          %572 = vrot.lane.b32.xlu0 %v568, 127
          %v573 = vpop.permute.xlu0 %572
          %574 = vrot.lane.b32.xlu0 %v569, 127
          %v575 = vpop.permute.xlu0 %574
          %v578 = vadd.f32 %v534, %v573
          %v579 = vadd.f32 %v535, %v575
          %s580 = sadd.s32 %s220, 79
          %s581 = sld [smem:[#allocation2 + %s580]]
          %v582 = vstv %s581
          %v583 = vmul.f32 %v582, %v520
          %v584 = vmul.f32 %v582, %v521
          %587 = vrot.lane.b32.xlu0 %v583, 127
          %v588 = vpop.permute.xlu0 %587
          %589 = vrot.lane.b32.xlu0 %v584, 127
          %v590 = vpop.permute.xlu0 %589
          %v593 = vadd.f32 %v541, %v588
          %v594 = vadd.f32 %v542, %v590
          %s595 = sadd.s32 %s220, 115
          %s596 = sld [smem:[#allocation2 + %s595]]
          %v597 = vstv %s596
          %v598 = vmul.f32 %v597, %v520
          %v599 = vmul.f32 %v597, %v521
          %602 = vrot.lane.b32.xlu0 %v598, 127
          %v603 = vpop.permute.xlu0 %602
          %604 = vrot.lane.b32.xlu0 %v599, 127
          %v605 = vpop.permute.xlu0 %604
          %v608 = vadd.f32 %v548, %v603
          %v609 = vadd.f32 %v549, %v605
          %s610 = sadd.s32 %s220, 8
          %s611 = sld [smem:[#allocation2 + %s610]]
          %v612 = vstv %s611
          %v613 = vmul.f32 %v612, %v520
          %v614 = vmul.f32 %v612, %v521
          %617 = vrot.lane.b32.xlu0 %v613, 126
          %v618 = vpop.permute.xlu0 %617
          %619 = vrot.lane.b32.xlu0 %v614, 126
          %v620 = vpop.permute.xlu0 %619
          %v623 = vadd.f32 %v563, %v618
          %v624 = vadd.f32 %v564, %v620
          %s625 = sadd.s32 %s220, 44
          %s626 = sld [smem:[#allocation2 + %s625]]
          %v627 = vstv %s626
          %v628 = vmul.f32 %v627, %v520
          %v629 = vmul.f32 %v627, %v521
          %632 = vrot.lane.b32.xlu0 %v628, 126
          %v633 = vpop.permute.xlu0 %632
          %634 = vrot.lane.b32.xlu0 %v629, 126
          %v635 = vpop.permute.xlu0 %634
          %v638 = vadd.f32 %v578, %v633
          %v639 = vadd.f32 %v579, %v635
          %s640 = sadd.s32 %s220, 80
          %s641 = sld [smem:[#allocation2 + %s640]]
          %v642 = vstv %s641
          %v643 = vmul.f32 %v642, %v520
          %v644 = vmul.f32 %v642, %v521
          %647 = vrot.lane.b32.xlu0 %v643, 126
          %v648 = vpop.permute.xlu0 %647
          %649 = vrot.lane.b32.xlu0 %v644, 126
          %v650 = vpop.permute.xlu0 %649
          %v653 = vadd.f32 %v593, %v648
          %v654 = vadd.f32 %v594, %v650
          %s655 = sadd.s32 %s220, 116
          %s656 = sld [smem:[#allocation2 + %s655]]
          %v657 = vstv %s656
          %v658 = vmul.f32 %v657, %v520
          %v659 = vmul.f32 %v657, %v521
          %662 = vrot.lane.b32.xlu0 %v658, 126
          %v663 = vpop.permute.xlu0 %662
          %664 = vrot.lane.b32.xlu0 %v659, 126
          %v665 = vpop.permute.xlu0 %664
          %v668 = vadd.f32 %v608, %v663
          %v669 = vadd.f32 %v609, %v665
          %s670 = scalar_lea.vmem %s209, 24
          %v671 = vld [vmem:[%s670] sm:$0xff]
          %v672 = vld [vmem:[%s670 + $0x8] sm:$0xff]
          %s673 = sadd.s32 %s220, 9
          %s674 = sld [smem:[#allocation2 + %s673]]
          %v675 = vstv %s674
          %v676 = vmul.f32 %v675, %v671
          %v677 = vmul.f32 %v675, %v672
          %v678 = vadd.f32 %v623, %v676
          %v679 = vadd.f32 %v624, %v677
          %s680 = sadd.s32 %s220, 45
          %s681 = sld [smem:[#allocation2 + %s680]]
          %v682 = vstv %s681
          %v683 = vmul.f32 %v682, %v671
          %v684 = vmul.f32 %v682, %v672
          %v685 = vadd.f32 %v638, %v683
          %v686 = vadd.f32 %v639, %v684
          %s687 = sadd.s32 %s220, 81
          %s688 = sld [smem:[#allocation2 + %s687]]
          %v689 = vstv %s688
          %v690 = vmul.f32 %v689, %v671
          %v691 = vmul.f32 %v689, %v672
          %v692 = vadd.f32 %v653, %v690
          %v693 = vadd.f32 %v654, %v691
          %s694 = sadd.s32 %s220, 117
          %s695 = sld [smem:[#allocation2 + %s694]]
          %v696 = vstv %s695
          %v697 = vmul.f32 %v696, %v671
          %v698 = vmul.f32 %v696, %v672
          %v699 = vadd.f32 %v668, %v697
          %v700 = vadd.f32 %v669, %v698
          %s701 = sadd.s32 %s220, 10
          %s702 = sld [smem:[#allocation2 + %s701]]
          %v703 = vstv %s702
          %v704 = vmul.f32 %v703, %v671
          %v705 = vmul.f32 %v703, %v672
          %708 = vrot.lane.b32.xlu0 %v704, 127
          %v709 = vpop.permute.xlu0 %708
          %710 = vrot.lane.b32.xlu0 %v705, 127
          %v711 = vpop.permute.xlu0 %710
          %v714 = vadd.f32 %v678, %v709
          %v715 = vadd.f32 %v679, %v711
          %s716 = sadd.s32 %s220, 46
          %s717 = sld [smem:[#allocation2 + %s716]]
          %v718 = vstv %s717
          %v719 = vmul.f32 %v718, %v671
          %v720 = vmul.f32 %v718, %v672
          %723 = vrot.lane.b32.xlu0 %v719, 127
          %v724 = vpop.permute.xlu0 %723
          %725 = vrot.lane.b32.xlu0 %v720, 127
          %v726 = vpop.permute.xlu0 %725
          %v729 = vadd.f32 %v685, %v724
          %v730 = vadd.f32 %v686, %v726
          %s731 = sadd.s32 %s220, 82
          %s732 = sld [smem:[#allocation2 + %s731]]
          %v733 = vstv %s732
          %v734 = vmul.f32 %v733, %v671
          %v735 = vmul.f32 %v733, %v672
          %738 = vrot.lane.b32.xlu0 %v734, 127
          %v739 = vpop.permute.xlu0 %738
          %740 = vrot.lane.b32.xlu0 %v735, 127
          %v741 = vpop.permute.xlu0 %740
          %v744 = vadd.f32 %v692, %v739
          %v745 = vadd.f32 %v693, %v741
          %s746 = sadd.s32 %s220, 118
          %s747 = sld [smem:[#allocation2 + %s746]]
          %v748 = vstv %s747
          %v749 = vmul.f32 %v748, %v671
          %v750 = vmul.f32 %v748, %v672
          %753 = vrot.lane.b32.xlu0 %v749, 127
          %v754 = vpop.permute.xlu0 %753
          %755 = vrot.lane.b32.xlu0 %v750, 127
          %v756 = vpop.permute.xlu0 %755
          %v759 = vadd.f32 %v699, %v754
          %v760 = vadd.f32 %v700, %v756
          %s761 = sadd.s32 %s220, 11
          %s762 = sld [smem:[#allocation2 + %s761]]
          %v763 = vstv %s762
          %v764 = vmul.f32 %v763, %v671
          %v765 = vmul.f32 %v763, %v672
          %768 = vrot.lane.b32.xlu0 %v764, 126
          %v769 = vpop.permute.xlu0 %768
          %770 = vrot.lane.b32.xlu0 %v765, 126
          %v771 = vpop.permute.xlu0 %770
          %v774 = vadd.f32 %v714, %v769
          %v775 = vadd.f32 %v715, %v771
          %s776 = sadd.s32 %s220, 47
          %s777 = sld [smem:[#allocation2 + %s776]]
          %v778 = vstv %s777
          %v779 = vmul.f32 %v778, %v671
          %v780 = vmul.f32 %v778, %v672
          %783 = vrot.lane.b32.xlu0 %v779, 126
          %v784 = vpop.permute.xlu0 %783
          %785 = vrot.lane.b32.xlu0 %v780, 126
          %v786 = vpop.permute.xlu0 %785
          %v789 = vadd.f32 %v729, %v784
          %v790 = vadd.f32 %v730, %v786
          %s791 = sadd.s32 %s220, 83
          %s792 = sld [smem:[#allocation2 + %s791]]
          %v793 = vstv %s792
          %v794 = vmul.f32 %v793, %v671
          %v795 = vmul.f32 %v793, %v672
          %798 = vrot.lane.b32.xlu0 %v794, 126
          %v799 = vpop.permute.xlu0 %798
          %800 = vrot.lane.b32.xlu0 %v795, 126
          %v801 = vpop.permute.xlu0 %800
          %v804 = vadd.f32 %v744, %v799
          %v805 = vadd.f32 %v745, %v801
          %s806 = sadd.s32 %s220, 119
          %s807 = sld [smem:[#allocation2 + %s806]]
          %v808 = vstv %s807
          %v809 = vmul.f32 %v808, %v671
          %v810 = vmul.f32 %v808, %v672
          %813 = vrot.lane.b32.xlu0 %v809, 126
          %v814 = vpop.permute.xlu0 %813
          %815 = vrot.lane.b32.xlu0 %v810, 126
          %v816 = vpop.permute.xlu0 %815
          %v819 = vadd.f32 %v759, %v814
          %v820 = vadd.f32 %v760, %v816
          %v821 = vld [vmem:[%s670 + $0x1] sm:$0xff]
          %v822 = vld [vmem:[%s670 + $0x9] sm:$0xff]
          %s823 = sadd.s32 %s220, 12
          %s824 = sld [smem:[#allocation2 + %s823]]
          %v825 = vstv %s824
          %v826 = vmul.f32 %v825, %v821
          %v827 = vmul.f32 %v825, %v822
          %v828 = vadd.f32 %v774, %v826
          %v829 = vadd.f32 %v775, %v827
          %s830 = sadd.s32 %s220, 48
          %s831 = sld [smem:[#allocation2 + %s830]]
          %v832 = vstv %s831
          %v833 = vmul.f32 %v832, %v821
          %v834 = vmul.f32 %v832, %v822
          %v835 = vadd.f32 %v789, %v833
          %v836 = vadd.f32 %v790, %v834
          %s837 = sadd.s32 %s220, 84
          %s838 = sld [smem:[#allocation2 + %s837]]
          %v839 = vstv %s838
          %v840 = vmul.f32 %v839, %v821
          %v841 = vmul.f32 %v839, %v822
          %v842 = vadd.f32 %v804, %v840
          %v843 = vadd.f32 %v805, %v841
          %s844 = sadd.s32 %s220, 120
          %s845 = sld [smem:[#allocation2 + %s844]]
          %v846 = vstv %s845
          %v847 = vmul.f32 %v846, %v821
          %v848 = vmul.f32 %v846, %v822
          %v849 = vadd.f32 %v819, %v847
          %v850 = vadd.f32 %v820, %v848
          %s851 = sadd.s32 %s220, 13
          %s852 = sld [smem:[#allocation2 + %s851]]
          %v853 = vstv %s852
          %v854 = vmul.f32 %v853, %v821
          %v855 = vmul.f32 %v853, %v822
          %858 = vrot.lane.b32.xlu0 %v854, 127
          %v859 = vpop.permute.xlu0 %858
          %860 = vrot.lane.b32.xlu0 %v855, 127
          %v861 = vpop.permute.xlu0 %860
          %v864 = vadd.f32 %v828, %v859
          %v865 = vadd.f32 %v829, %v861
          %s866 = sadd.s32 %s220, 49
          %s867 = sld [smem:[#allocation2 + %s866]]
          %v868 = vstv %s867
          %v869 = vmul.f32 %v868, %v821
          %v870 = vmul.f32 %v868, %v822
          %873 = vrot.lane.b32.xlu0 %v869, 127
          %v874 = vpop.permute.xlu0 %873
          %875 = vrot.lane.b32.xlu0 %v870, 127
          %v876 = vpop.permute.xlu0 %875
          %v879 = vadd.f32 %v835, %v874
          %v880 = vadd.f32 %v836, %v876
          %s881 = sadd.s32 %s220, 85
          %s882 = sld [smem:[#allocation2 + %s881]]
          %v883 = vstv %s882
          %v884 = vmul.f32 %v883, %v821
          %v885 = vmul.f32 %v883, %v822
          %888 = vrot.lane.b32.xlu0 %v884, 127
          %v889 = vpop.permute.xlu0 %888
          %890 = vrot.lane.b32.xlu0 %v885, 127
          %v891 = vpop.permute.xlu0 %890
          %v894 = vadd.f32 %v842, %v889
          %v895 = vadd.f32 %v843, %v891
          %s896 = sadd.s32 %s220, 121
          %s897 = sld [smem:[#allocation2 + %s896]]
          %v898 = vstv %s897
          %v899 = vmul.f32 %v898, %v821
          %v900 = vmul.f32 %v898, %v822
          %903 = vrot.lane.b32.xlu0 %v899, 127
          %v904 = vpop.permute.xlu0 %903
          %905 = vrot.lane.b32.xlu0 %v900, 127
          %v906 = vpop.permute.xlu0 %905
          %v909 = vadd.f32 %v849, %v904
          %v910 = vadd.f32 %v850, %v906
          %s911 = sadd.s32 %s220, 14
          %s912 = sld [smem:[#allocation2 + %s911]]
          %v913 = vstv %s912
          %v914 = vmul.f32 %v913, %v821
          %v915 = vmul.f32 %v913, %v822
          %918 = vrot.lane.b32.xlu0 %v914, 126
          %v919 = vpop.permute.xlu0 %918
          %920 = vrot.lane.b32.xlu0 %v915, 126
          %v921 = vpop.permute.xlu0 %920
          %v924 = vadd.f32 %v864, %v919
          %v925 = vadd.f32 %v865, %v921
          %s926 = sadd.s32 %s220, 50
          %s927 = sld [smem:[#allocation2 + %s926]]
          %v928 = vstv %s927
          %v929 = vmul.f32 %v928, %v821
          %v930 = vmul.f32 %v928, %v822
          %933 = vrot.lane.b32.xlu0 %v929, 126
          %v934 = vpop.permute.xlu0 %933
          %935 = vrot.lane.b32.xlu0 %v930, 126
          %v936 = vpop.permute.xlu0 %935
          %v939 = vadd.f32 %v879, %v934
          %v940 = vadd.f32 %v880, %v936
          %s941 = sadd.s32 %s220, 86
          %s942 = sld [smem:[#allocation2 + %s941]]
          %v943 = vstv %s942
          %v944 = vmul.f32 %v943, %v821
          %v945 = vmul.f32 %v943, %v822
          %948 = vrot.lane.b32.xlu0 %v944, 126
          %v949 = vpop.permute.xlu0 %948
          %950 = vrot.lane.b32.xlu0 %v945, 126
          %v951 = vpop.permute.xlu0 %950
          %v954 = vadd.f32 %v894, %v949
          %v955 = vadd.f32 %v895, %v951
          %s956 = sadd.s32 %s220, 122
          %s957 = sld [smem:[#allocation2 + %s956]]
          %v958 = vstv %s957
          %v959 = vmul.f32 %v958, %v821
          %v960 = vmul.f32 %v958, %v822
          %963 = vrot.lane.b32.xlu0 %v959, 126
          %v964 = vpop.permute.xlu0 %963
          %965 = vrot.lane.b32.xlu0 %v960, 126
          %v966 = vpop.permute.xlu0 %965
          %v969 = vadd.f32 %v909, %v964
          %v970 = vadd.f32 %v910, %v966
          %v971 = vld [vmem:[%s670 + $0x2] sm:$0xff]
          %v972 = vld [vmem:[%s670 + $0xa] sm:$0xff]
          %s973 = sadd.s32 %s220, 15
          %s974 = sld [smem:[#allocation2 + %s973]]
          %v975 = vstv %s974
          %v976 = vmul.f32 %v975, %v971
          %v977 = vmul.f32 %v975, %v972
          %v978 = vadd.f32 %v924, %v976
          %v979 = vadd.f32 %v925, %v977
          %s980 = sadd.s32 %s220, 51
          %s981 = sld [smem:[#allocation2 + %s980]]
          %v982 = vstv %s981
          %v983 = vmul.f32 %v982, %v971
          %v984 = vmul.f32 %v982, %v972
          %v985 = vadd.f32 %v939, %v983
          %v986 = vadd.f32 %v940, %v984
          %s987 = sadd.s32 %s220, 87
          %s988 = sld [smem:[#allocation2 + %s987]]
          %v989 = vstv %s988
          %v990 = vmul.f32 %v989, %v971
          %v991 = vmul.f32 %v989, %v972
          %v992 = vadd.f32 %v954, %v990
          %v993 = vadd.f32 %v955, %v991
          %s994 = sadd.s32 %s220, 123
          %s995 = sld [smem:[#allocation2 + %s994]]
          %v996 = vstv %s995
          %v997 = vmul.f32 %v996, %v971
          %v998 = vmul.f32 %v996, %v972
          %v999 = vadd.f32 %v969, %v997
          %v1000 = vadd.f32 %v970, %v998
          %s1001 = sadd.s32 %s220, 16
          %s1002 = sld [smem:[#allocation2 + %s1001]]
          %v1003 = vstv %s1002
          %v1004 = vmul.f32 %v1003, %v971
          %v1005 = vmul.f32 %v1003, %v972
          %1008 = vrot.lane.b32.xlu0 %v1004, 127
          %v1009 = vpop.permute.xlu0 %1008
          %1010 = vrot.lane.b32.xlu0 %v1005, 127
          %v1011 = vpop.permute.xlu0 %1010
          %v1014 = vadd.f32 %v978, %v1009
          %v1015 = vadd.f32 %v979, %v1011
          %s1016 = sadd.s32 %s220, 52
          %s1017 = sld [smem:[#allocation2 + %s1016]]
          %v1018 = vstv %s1017
          %v1019 = vmul.f32 %v1018, %v971
          %v1020 = vmul.f32 %v1018, %v972
          %1023 = vrot.lane.b32.xlu0 %v1019, 127
          %v1024 = vpop.permute.xlu0 %1023
          %1025 = vrot.lane.b32.xlu0 %v1020, 127
          %v1026 = vpop.permute.xlu0 %1025
          %v1029 = vadd.f32 %v985, %v1024
          %v1030 = vadd.f32 %v986, %v1026
          %s1031 = sadd.s32 %s220, 88
          %s1032 = sld [smem:[#allocation2 + %s1031]]
          %v1033 = vstv %s1032
          %v1034 = vmul.f32 %v1033, %v971
          %v1035 = vmul.f32 %v1033, %v972
          %1038 = vrot.lane.b32.xlu0 %v1034, 127
          %v1039 = vpop.permute.xlu0 %1038
          %1040 = vrot.lane.b32.xlu0 %v1035, 127
          %v1041 = vpop.permute.xlu0 %1040
          %v1044 = vadd.f32 %v992, %v1039
          %v1045 = vadd.f32 %v993, %v1041
          %s1046 = sadd.s32 %s220, 124
          %s1047 = sld [smem:[#allocation2 + %s1046]]
          %v1048 = vstv %s1047
          %v1049 = vmul.f32 %v1048, %v971
          %v1050 = vmul.f32 %v1048, %v972
          %1053 = vrot.lane.b32.xlu0 %v1049, 127
          %v1054 = vpop.permute.xlu0 %1053
          %1055 = vrot.lane.b32.xlu0 %v1050, 127
          %v1056 = vpop.permute.xlu0 %1055
          %v1059 = vadd.f32 %v999, %v1054
          %v1060 = vadd.f32 %v1000, %v1056
          %s1061 = sadd.s32 %s220, 17
          %s1062 = sld [smem:[#allocation2 + %s1061]]
          %v1063 = vstv %s1062
          %v1064 = vmul.f32 %v1063, %v971
          %v1065 = vmul.f32 %v1063, %v972
          %1068 = vrot.lane.b32.xlu0 %v1064, 126
          %v1069 = vpop.permute.xlu0 %1068
          %1070 = vrot.lane.b32.xlu0 %v1065, 126
          %v1071 = vpop.permute.xlu0 %1070
          %v1074 = vadd.f32 %v1014, %v1069
          %v1075 = vadd.f32 %v1015, %v1071
          %s1076 = sadd.s32 %s220, 53
          %s1077 = sld [smem:[#allocation2 + %s1076]]
          %v1078 = vstv %s1077
          %v1079 = vmul.f32 %v1078, %v971
          %v1080 = vmul.f32 %v1078, %v972
          %1083 = vrot.lane.b32.xlu0 %v1079, 126
          %v1084 = vpop.permute.xlu0 %1083
          %1085 = vrot.lane.b32.xlu0 %v1080, 126
          %v1086 = vpop.permute.xlu0 %1085
          %v1089 = vadd.f32 %v1029, %v1084
          %v1090 = vadd.f32 %v1030, %v1086
          %s1091 = sadd.s32 %s220, 89
          %s1092 = sld [smem:[#allocation2 + %s1091]]
          %v1093 = vstv %s1092
          %v1094 = vmul.f32 %v1093, %v971
          %v1095 = vmul.f32 %v1093, %v972
          %1098 = vrot.lane.b32.xlu0 %v1094, 126
          %v1099 = vpop.permute.xlu0 %1098
          %1100 = vrot.lane.b32.xlu0 %v1095, 126
          %v1101 = vpop.permute.xlu0 %1100
          %v1104 = vadd.f32 %v1044, %v1099
          %v1105 = vadd.f32 %v1045, %v1101
          %s1106 = sadd.s32 %s220, 125
          %s1107 = sld [smem:[#allocation2 + %s1106]]
          %v1108 = vstv %s1107
          %v1109 = vmul.f32 %v1108, %v971
          %v1110 = vmul.f32 %v1108, %v972
          %1113 = vrot.lane.b32.xlu0 %v1109, 126
          %v1114 = vpop.permute.xlu0 %1113
          %1115 = vrot.lane.b32.xlu0 %v1110, 126
          %v1116 = vpop.permute.xlu0 %1115
          %v1119 = vadd.f32 %v1059, %v1114
          %v1120 = vadd.f32 %v1060, %v1116
          %s1121 = scalar_lea.vmem %s209, 48
          %v1122 = vld [vmem:[%s1121] sm:$0xff]
          %v1123 = vld [vmem:[%s1121 + $0x8] sm:$0xff]
          %s1124 = sadd.s32 %s220, 18
          %s1125 = sld [smem:[#allocation2 + %s1124]]
          %v1126 = vstv %s1125
          %v1127 = vmul.f32 %v1126, %v1122
          %v1128 = vmul.f32 %v1126, %v1123
          %v1129 = vadd.f32 %v1074, %v1127
          %v1130 = vadd.f32 %v1075, %v1128
          %s1131 = sadd.s32 %s220, 54
          %s1132 = sld [smem:[#allocation2 + %s1131]]
          %v1133 = vstv %s1132
          %v1134 = vmul.f32 %v1133, %v1122
          %v1135 = vmul.f32 %v1133, %v1123
          %v1136 = vadd.f32 %v1089, %v1134
          %v1137 = vadd.f32 %v1090, %v1135
          %s1138 = sadd.s32 %s220, 90
          %s1139 = sld [smem:[#allocation2 + %s1138]]
          %v1140 = vstv %s1139
          %v1141 = vmul.f32 %v1140, %v1122
          %v1142 = vmul.f32 %v1140, %v1123
          %v1143 = vadd.f32 %v1104, %v1141
          %v1144 = vadd.f32 %v1105, %v1142
          %s1145 = sadd.s32 %s220, 126
          %s1146 = sld [smem:[#allocation2 + %s1145]]
          %v1147 = vstv %s1146
          %v1148 = vmul.f32 %v1147, %v1122
          %v1149 = vmul.f32 %v1147, %v1123
          %v1150 = vadd.f32 %v1119, %v1148
          %v1151 = vadd.f32 %v1120, %v1149
          %s1152 = sadd.s32 %s220, 19
          %s1153 = sld [smem:[#allocation2 + %s1152]]
          %v1154 = vstv %s1153
          %v1155 = vmul.f32 %v1154, %v1122
          %v1156 = vmul.f32 %v1154, %v1123
          %1159 = vrot.lane.b32.xlu0 %v1155, 127
          %v1160 = vpop.permute.xlu0 %1159
          %1161 = vrot.lane.b32.xlu0 %v1156, 127
          %v1162 = vpop.permute.xlu0 %1161
          %v1165 = vadd.f32 %v1129, %v1160
          %v1166 = vadd.f32 %v1130, %v1162
          %s1167 = sadd.s32 %s220, 55
          %s1168 = sld [smem:[#allocation2 + %s1167]]
          %v1169 = vstv %s1168
          %v1170 = vmul.f32 %v1169, %v1122
          %v1171 = vmul.f32 %v1169, %v1123
          %1174 = vrot.lane.b32.xlu0 %v1170, 127
          %v1175 = vpop.permute.xlu0 %1174
          %1176 = vrot.lane.b32.xlu0 %v1171, 127
          %v1177 = vpop.permute.xlu0 %1176
          %v1180 = vadd.f32 %v1136, %v1175
          %v1181 = vadd.f32 %v1137, %v1177
          %s1182 = sadd.s32 %s220, 91
          %s1183 = sld [smem:[#allocation2 + %s1182]]
          %v1184 = vstv %s1183
          %v1185 = vmul.f32 %v1184, %v1122
          %v1186 = vmul.f32 %v1184, %v1123
          %1189 = vrot.lane.b32.xlu0 %v1185, 127
          %v1190 = vpop.permute.xlu0 %1189
          %1191 = vrot.lane.b32.xlu0 %v1186, 127
          %v1192 = vpop.permute.xlu0 %1191
          %v1195 = vadd.f32 %v1143, %v1190
          %v1196 = vadd.f32 %v1144, %v1192
          %s1197 = sadd.s32 %s220, 127
          %s1198 = sld [smem:[#allocation2 + %s1197]]
          %v1199 = vstv %s1198
          %v1200 = vmul.f32 %v1199, %v1122
          %v1201 = vmul.f32 %v1199, %v1123
          %1204 = vrot.lane.b32.xlu0 %v1200, 127
          %v1205 = vpop.permute.xlu0 %1204
          %1206 = vrot.lane.b32.xlu0 %v1201, 127
          %v1207 = vpop.permute.xlu0 %1206
          %v1210 = vadd.f32 %v1150, %v1205
          %v1211 = vadd.f32 %v1151, %v1207
          %s1212 = sadd.s32 %s220, 20
          %s1213 = sld [smem:[#allocation2 + %s1212]]
          %v1214 = vstv %s1213
          %v1215 = vmul.f32 %v1214, %v1122
          %v1216 = vmul.f32 %v1214, %v1123
          %1219 = vrot.lane.b32.xlu0 %v1215, 126
          %v1220 = vpop.permute.xlu0 %1219
          %1221 = vrot.lane.b32.xlu0 %v1216, 126
          %v1222 = vpop.permute.xlu0 %1221
          %v1225 = vadd.f32 %v1165, %v1220
          %v1226 = vadd.f32 %v1166, %v1222
          %s1227 = sadd.s32 %s220, 56
          %s1228 = sld [smem:[#allocation2 + %s1227]]
          %v1229 = vstv %s1228
          %v1230 = vmul.f32 %v1229, %v1122
          %v1231 = vmul.f32 %v1229, %v1123
          %1234 = vrot.lane.b32.xlu0 %v1230, 126
          %v1235 = vpop.permute.xlu0 %1234
          %1236 = vrot.lane.b32.xlu0 %v1231, 126
          %v1237 = vpop.permute.xlu0 %1236
          %v1240 = vadd.f32 %v1180, %v1235
          %v1241 = vadd.f32 %v1181, %v1237
          %s1242 = sadd.s32 %s220, 92
          %s1243 = sld [smem:[#allocation2 + %s1242]]
          %v1244 = vstv %s1243
          %v1245 = vmul.f32 %v1244, %v1122
          %v1246 = vmul.f32 %v1244, %v1123
          %1249 = vrot.lane.b32.xlu0 %v1245, 126
          %v1250 = vpop.permute.xlu0 %1249
          %1251 = vrot.lane.b32.xlu0 %v1246, 126
          %v1252 = vpop.permute.xlu0 %1251
          %v1255 = vadd.f32 %v1195, %v1250
          %v1256 = vadd.f32 %v1196, %v1252
          %s1257 = sadd.s32 %s220, 128
          %s1258 = sld [smem:[#allocation2 + %s1257]]
          %v1259 = vstv %s1258
          %v1260 = vmul.f32 %v1259, %v1122
          %v1261 = vmul.f32 %v1259, %v1123
          %1264 = vrot.lane.b32.xlu0 %v1260, 126
          %v1265 = vpop.permute.xlu0 %1264
          %1266 = vrot.lane.b32.xlu0 %v1261, 126
          %v1267 = vpop.permute.xlu0 %1266
          %v1270 = vadd.f32 %v1210, %v1265
          %v1271 = vadd.f32 %v1211, %v1267
          %v1272 = vld [vmem:[%s1121 + $0x1] sm:$0xff]
          %v1273 = vld [vmem:[%s1121 + $0x9] sm:$0xff]
          %s1274 = sadd.s32 %s220, 21
          %s1275 = sld [smem:[#allocation2 + %s1274]]
          %v1276 = vstv %s1275
          %v1277 = vmul.f32 %v1276, %v1272
          %v1278 = vmul.f32 %v1276, %v1273
          %v1279 = vadd.f32 %v1225, %v1277
          %v1280 = vadd.f32 %v1226, %v1278
          %s1281 = sadd.s32 %s220, 57
          %s1282 = sld [smem:[#allocation2 + %s1281]]
          %v1283 = vstv %s1282
          %v1284 = vmul.f32 %v1283, %v1272
          %v1285 = vmul.f32 %v1283, %v1273
          %v1286 = vadd.f32 %v1240, %v1284
          %v1287 = vadd.f32 %v1241, %v1285
          %s1288 = sadd.s32 %s220, 93
          %s1289 = sld [smem:[#allocation2 + %s1288]]
          %v1290 = vstv %s1289
          %v1291 = vmul.f32 %v1290, %v1272
          %v1292 = vmul.f32 %v1290, %v1273
          %v1293 = vadd.f32 %v1255, %v1291
          %v1294 = vadd.f32 %v1256, %v1292
          %s1295 = sadd.s32 %s220, 129
          %s1296 = sld [smem:[#allocation2 + %s1295]]
          %v1297 = vstv %s1296
          %v1298 = vmul.f32 %v1297, %v1272
          %v1299 = vmul.f32 %v1297, %v1273
          %v1300 = vadd.f32 %v1270, %v1298
          %v1301 = vadd.f32 %v1271, %v1299
          %s1302 = sadd.s32 %s220, 22
          %s1303 = sld [smem:[#allocation2 + %s1302]]
          %v1304 = vstv %s1303
          %v1305 = vmul.f32 %v1304, %v1272
          %v1306 = vmul.f32 %v1304, %v1273
          %1309 = vrot.lane.b32.xlu0 %v1305, 127
          %v1310 = vpop.permute.xlu0 %1309
          %1311 = vrot.lane.b32.xlu0 %v1306, 127
          %v1312 = vpop.permute.xlu0 %1311
          %v1315 = vadd.f32 %v1279, %v1310
          %v1316 = vadd.f32 %v1280, %v1312
          %s1317 = sadd.s32 %s220, 58
          %s1318 = sld [smem:[#allocation2 + %s1317]]
          %v1319 = vstv %s1318
          %v1320 = vmul.f32 %v1319, %v1272
          %v1321 = vmul.f32 %v1319, %v1273
          %1324 = vrot.lane.b32.xlu0 %v1320, 127
          %v1325 = vpop.permute.xlu0 %1324
          %1326 = vrot.lane.b32.xlu0 %v1321, 127
          %v1327 = vpop.permute.xlu0 %1326
          %v1330 = vadd.f32 %v1286, %v1325
          %v1331 = vadd.f32 %v1287, %v1327
          %s1332 = sadd.s32 %s220, 94
          %s1333 = sld [smem:[#allocation2 + %s1332]]
          %v1334 = vstv %s1333
          %v1335 = vmul.f32 %v1334, %v1272
          %v1336 = vmul.f32 %v1334, %v1273
          %1339 = vrot.lane.b32.xlu0 %v1335, 127
          %v1340 = vpop.permute.xlu0 %1339
          %1341 = vrot.lane.b32.xlu0 %v1336, 127
          %v1342 = vpop.permute.xlu0 %1341
          %v1345 = vadd.f32 %v1293, %v1340
          %v1346 = vadd.f32 %v1294, %v1342
          %s1347 = sadd.s32 %s220, 130
          %s1348 = sld [smem:[#allocation2 + %s1347]]
          %v1349 = vstv %s1348
          %v1350 = vmul.f32 %v1349, %v1272
          %v1351 = vmul.f32 %v1349, %v1273
          %1354 = vrot.lane.b32.xlu0 %v1350, 127
          %v1355 = vpop.permute.xlu0 %1354
          %1356 = vrot.lane.b32.xlu0 %v1351, 127
          %v1357 = vpop.permute.xlu0 %1356
          %v1360 = vadd.f32 %v1300, %v1355
          %v1361 = vadd.f32 %v1301, %v1357
          %s1362 = sadd.s32 %s220, 23
          %s1363 = sld [smem:[#allocation2 + %s1362]]
          %v1364 = vstv %s1363
          %v1365 = vmul.f32 %v1364, %v1272
          %v1366 = vmul.f32 %v1364, %v1273
          %1369 = vrot.lane.b32.xlu0 %v1365, 126
          %v1370 = vpop.permute.xlu0 %1369
          %1371 = vrot.lane.b32.xlu0 %v1366, 126
          %v1372 = vpop.permute.xlu0 %1371
          %v1375 = vadd.f32 %v1315, %v1370
          %v1376 = vadd.f32 %v1316, %v1372
          %s1377 = sadd.s32 %s220, 59
          %s1378 = sld [smem:[#allocation2 + %s1377]]
          %v1379 = vstv %s1378
          %v1380 = vmul.f32 %v1379, %v1272
          %v1381 = vmul.f32 %v1379, %v1273
          %1384 = vrot.lane.b32.xlu0 %v1380, 126
          %v1385 = vpop.permute.xlu0 %1384
          %1386 = vrot.lane.b32.xlu0 %v1381, 126
          %v1387 = vpop.permute.xlu0 %1386
          %v1390 = vadd.f32 %v1330, %v1385
          %v1391 = vadd.f32 %v1331, %v1387
          %s1392 = sadd.s32 %s220, 95
          %s1393 = sld [smem:[#allocation2 + %s1392]]
          %v1394 = vstv %s1393
          %v1395 = vmul.f32 %v1394, %v1272
          %v1396 = vmul.f32 %v1394, %v1273
          %1399 = vrot.lane.b32.xlu0 %v1395, 126
          %v1400 = vpop.permute.xlu0 %1399
          %1401 = vrot.lane.b32.xlu0 %v1396, 126
          %v1402 = vpop.permute.xlu0 %1401
          %v1405 = vadd.f32 %v1345, %v1400
          %v1406 = vadd.f32 %v1346, %v1402
          %s1407 = sadd.s32 %s220, 131
          %s1408 = sld [smem:[#allocation2 + %s1407]]
          %v1409 = vstv %s1408
          %v1410 = vmul.f32 %v1409, %v1272
          %v1411 = vmul.f32 %v1409, %v1273
          %1414 = vrot.lane.b32.xlu0 %v1410, 126
          %v1415 = vpop.permute.xlu0 %1414
          %1416 = vrot.lane.b32.xlu0 %v1411, 126
          %v1417 = vpop.permute.xlu0 %1416
          %v1420 = vadd.f32 %v1360, %v1415
          %v1421 = vadd.f32 %v1361, %v1417
          %v1422 = vld [vmem:[%s1121 + $0x2] sm:$0xff]
          %v1423 = vld [vmem:[%s1121 + $0xa] sm:$0xff]
          %s1424 = sadd.s32 %s220, 24
          %s1425 = sld [smem:[#allocation2 + %s1424]]
          %v1426 = vstv %s1425
          %v1427 = vmul.f32 %v1426, %v1422
          %v1428 = vmul.f32 %v1426, %v1423
          %v1429 = vadd.f32 %v1375, %v1427
          %v1430 = vadd.f32 %v1376, %v1428
          %s1431 = sadd.s32 %s220, 60
          %s1432 = sld [smem:[#allocation2 + %s1431]]
          %v1433 = vstv %s1432
          %v1434 = vmul.f32 %v1433, %v1422
          %v1435 = vmul.f32 %v1433, %v1423
          %v1436 = vadd.f32 %v1390, %v1434
          %v1437 = vadd.f32 %v1391, %v1435
          %s1438 = sadd.s32 %s220, 96
          %s1439 = sld [smem:[#allocation2 + %s1438]]
          %v1440 = vstv %s1439
          %v1441 = vmul.f32 %v1440, %v1422
          %v1442 = vmul.f32 %v1440, %v1423
          %v1443 = vadd.f32 %v1405, %v1441
          %v1444 = vadd.f32 %v1406, %v1442
          %s1445 = sadd.s32 %s220, 132
          %s1446 = sld [smem:[#allocation2 + %s1445]]
          %v1447 = vstv %s1446
          %v1448 = vmul.f32 %v1447, %v1422
          %v1449 = vmul.f32 %v1447, %v1423
          %v1450 = vadd.f32 %v1420, %v1448
          %v1451 = vadd.f32 %v1421, %v1449
          %s1452 = sadd.s32 %s220, 25
          %s1453 = sld [smem:[#allocation2 + %s1452]]
          %v1454 = vstv %s1453
          %v1455 = vmul.f32 %v1454, %v1422
          %v1456 = vmul.f32 %v1454, %v1423
          %1459 = vrot.lane.b32.xlu0 %v1455, 127
          %v1460 = vpop.permute.xlu0 %1459
          %1461 = vrot.lane.b32.xlu0 %v1456, 127
          %v1462 = vpop.permute.xlu0 %1461
          %v1465 = vadd.f32 %v1429, %v1460
          %v1466 = vadd.f32 %v1430, %v1462
          %s1467 = sadd.s32 %s220, 61
          %s1468 = sld [smem:[#allocation2 + %s1467]]
          %v1469 = vstv %s1468
          %v1470 = vmul.f32 %v1469, %v1422
          %v1471 = vmul.f32 %v1469, %v1423
          %1474 = vrot.lane.b32.xlu0 %v1470, 127
          %v1475 = vpop.permute.xlu0 %1474
          %1476 = vrot.lane.b32.xlu0 %v1471, 127
          %v1477 = vpop.permute.xlu0 %1476
          %v1480 = vadd.f32 %v1436, %v1475
          %v1481 = vadd.f32 %v1437, %v1477
          %s1482 = sadd.s32 %s220, 97
          %s1483 = sld [smem:[#allocation2 + %s1482]]
          %v1484 = vstv %s1483
          %v1485 = vmul.f32 %v1484, %v1422
          %v1486 = vmul.f32 %v1484, %v1423
          %1489 = vrot.lane.b32.xlu0 %v1485, 127
          %v1490 = vpop.permute.xlu0 %1489
          %1491 = vrot.lane.b32.xlu0 %v1486, 127
          %v1492 = vpop.permute.xlu0 %1491
          %v1495 = vadd.f32 %v1443, %v1490
          %v1496 = vadd.f32 %v1444, %v1492
          %s1497 = sadd.s32 %s220, 133
          %s1498 = sld [smem:[#allocation2 + %s1497]]
          %v1499 = vstv %s1498
          %v1500 = vmul.f32 %v1499, %v1422
          %v1501 = vmul.f32 %v1499, %v1423
          %1504 = vrot.lane.b32.xlu0 %v1500, 127
          %v1505 = vpop.permute.xlu0 %1504
          %1506 = vrot.lane.b32.xlu0 %v1501, 127
          %v1507 = vpop.permute.xlu0 %1506
          %v1510 = vadd.f32 %v1450, %v1505
          %v1511 = vadd.f32 %v1451, %v1507
          %s1512 = sadd.s32 %s220, 26
          %s1513 = sld [smem:[#allocation2 + %s1512]]
          %v1514 = vstv %s1513
          %v1515 = vmul.f32 %v1514, %v1422
          %v1516 = vmul.f32 %v1514, %v1423
          %1519 = vrot.lane.b32.xlu0 %v1515, 126
          %v1520 = vpop.permute.xlu0 %1519
          %1521 = vrot.lane.b32.xlu0 %v1516, 126
          %v1522 = vpop.permute.xlu0 %1521
          %v1525 = vadd.f32 %v1465, %v1520
          %v1526 = vadd.f32 %v1466, %v1522
          %s1527 = sadd.s32 %s220, 62
          %s1528 = sld [smem:[#allocation2 + %s1527]]
          %v1529 = vstv %s1528
          %v1530 = vmul.f32 %v1529, %v1422
          %v1531 = vmul.f32 %v1529, %v1423
          %1534 = vrot.lane.b32.xlu0 %v1530, 126
          %v1535 = vpop.permute.xlu0 %1534
          %1536 = vrot.lane.b32.xlu0 %v1531, 126
          %v1537 = vpop.permute.xlu0 %1536
          %v1540 = vadd.f32 %v1480, %v1535
          %v1541 = vadd.f32 %v1481, %v1537
          %s1542 = sadd.s32 %s220, 98
          %s1543 = sld [smem:[#allocation2 + %s1542]]
          %v1544 = vstv %s1543
          %v1545 = vmul.f32 %v1544, %v1422
          %v1546 = vmul.f32 %v1544, %v1423
          %1549 = vrot.lane.b32.xlu0 %v1545, 126
          %v1550 = vpop.permute.xlu0 %1549
          %1551 = vrot.lane.b32.xlu0 %v1546, 126
          %v1552 = vpop.permute.xlu0 %1551
          %v1555 = vadd.f32 %v1495, %v1550
          %v1556 = vadd.f32 %v1496, %v1552
          %s1557 = sadd.s32 %s220, 134
          %s1558 = sld [smem:[#allocation2 + %s1557]]
          %v1559 = vstv %s1558
          %v1560 = vmul.f32 %v1559, %v1422
          %v1561 = vmul.f32 %v1559, %v1423
          %1564 = vrot.lane.b32.xlu0 %v1560, 126
          %v1565 = vpop.permute.xlu0 %1564
          %1566 = vrot.lane.b32.xlu0 %v1561, 126
          %v1567 = vpop.permute.xlu0 %1566
          %v1570 = vadd.f32 %v1510, %v1565
          %v1571 = vadd.f32 %v1511, %v1567
          %s1572 = scalar_lea.vmem %s209, 72
          %v1573 = vld [vmem:[%s1572] sm:$0xff]
          %v1574 = vld [vmem:[%s1572 + $0x8] sm:$0xff]
          %s1575 = sadd.s32 %s220, 27
          %s1576 = sld [smem:[#allocation2 + %s1575]]
          %v1577 = vstv %s1576
          %v1578 = vmul.f32 %v1577, %v1573
          %v1579 = vmul.f32 %v1577, %v1574
          %v1580 = vadd.f32 %v1525, %v1578
          %v1581 = vadd.f32 %v1526, %v1579
          %s1582 = sadd.s32 %s220, 63
          %s1583 = sld [smem:[#allocation2 + %s1582]]
          %v1584 = vstv %s1583
          %v1585 = vmul.f32 %v1584, %v1573
          %v1586 = vmul.f32 %v1584, %v1574
          %v1587 = vadd.f32 %v1540, %v1585
          %v1588 = vadd.f32 %v1541, %v1586
          %s1589 = sadd.s32 %s220, 99
          %s1590 = sld [smem:[#allocation2 + %s1589]]
          %v1591 = vstv %s1590
          %v1592 = vmul.f32 %v1591, %v1573
          %v1593 = vmul.f32 %v1591, %v1574
          %v1594 = vadd.f32 %v1555, %v1592
          %v1595 = vadd.f32 %v1556, %v1593
          %s1596 = sadd.s32 %s220, 135
          %s1597 = sld [smem:[#allocation2 + %s1596]]
          %v1598 = vstv %s1597
          %v1599 = vmul.f32 %v1598, %v1573
          %v1600 = vmul.f32 %v1598, %v1574
          %v1601 = vadd.f32 %v1570, %v1599
          %v1602 = vadd.f32 %v1571, %v1600
          %s1603 = sadd.s32 %s220, 28
          %s1604 = sld [smem:[#allocation2 + %s1603]]
          %v1605 = vstv %s1604
          %v1606 = vmul.f32 %v1605, %v1573
          %v1607 = vmul.f32 %v1605, %v1574
          %1610 = vrot.lane.b32.xlu0 %v1606, 127
          %v1611 = vpop.permute.xlu0 %1610
          %1612 = vrot.lane.b32.xlu0 %v1607, 127
          %v1613 = vpop.permute.xlu0 %1612
          %v1616 = vadd.f32 %v1580, %v1611
          %v1617 = vadd.f32 %v1581, %v1613
          %s1618 = sadd.s32 %s220, 64
          %s1619 = sld [smem:[#allocation2 + %s1618]]
          %v1620 = vstv %s1619
          %v1621 = vmul.f32 %v1620, %v1573
          %v1622 = vmul.f32 %v1620, %v1574
          %1625 = vrot.lane.b32.xlu0 %v1621, 127
          %v1626 = vpop.permute.xlu0 %1625
          %1627 = vrot.lane.b32.xlu0 %v1622, 127
          %v1628 = vpop.permute.xlu0 %1627
          %v1631 = vadd.f32 %v1587, %v1626
          %v1632 = vadd.f32 %v1588, %v1628
          %s1633 = sadd.s32 %s220, 100
          %s1634 = sld [smem:[#allocation2 + %s1633]]
          %v1635 = vstv %s1634
          %v1636 = vmul.f32 %v1635, %v1573
          %v1637 = vmul.f32 %v1635, %v1574
          %1640 = vrot.lane.b32.xlu0 %v1636, 127
          %v1641 = vpop.permute.xlu0 %1640
          %1642 = vrot.lane.b32.xlu0 %v1637, 127
          %v1643 = vpop.permute.xlu0 %1642
          %v1646 = vadd.f32 %v1594, %v1641
          %v1647 = vadd.f32 %v1595, %v1643
          %s1648 = sadd.s32 %s220, 136
          %s1649 = sld [smem:[#allocation2 + %s1648]]
          %v1650 = vstv %s1649
          %v1651 = vmul.f32 %v1650, %v1573
          %v1652 = vmul.f32 %v1650, %v1574
          %1655 = vrot.lane.b32.xlu0 %v1651, 127
          %v1656 = vpop.permute.xlu0 %1655
          %1657 = vrot.lane.b32.xlu0 %v1652, 127
          %v1658 = vpop.permute.xlu0 %1657
          %v1661 = vadd.f32 %v1601, %v1656
          %v1662 = vadd.f32 %v1602, %v1658
          %s1663 = sadd.s32 %s220, 29
          %s1664 = sld [smem:[#allocation2 + %s1663]]
          %v1665 = vstv %s1664
          %v1666 = vmul.f32 %v1665, %v1573
          %v1667 = vmul.f32 %v1665, %v1574
          %1670 = vrot.lane.b32.xlu0 %v1666, 126
          %v1671 = vpop.permute.xlu0 %1670
          %1672 = vrot.lane.b32.xlu0 %v1667, 126
          %v1673 = vpop.permute.xlu0 %1672
          %v1676 = vadd.f32 %v1616, %v1671
          %v1677 = vadd.f32 %v1617, %v1673
          %s1678 = sadd.s32 %s220, 65
          %s1679 = sld [smem:[#allocation2 + %s1678]]
          %v1680 = vstv %s1679
          %v1681 = vmul.f32 %v1680, %v1573
          %v1682 = vmul.f32 %v1680, %v1574
          %1685 = vrot.lane.b32.xlu0 %v1681, 126
          %v1686 = vpop.permute.xlu0 %1685
          %1687 = vrot.lane.b32.xlu0 %v1682, 126
          %v1688 = vpop.permute.xlu0 %1687
          %v1691 = vadd.f32 %v1631, %v1686
          %v1692 = vadd.f32 %v1632, %v1688
          %s1693 = sadd.s32 %s220, 101
          %s1694 = sld [smem:[#allocation2 + %s1693]]
          %v1695 = vstv %s1694
          %v1696 = vmul.f32 %v1695, %v1573
          %v1697 = vmul.f32 %v1695, %v1574
          %1700 = vrot.lane.b32.xlu0 %v1696, 126
          %v1701 = vpop.permute.xlu0 %1700
          %1702 = vrot.lane.b32.xlu0 %v1697, 126
          %v1703 = vpop.permute.xlu0 %1702
          %v1706 = vadd.f32 %v1646, %v1701
          %v1707 = vadd.f32 %v1647, %v1703
          %s1708 = sadd.s32 %s220, 137
          %s1709 = sld [smem:[#allocation2 + %s1708]]
          %v1710 = vstv %s1709
          %v1711 = vmul.f32 %v1710, %v1573
          %v1712 = vmul.f32 %v1710, %v1574
          %1715 = vrot.lane.b32.xlu0 %v1711, 126
          %v1716 = vpop.permute.xlu0 %1715
          %1717 = vrot.lane.b32.xlu0 %v1712, 126
          %v1718 = vpop.permute.xlu0 %1717
          %v1721 = vadd.f32 %v1661, %v1716
          %v1722 = vadd.f32 %v1662, %v1718
          %v1723 = vld [vmem:[%s1572 + $0x1] sm:$0xff]
          %v1724 = vld [vmem:[%s1572 + $0x9] sm:$0xff]
          %s1725 = sadd.s32 %s220, 30
          %s1726 = sld [smem:[#allocation2 + %s1725]]
          %v1727 = vstv %s1726
          %v1728 = vmul.f32 %v1727, %v1723
          %v1729 = vmul.f32 %v1727, %v1724
          %v1730 = vadd.f32 %v1676, %v1728
          %v1731 = vadd.f32 %v1677, %v1729
          %s1732 = sadd.s32 %s220, 66
          %s1733 = sld [smem:[#allocation2 + %s1732]]
          %v1734 = vstv %s1733
          %v1735 = vmul.f32 %v1734, %v1723
          %v1736 = vmul.f32 %v1734, %v1724
          %v1737 = vadd.f32 %v1691, %v1735
          %v1738 = vadd.f32 %v1692, %v1736
          %s1739 = sadd.s32 %s220, 102
          %s1740 = sld [smem:[#allocation2 + %s1739]]
          %v1741 = vstv %s1740
          %v1742 = vmul.f32 %v1741, %v1723
          %v1743 = vmul.f32 %v1741, %v1724
          %v1744 = vadd.f32 %v1706, %v1742
          %v1745 = vadd.f32 %v1707, %v1743
          %s1746 = sadd.s32 %s220, 138
          %s1747 = sld [smem:[#allocation2 + %s1746]]
          %v1748 = vstv %s1747
          %v1749 = vmul.f32 %v1748, %v1723
          %v1750 = vmul.f32 %v1748, %v1724
          %v1751 = vadd.f32 %v1721, %v1749
          %v1752 = vadd.f32 %v1722, %v1750
          %s1753 = sadd.s32 %s220, 31
          %s1754 = sld [smem:[#allocation2 + %s1753]]
          %v1755 = vstv %s1754
          %v1756 = vmul.f32 %v1755, %v1723
          %v1757 = vmul.f32 %v1755, %v1724
          %1760 = vrot.lane.b32.xlu0 %v1756, 127
          %v1761 = vpop.permute.xlu0 %1760
          %1762 = vrot.lane.b32.xlu0 %v1757, 127
          %v1763 = vpop.permute.xlu0 %1762
          %v1766 = vadd.f32 %v1730, %v1761
          %v1767 = vadd.f32 %v1731, %v1763
          %s1768 = sadd.s32 %s220, 67
          %s1769 = sld [smem:[#allocation2 + %s1768]]
          %v1770 = vstv %s1769
          %v1771 = vmul.f32 %v1770, %v1723
          %v1772 = vmul.f32 %v1770, %v1724
          %1775 = vrot.lane.b32.xlu0 %v1771, 127
          %v1776 = vpop.permute.xlu0 %1775
          %1777 = vrot.lane.b32.xlu0 %v1772, 127
          %v1778 = vpop.permute.xlu0 %1777
          %v1781 = vadd.f32 %v1737, %v1776
          %v1782 = vadd.f32 %v1738, %v1778
          %s1783 = sadd.s32 %s220, 103
          %s1784 = sld [smem:[#allocation2 + %s1783]]
          %v1785 = vstv %s1784
          %v1786 = vmul.f32 %v1785, %v1723
          %v1787 = vmul.f32 %v1785, %v1724
          %1790 = vrot.lane.b32.xlu0 %v1786, 127
          %v1791 = vpop.permute.xlu0 %1790
          %1792 = vrot.lane.b32.xlu0 %v1787, 127
          %v1793 = vpop.permute.xlu0 %1792
          %v1796 = vadd.f32 %v1744, %v1791
          %v1797 = vadd.f32 %v1745, %v1793
          %s1798 = sadd.s32 %s220, 139
          %s1799 = sld [smem:[#allocation2 + %s1798]]
          %v1800 = vstv %s1799
          %v1801 = vmul.f32 %v1800, %v1723
          %v1802 = vmul.f32 %v1800, %v1724
          %1805 = vrot.lane.b32.xlu0 %v1801, 127
          %v1806 = vpop.permute.xlu0 %1805
          %1807 = vrot.lane.b32.xlu0 %v1802, 127
          %v1808 = vpop.permute.xlu0 %1807
          %v1811 = vadd.f32 %v1751, %v1806
          %v1812 = vadd.f32 %v1752, %v1808
          %s1813 = sadd.s32 %s220, 32
          %s1814 = sld [smem:[#allocation2 + %s1813]]
          %v1815 = vstv %s1814
          %v1816 = vmul.f32 %v1815, %v1723
          %v1817 = vmul.f32 %v1815, %v1724
          %1820 = vrot.lane.b32.xlu0 %v1816, 126
          %v1821 = vpop.permute.xlu0 %1820
          %1822 = vrot.lane.b32.xlu0 %v1817, 126
          %v1823 = vpop.permute.xlu0 %1822
          %v1826 = vadd.f32 %v1766, %v1821
          %v1827 = vadd.f32 %v1767, %v1823
          %s1828 = sadd.s32 %s220, 68
          %s1829 = sld [smem:[#allocation2 + %s1828]]
          %v1830 = vstv %s1829
          %v1831 = vmul.f32 %v1830, %v1723
          %v1832 = vmul.f32 %v1830, %v1724
          %1835 = vrot.lane.b32.xlu0 %v1831, 126
          %v1836 = vpop.permute.xlu0 %1835
          %1837 = vrot.lane.b32.xlu0 %v1832, 126
          %v1838 = vpop.permute.xlu0 %1837
          %v1841 = vadd.f32 %v1781, %v1836
          %v1842 = vadd.f32 %v1782, %v1838
          %s1843 = sadd.s32 %s220, 104
          %s1844 = sld [smem:[#allocation2 + %s1843]]
          %v1845 = vstv %s1844
          %v1846 = vmul.f32 %v1845, %v1723
          %v1847 = vmul.f32 %v1845, %v1724
          %1850 = vrot.lane.b32.xlu0 %v1846, 126
          %v1851 = vpop.permute.xlu0 %1850
          %1852 = vrot.lane.b32.xlu0 %v1847, 126
          %v1853 = vpop.permute.xlu0 %1852
          %v1856 = vadd.f32 %v1796, %v1851
          %v1857 = vadd.f32 %v1797, %v1853
          %s1858 = sadd.s32 %s220, 140
          %s1859 = sld [smem:[#allocation2 + %s1858]]
          %v1860 = vstv %s1859
          %v1861 = vmul.f32 %v1860, %v1723
          %v1862 = vmul.f32 %v1860, %v1724
          %1865 = vrot.lane.b32.xlu0 %v1861, 126
          %v1866 = vpop.permute.xlu0 %1865
          %1867 = vrot.lane.b32.xlu0 %v1862, 126
          %v1868 = vpop.permute.xlu0 %1867
          %v1871 = vadd.f32 %v1811, %v1866
          %v1872 = vadd.f32 %v1812, %v1868
          %v1873 = vld [vmem:[%s1572 + $0x2] sm:$0xff]
          %v1874 = vld [vmem:[%s1572 + $0xa] sm:$0xff]
          %s1875 = sadd.s32 %s220, 33
          %s1876 = sld [smem:[#allocation2 + %s1875]]
          %v1877 = vstv %s1876
          %v1878 = vmul.f32 %v1877, %v1873
          %v1879 = vmul.f32 %v1877, %v1874
          %v1880 = vadd.f32 %v1826, %v1878
          %v1881 = vadd.f32 %v1827, %v1879
          %s1882 = sadd.s32 %s220, 69
          %s1883 = sld [smem:[#allocation2 + %s1882]]
          %v1884 = vstv %s1883
          %v1885 = vmul.f32 %v1884, %v1873
          %v1886 = vmul.f32 %v1884, %v1874
          %v1887 = vadd.f32 %v1841, %v1885
          %v1888 = vadd.f32 %v1842, %v1886
          %s1889 = sadd.s32 %s220, 105
          %s1890 = sld [smem:[#allocation2 + %s1889]]
          %v1891 = vstv %s1890
          %v1892 = vmul.f32 %v1891, %v1873
          %v1893 = vmul.f32 %v1891, %v1874
          %v1894 = vadd.f32 %v1856, %v1892
          %v1895 = vadd.f32 %v1857, %v1893
          %s1896 = sadd.s32 %s220, 141
          %s1897 = sld [smem:[#allocation2 + %s1896]]
          %v1898 = vstv %s1897
          %v1899 = vmul.f32 %v1898, %v1873
          %v1900 = vmul.f32 %v1898, %v1874
          %v1901 = vadd.f32 %v1871, %v1899
          %v1902 = vadd.f32 %v1872, %v1900
          %s1903 = sadd.s32 %s220, 34
          %s1904 = sld [smem:[#allocation2 + %s1903]]
          %v1905 = vstv %s1904
          %v1906 = vmul.f32 %v1905, %v1873
          %v1907 = vmul.f32 %v1905, %v1874
          %1910 = vrot.lane.b32.xlu0 %v1906, 127
          %v1911 = vpop.permute.xlu0 %1910
          %1912 = vrot.lane.b32.xlu0 %v1907, 127
          %v1913 = vpop.permute.xlu0 %1912
          %v1916 = vadd.f32 %v1880, %v1911
          %v1917 = vadd.f32 %v1881, %v1913
          %s1918 = sadd.s32 %s220, 70
          %s1919 = sld [smem:[#allocation2 + %s1918]]
          %v1920 = vstv %s1919
          %v1921 = vmul.f32 %v1920, %v1873
          %v1922 = vmul.f32 %v1920, %v1874
          %1925 = vrot.lane.b32.xlu0 %v1921, 127
          %v1926 = vpop.permute.xlu0 %1925
          %1927 = vrot.lane.b32.xlu0 %v1922, 127
          %v1928 = vpop.permute.xlu0 %1927
          %v1931 = vadd.f32 %v1887, %v1926
          %v1932 = vadd.f32 %v1888, %v1928
          %s1933 = sadd.s32 %s220, 106
          %s1934 = sld [smem:[#allocation2 + %s1933]]
          %v1935 = vstv %s1934
          %v1936 = vmul.f32 %v1935, %v1873
          %v1937 = vmul.f32 %v1935, %v1874
          %1940 = vrot.lane.b32.xlu0 %v1936, 127
          %v1941 = vpop.permute.xlu0 %1940
          %1942 = vrot.lane.b32.xlu0 %v1937, 127
          %v1943 = vpop.permute.xlu0 %1942
          %v1946 = vadd.f32 %v1894, %v1941
          %v1947 = vadd.f32 %v1895, %v1943
          %s1948 = sadd.s32 %s220, 142
          %s1949 = sld [smem:[#allocation2 + %s1948]]
          %v1950 = vstv %s1949
          %v1951 = vmul.f32 %v1950, %v1873
          %v1952 = vmul.f32 %v1950, %v1874
          %1955 = vrot.lane.b32.xlu0 %v1951, 127
          %v1956 = vpop.permute.xlu0 %1955
          %1957 = vrot.lane.b32.xlu0 %v1952, 127
          %v1958 = vpop.permute.xlu0 %1957
          %v1961 = vadd.f32 %v1901, %v1956
          %v1962 = vadd.f32 %v1902, %v1958
          %s1963 = sadd.s32 %s220, 35
          %s1964 = sld [smem:[#allocation2 + %s1963]]
          %v1965 = vstv %s1964
          %v1966 = vmul.f32 %v1965, %v1873
          %v1967 = vmul.f32 %v1965, %v1874
          %1970 = vrot.lane.b32.xlu0 %v1966, 126
          %v1971 = vpop.permute.xlu0 %1970
          %1972 = vrot.lane.b32.xlu0 %v1967, 126
          %v1973 = vpop.permute.xlu0 %1972
          %v1976 = vadd.f32 %v1916, %v1971
          %v1977 = vadd.f32 %v1917, %v1973
          %s1978 = sadd.s32 %s220, 71
          %s1979 = sld [smem:[#allocation2 + %s1978]]
          %v1980 = vstv %s1979
          %v1981 = vmul.f32 %v1980, %v1873
          %v1982 = vmul.f32 %v1980, %v1874
          %1985 = vrot.lane.b32.xlu0 %v1981, 126
          %v1986 = vpop.permute.xlu0 %1985
          %1987 = vrot.lane.b32.xlu0 %v1982, 126
          %v1988 = vpop.permute.xlu0 %1987
          %v1991 = vadd.f32 %v1931, %v1986
          %v1992 = vadd.f32 %v1932, %v1988
          %s1993 = sadd.s32 %s220, 107
          %s1994 = sld [smem:[#allocation2 + %s1993]]
          %v1995 = vstv %s1994
          %v1996 = vmul.f32 %v1995, %v1873
          %v1997 = vmul.f32 %v1995, %v1874
          %2000 = vrot.lane.b32.xlu0 %v1996, 126
          %v2001 = vpop.permute.xlu0 %2000
          %2002 = vrot.lane.b32.xlu0 %v1997, 126
          %v2003 = vpop.permute.xlu0 %2002
          %v2006 = vadd.f32 %v1946, %v2001
          %v2007 = vadd.f32 %v1947, %v2003
          %s2008 = sadd.s32 %s220, 143
          %s2009 = sld [smem:[#allocation2 + %s2008]]
          %v2010 = vstv %s2009
          %v2011 = vmul.f32 %v2010, %v1873
          %v2012 = vmul.f32 %v2010, %v1874
          %2015 = vrot.lane.b32.xlu0 %v2011, 126
          %v2016 = vpop.permute.xlu0 %2015
          %2017 = vrot.lane.b32.xlu0 %v2012, 126
          %v2018 = vpop.permute.xlu0 %2017
          %v2021 = vadd.f32 %v1961, %v2016
          %v2022 = vadd.f32 %v1962, %v2018
          %vm2023 = vcmask 130048
          %v2025 = vsel %vm2023, %v1991, 0
          %v2028 = vsel %vm2023, %v1992, 0
          %2030 = vmatpush.msra.mxu0 0.0
          %2031 = vmatpush.msra.mxu0 0.0
          %2032 = vmatpush.msra.mxu0 0.0
          %2033 = vmatpush.msra.mxu0 0.0
          %2034 = vmatpush.msra.mxu0 0.0
          %2035 = vmatpush.msra.mxu0 0.0
          %2036 = vmatpush.msra.mxu0 0.0
          %2037 = vmatpush.msra.mxu0 0.0
          %2038 = vmatpush.msra.mxu0 0.0
          %2039 = vmatpush.msra.mxu0 0.0
          %2040 = vmatpush.msra.mxu0 0.0
          %2041 = vmatpush.msra.mxu0 0.0
          %2042 = vmatpush.msra.mxu0 0.0
          %2043 = vmatpush.msra.mxu0 0.0
          %v2044 = vand.u32 %v213, 4294901760
          %2045 = vmatpush.msra.mxu0 %v2044
          %v2046 = vand.u32 %v212, 4294901760
          %2047 = vmatpush.msra.mxu0 %v2046
          %v2048 = vand.u32 %v2025, 4294901760
          %v2049 = vsub.f32 %v2025, %v2048
          %v2050 = vand.u32 %v2049, 4294901760
          %v2051 = vsub.f32 %v2049, %v2050
          %v2052 = vand.u32 %v2051, 4294901760
          %2053 = vmatmul.f32.gmra.mxu0 %v2052
          %v2054 = vpop.f32.mrf.mxu0
          %v2055 = vadd.f32 0.0, %v2054
          %v2056 = vand.u32 %v2028, 4294901760
          %v2057 = vsub.f32 %v2028, %v2056
          %v2058 = vand.u32 %v2057, 4294901760
          %v2059 = vsub.f32 %v2057, %v2058
          %v2060 = vand.u32 %v2059, 4294901760
          %2061 = vmatmul.f32.gmra.mxu0 %v2060
          %v2062 = vpop.f32.mrf.mxu0
          %v2063 = vadd.f32 0.0, %v2062
          %2064 = vdwg.mxu0
          %2065 = vmatpush.msra.mxu0 0.0
          %2066 = vmatpush.msra.mxu0 0.0
          %2067 = vmatpush.msra.mxu0 0.0
          %2068 = vmatpush.msra.mxu0 0.0
          %2069 = vmatpush.msra.mxu0 0.0
          %2070 = vmatpush.msra.mxu0 0.0
          %2071 = vmatpush.msra.mxu0 0.0
          %2072 = vmatpush.msra.mxu0 0.0
          %2073 = vmatpush.msra.mxu0 0.0
          %2074 = vmatpush.msra.mxu0 0.0
          %2075 = vmatpush.msra.mxu0 0.0
          %2076 = vmatpush.msra.mxu0 0.0
          %2077 = vmatpush.msra.mxu0 0.0
          %2078 = vmatpush.msra.mxu0 0.0
          %v2079 = vand.u32 %v213, 4294901760
          %v2080 = vsub.f32 %v213, %v2079
          %v2081 = vand.u32 %v2080, 4294901760
          %v2082 = vsub.f32 %v2080, %v2081
          %v2083 = vand.u32 %v2082, 4294901760
          %2084 = vmatpush.msra.mxu0 %v2083
          %v2085 = vand.u32 %v212, 4294901760
          %v2086 = vsub.f32 %v212, %v2085
          %v2087 = vand.u32 %v2086, 4294901760
          %v2088 = vsub.f32 %v2086, %v2087
          %v2089 = vand.u32 %v2088, 4294901760
          %2090 = vmatpush.msra.mxu0 %v2089
          %v2091 = vand.u32 %v2025, 4294901760
          %2092 = vmatmul.f32.gmra.mxu0 %v2091
          %v2093 = vpop.f32.mrf.mxu0
          %v2094 = vadd.f32 %v2055, %v2093
          %v2095 = vand.u32 %v2028, 4294901760
          %2096 = vmatmul.f32.gmra.mxu0 %v2095
          %v2097 = vpop.f32.mrf.mxu0
          %v2098 = vadd.f32 %v2063, %v2097
          %2099 = vdwg.mxu0
          %2100 = vmatpush.msra.mxu0 0.0
          %2101 = vmatpush.msra.mxu0 0.0
          %2102 = vmatpush.msra.mxu0 0.0
          %2103 = vmatpush.msra.mxu0 0.0
          %2104 = vmatpush.msra.mxu0 0.0
          %2105 = vmatpush.msra.mxu0 0.0
          %2106 = vmatpush.msra.mxu0 0.0
          %2107 = vmatpush.msra.mxu0 0.0
          %2108 = vmatpush.msra.mxu0 0.0
          %2109 = vmatpush.msra.mxu0 0.0
          %2110 = vmatpush.msra.mxu0 0.0
          %2111 = vmatpush.msra.mxu0 0.0
          %2112 = vmatpush.msra.mxu0 0.0
          %2113 = vmatpush.msra.mxu0 0.0
          %v2114 = vand.u32 %v213, 4294901760
          %v2115 = vsub.f32 %v213, %v2114
          %2116 = vmatpush.msra.mxu0 %v2115
          %v2117 = vand.u32 %v212, 4294901760
          %v2118 = vsub.f32 %v212, %v2117
          %2119 = vmatpush.msra.mxu0 %v2118
          %v2120 = vand.u32 %v2025, 4294901760
          %v2121 = vsub.f32 %v2025, %v2120
          %2122 = vmatmul.f32.gmra.mxu0 %v2121
          %v2123 = vpop.f32.mrf.mxu0
          %v2124 = vadd.f32 %v2094, %v2123
          %v2125 = vand.u32 %v2028, 4294901760
          %v2126 = vsub.f32 %v2028, %v2125
          %2127 = vmatmul.f32.gmra.mxu0 %v2126
          %v2128 = vpop.f32.mrf.mxu0
          %v2129 = vadd.f32 %v2098, %v2128
          %2130 = vdwg.mxu0
          %2131 = vmatpush.msra.mxu0 0.0
          %2132 = vmatpush.msra.mxu0 0.0
          %2133 = vmatpush.msra.mxu0 0.0
          %2134 = vmatpush.msra.mxu0 0.0
          %2135 = vmatpush.msra.mxu0 0.0
          %2136 = vmatpush.msra.mxu0 0.0
          %2137 = vmatpush.msra.mxu0 0.0
          %2138 = vmatpush.msra.mxu0 0.0
          %2139 = vmatpush.msra.mxu0 0.0
          %2140 = vmatpush.msra.mxu0 0.0
          %2141 = vmatpush.msra.mxu0 0.0
          %2142 = vmatpush.msra.mxu0 0.0
          %2143 = vmatpush.msra.mxu0 0.0
          %2144 = vmatpush.msra.mxu0 0.0
          %v2145 = vand.u32 %v213, 4294901760
          %2146 = vmatpush.msra.mxu0 %v2145
          %v2147 = vand.u32 %v212, 4294901760
          %2148 = vmatpush.msra.mxu0 %v2147
          %v2149 = vand.u32 %v2025, 4294901760
          %v2150 = vsub.f32 %v2025, %v2149
          %v2151 = vand.u32 %v2150, 4294901760
          %2152 = vmatmul.f32.gmra.mxu0 %v2151
          %v2153 = vpop.f32.mrf.mxu0
          %v2154 = vadd.f32 %v2124, %v2153
          %v2155 = vand.u32 %v2028, 4294901760
          %v2156 = vsub.f32 %v2028, %v2155
          %v2157 = vand.u32 %v2156, 4294901760
          %2158 = vmatmul.f32.gmra.mxu0 %v2157
          %v2159 = vpop.f32.mrf.mxu0
          %v2160 = vadd.f32 %v2129, %v2159
          %2161 = vdwg.mxu0
          %2162 = vmatpush.msra.mxu0 0.0
          %2163 = vmatpush.msra.mxu0 0.0
          %2164 = vmatpush.msra.mxu0 0.0
          %2165 = vmatpush.msra.mxu0 0.0
          %2166 = vmatpush.msra.mxu0 0.0
          %2167 = vmatpush.msra.mxu0 0.0
          %2168 = vmatpush.msra.mxu0 0.0
          %2169 = vmatpush.msra.mxu0 0.0
          %2170 = vmatpush.msra.mxu0 0.0
          %2171 = vmatpush.msra.mxu0 0.0
          %2172 = vmatpush.msra.mxu0 0.0
          %2173 = vmatpush.msra.mxu0 0.0
          %2174 = vmatpush.msra.mxu0 0.0
          %2175 = vmatpush.msra.mxu0 0.0
          %v2176 = vand.u32 %v213, 4294901760
          %v2177 = vsub.f32 %v213, %v2176
          %v2178 = vand.u32 %v2177, 4294901760
          %2179 = vmatpush.msra.mxu0 %v2178
          %v2180 = vand.u32 %v212, 4294901760
          %v2181 = vsub.f32 %v212, %v2180
          %v2182 = vand.u32 %v2181, 4294901760
          %2183 = vmatpush.msra.mxu0 %v2182
          %v2184 = vand.u32 %v2025, 4294901760
          %2185 = vmatmul.f32.gmra.mxu0 %v2184
          %v2186 = vpop.f32.mrf.mxu0
          %v2187 = vadd.f32 %v2154, %v2186
          %v2188 = vand.u32 %v2028, 4294901760
          %2189 = vmatmul.f32.gmra.mxu0 %v2188
          %v2190 = vpop.f32.mrf.mxu0
          %v2191 = vadd.f32 %v2160, %v2190
          %2192 = vdwg.mxu0
          %2193 = vmatpush.msra.mxu0 0.0
          %2194 = vmatpush.msra.mxu0 0.0
          %2195 = vmatpush.msra.mxu0 0.0
          %2196 = vmatpush.msra.mxu0 0.0
          %2197 = vmatpush.msra.mxu0 0.0
          %2198 = vmatpush.msra.mxu0 0.0
          %2199 = vmatpush.msra.mxu0 0.0
          %2200 = vmatpush.msra.mxu0 0.0
          %2201 = vmatpush.msra.mxu0 0.0
          %2202 = vmatpush.msra.mxu0 0.0
          %2203 = vmatpush.msra.mxu0 0.0
          %2204 = vmatpush.msra.mxu0 0.0
          %2205 = vmatpush.msra.mxu0 0.0
          %2206 = vmatpush.msra.mxu0 0.0
          %v2207 = vand.u32 %v213, 4294901760
          %2208 = vmatpush.msra.mxu0 %v2207
          %v2209 = vand.u32 %v212, 4294901760
          %2210 = vmatpush.msra.mxu0 %v2209
          %v2211 = vand.u32 %v2025, 4294901760
          %2212 = vmatmul.f32.gmra.mxu0 %v2211
          %v2213 = vpop.f32.mrf.mxu0
          %v2214 = vadd.f32 %v2187, %v2213
          %v2215 = vand.u32 %v2028, 4294901760
          %2216 = vmatmul.f32.gmra.mxu0 %v2215
          %v2217 = vpop.f32.mrf.mxu0
          %v2218 = vadd.f32 %v2191, %v2217
          %2219 = vdwg.mxu0
          %v2221 = vsel %vm2023, %v1976, 0
          %v2224 = vsel %vm2023, %v1977, 0
          %2226 = vmatpush.msra.mxu0 0.0
          %2227 = vmatpush.msra.mxu0 0.0
          %2228 = vmatpush.msra.mxu0 0.0
          %2229 = vmatpush.msra.mxu0 0.0
          %2230 = vmatpush.msra.mxu0 0.0
          %2231 = vmatpush.msra.mxu0 0.0
          %2232 = vmatpush.msra.mxu0 0.0
          %2233 = vmatpush.msra.mxu0 0.0
          %2234 = vmatpush.msra.mxu0 0.0
          %2235 = vmatpush.msra.mxu0 0.0
          %2236 = vmatpush.msra.mxu0 0.0
          %2237 = vmatpush.msra.mxu0 0.0
          %2238 = vmatpush.msra.mxu0 0.0
          %2239 = vmatpush.msra.mxu0 0.0
          %v2240 = vand.u32 %v211, 4294901760
          %2241 = vmatpush.msra.mxu0 %v2240
          %v2242 = vand.u32 %v210, 4294901760
          %2243 = vmatpush.msra.mxu0 %v2242
          %v2244 = vand.u32 %v2221, 4294901760
          %v2245 = vsub.f32 %v2221, %v2244
          %v2246 = vand.u32 %v2245, 4294901760
          %v2247 = vsub.f32 %v2245, %v2246
          %v2248 = vand.u32 %v2247, 4294901760
          %2249 = vmatmul.f32.gmra.mxu0 %v2248
          %v2250 = vpop.f32.mrf.mxu0
          %v2251 = vadd.f32 %v2214, %v2250
          %v2252 = vand.u32 %v2224, 4294901760
          %v2253 = vsub.f32 %v2224, %v2252
          %v2254 = vand.u32 %v2253, 4294901760
          %v2255 = vsub.f32 %v2253, %v2254
          %v2256 = vand.u32 %v2255, 4294901760
          %2257 = vmatmul.f32.gmra.mxu0 %v2256
          %v2258 = vpop.f32.mrf.mxu0
          %v2259 = vadd.f32 %v2218, %v2258
          %2260 = vdwg.mxu0
          %2261 = vmatpush.msra.mxu0 0.0
          %2262 = vmatpush.msra.mxu0 0.0
          %2263 = vmatpush.msra.mxu0 0.0
          %2264 = vmatpush.msra.mxu0 0.0
          %2265 = vmatpush.msra.mxu0 0.0
          %2266 = vmatpush.msra.mxu0 0.0
          %2267 = vmatpush.msra.mxu0 0.0
          %2268 = vmatpush.msra.mxu0 0.0
          %2269 = vmatpush.msra.mxu0 0.0
          %2270 = vmatpush.msra.mxu0 0.0
          %2271 = vmatpush.msra.mxu0 0.0
          %2272 = vmatpush.msra.mxu0 0.0
          %2273 = vmatpush.msra.mxu0 0.0
          %2274 = vmatpush.msra.mxu0 0.0
          %v2275 = vand.u32 %v211, 4294901760
          %v2276 = vsub.f32 %v211, %v2275
          %v2277 = vand.u32 %v2276, 4294901760
          %v2278 = vsub.f32 %v2276, %v2277
          %v2279 = vand.u32 %v2278, 4294901760
          %2280 = vmatpush.msra.mxu0 %v2279
          %v2281 = vand.u32 %v210, 4294901760
          %v2282 = vsub.f32 %v210, %v2281
          %v2283 = vand.u32 %v2282, 4294901760
          %v2284 = vsub.f32 %v2282, %v2283
          %v2285 = vand.u32 %v2284, 4294901760
          %2286 = vmatpush.msra.mxu0 %v2285
          %v2287 = vand.u32 %v2221, 4294901760
          %2288 = vmatmul.f32.gmra.mxu0 %v2287
          %v2289 = vpop.f32.mrf.mxu0
          %v2290 = vadd.f32 %v2251, %v2289
          %v2291 = vand.u32 %v2224, 4294901760
          %2292 = vmatmul.f32.gmra.mxu0 %v2291
          %v2293 = vpop.f32.mrf.mxu0
          %v2294 = vadd.f32 %v2259, %v2293
          %2295 = vdwg.mxu0
          %2296 = vmatpush.msra.mxu0 0.0
          %2297 = vmatpush.msra.mxu0 0.0
          %2298 = vmatpush.msra.mxu0 0.0
          %2299 = vmatpush.msra.mxu0 0.0
          %2300 = vmatpush.msra.mxu0 0.0
          %2301 = vmatpush.msra.mxu0 0.0
          %2302 = vmatpush.msra.mxu0 0.0
          %2303 = vmatpush.msra.mxu0 0.0
          %2304 = vmatpush.msra.mxu0 0.0
          %2305 = vmatpush.msra.mxu0 0.0
          %2306 = vmatpush.msra.mxu0 0.0
          %2307 = vmatpush.msra.mxu0 0.0
          %2308 = vmatpush.msra.mxu0 0.0
          %2309 = vmatpush.msra.mxu0 0.0
          %v2310 = vand.u32 %v211, 4294901760
          %v2311 = vsub.f32 %v211, %v2310
          %2312 = vmatpush.msra.mxu0 %v2311
          %v2313 = vand.u32 %v210, 4294901760
          %v2314 = vsub.f32 %v210, %v2313
          %2315 = vmatpush.msra.mxu0 %v2314
          %v2316 = vand.u32 %v2221, 4294901760
          %v2317 = vsub.f32 %v2221, %v2316
          %2318 = vmatmul.f32.gmra.mxu0 %v2317
          %v2319 = vpop.f32.mrf.mxu0
          %v2320 = vadd.f32 %v2290, %v2319
          %v2321 = vand.u32 %v2224, 4294901760
          %v2322 = vsub.f32 %v2224, %v2321
          %2323 = vmatmul.f32.gmra.mxu0 %v2322
          %v2324 = vpop.f32.mrf.mxu0
          %v2325 = vadd.f32 %v2294, %v2324
          %2326 = vdwg.mxu0
          %2327 = vmatpush.msra.mxu0 0.0
          %2328 = vmatpush.msra.mxu0 0.0
          %2329 = vmatpush.msra.mxu0 0.0
          %2330 = vmatpush.msra.mxu0 0.0
          %2331 = vmatpush.msra.mxu0 0.0
          %2332 = vmatpush.msra.mxu0 0.0
          %2333 = vmatpush.msra.mxu0 0.0
          %2334 = vmatpush.msra.mxu0 0.0
          %2335 = vmatpush.msra.mxu0 0.0
          %2336 = vmatpush.msra.mxu0 0.0
          %2337 = vmatpush.msra.mxu0 0.0
          %2338 = vmatpush.msra.mxu0 0.0
          %2339 = vmatpush.msra.mxu0 0.0
          %2340 = vmatpush.msra.mxu0 0.0
          %v2341 = vand.u32 %v211, 4294901760
          %2342 = vmatpush.msra.mxu0 %v2341
          %v2343 = vand.u32 %v210, 4294901760
          %2344 = vmatpush.msra.mxu0 %v2343
          %v2345 = vand.u32 %v2221, 4294901760
          %v2346 = vsub.f32 %v2221, %v2345
          %v2347 = vand.u32 %v2346, 4294901760
          %2348 = vmatmul.f32.gmra.mxu0 %v2347
          %v2349 = vpop.f32.mrf.mxu0
          %v2350 = vadd.f32 %v2320, %v2349
          %v2351 = vand.u32 %v2224, 4294901760
          %v2352 = vsub.f32 %v2224, %v2351
          %v2353 = vand.u32 %v2352, 4294901760
          %2354 = vmatmul.f32.gmra.mxu0 %v2353
          %v2355 = vpop.f32.mrf.mxu0
          %v2356 = vadd.f32 %v2325, %v2355
          %2357 = vdwg.mxu0
          %2358 = vmatpush.msra.mxu0 0.0
          %2359 = vmatpush.msra.mxu0 0.0
          %2360 = vmatpush.msra.mxu0 0.0
          %2361 = vmatpush.msra.mxu0 0.0
          %2362 = vmatpush.msra.mxu0 0.0
          %2363 = vmatpush.msra.mxu0 0.0
          %2364 = vmatpush.msra.mxu0 0.0
          %2365 = vmatpush.msra.mxu0 0.0
          %2366 = vmatpush.msra.mxu0 0.0
          %2367 = vmatpush.msra.mxu0 0.0
          %2368 = vmatpush.msra.mxu0 0.0
          %2369 = vmatpush.msra.mxu0 0.0
          %2370 = vmatpush.msra.mxu0 0.0
          %2371 = vmatpush.msra.mxu0 0.0
          %v2372 = vand.u32 %v211, 4294901760
          %v2373 = vsub.f32 %v211, %v2372
          %v2374 = vand.u32 %v2373, 4294901760
          %2375 = vmatpush.msra.mxu0 %v2374
          %v2376 = vand.u32 %v210, 4294901760
          %v2377 = vsub.f32 %v210, %v2376
          %v2378 = vand.u32 %v2377, 4294901760
          %2379 = vmatpush.msra.mxu0 %v2378
          %v2380 = vand.u32 %v2221, 4294901760
          %2381 = vmatmul.f32.gmra.mxu0 %v2380
          %v2382 = vpop.f32.mrf.mxu0
          %v2383 = vadd.f32 %v2350, %v2382
          %v2384 = vand.u32 %v2224, 4294901760
          %2385 = vmatmul.f32.gmra.mxu0 %v2384
          %v2386 = vpop.f32.mrf.mxu0
          %v2387 = vadd.f32 %v2356, %v2386
          %2388 = vdwg.mxu0
          %2389 = vmatpush.msra.mxu0 0.0
          %2390 = vmatpush.msra.mxu0 0.0
          %2391 = vmatpush.msra.mxu0 0.0
          %2392 = vmatpush.msra.mxu0 0.0
          %2393 = vmatpush.msra.mxu0 0.0
          %2394 = vmatpush.msra.mxu0 0.0
          %2395 = vmatpush.msra.mxu0 0.0
          %2396 = vmatpush.msra.mxu0 0.0
          %2397 = vmatpush.msra.mxu0 0.0
          %2398 = vmatpush.msra.mxu0 0.0
          %2399 = vmatpush.msra.mxu0 0.0
          %2400 = vmatpush.msra.mxu0 0.0
          %2401 = vmatpush.msra.mxu0 0.0
          %2402 = vmatpush.msra.mxu0 0.0
          %v2403 = vand.u32 %v211, 4294901760
          %2404 = vmatpush.msra.mxu0 %v2403
          %v2405 = vand.u32 %v210, 4294901760
          %2406 = vmatpush.msra.mxu0 %v2405
          %v2407 = vand.u32 %v2221, 4294901760
          %2408 = vmatmul.f32.gmra.mxu0 %v2407
          %v2409 = vpop.f32.mrf.mxu0
          %v2410 = vadd.f32 %v2383, %v2409
          %v2411 = vand.u32 %v2224, 4294901760
          %2412 = vmatmul.f32.gmra.mxu0 %v2411
          %v2413 = vpop.f32.mrf.mxu0
          %v2414 = vadd.f32 %v2387, %v2413
          %2415 = vdwg.mxu0
          %v2417 = vsel %vm2023, %v2021, 0
          %v2420 = vsel %vm2023, %v2022, 0
          %2422 = vmatpush.msra.mxu0 0.0
          %2423 = vmatpush.msra.mxu0 0.0
          %2424 = vmatpush.msra.mxu0 0.0
          %2425 = vmatpush.msra.mxu0 0.0
          %2426 = vmatpush.msra.mxu0 0.0
          %2427 = vmatpush.msra.mxu0 0.0
          %2428 = vmatpush.msra.mxu0 0.0
          %2429 = vmatpush.msra.mxu0 0.0
          %2430 = vmatpush.msra.mxu0 0.0
          %2431 = vmatpush.msra.mxu0 0.0
          %2432 = vmatpush.msra.mxu0 0.0
          %2433 = vmatpush.msra.mxu0 0.0
          %2434 = vmatpush.msra.mxu0 0.0
          %2435 = vmatpush.msra.mxu0 0.0
          %v2436 = vand.u32 %v213, 4294901760
          %2437 = vmatpush.msra.mxu0 %v2436
          %v2438 = vand.u32 %v212, 4294901760
          %2439 = vmatpush.msra.mxu0 %v2438
          %v2440 = vand.u32 %v2417, 4294901760
          %v2441 = vsub.f32 %v2417, %v2440
          %v2442 = vand.u32 %v2441, 4294901760
          %v2443 = vsub.f32 %v2441, %v2442
          %v2444 = vand.u32 %v2443, 4294901760
          %2445 = vmatmul.f32.gmra.mxu0 %v2444
          %v2446 = vpop.f32.mrf.mxu0
          %v2447 = vadd.f32 0.0, %v2446
          %v2448 = vand.u32 %v2420, 4294901760
          %v2449 = vsub.f32 %v2420, %v2448
          %v2450 = vand.u32 %v2449, 4294901760
          %v2451 = vsub.f32 %v2449, %v2450
          %v2452 = vand.u32 %v2451, 4294901760
          %2453 = vmatmul.f32.gmra.mxu0 %v2452
          %v2454 = vpop.f32.mrf.mxu0
          %v2455 = vadd.f32 0.0, %v2454
          %2456 = vdwg.mxu0
          %2457 = vmatpush.msra.mxu0 0.0
          %2458 = vmatpush.msra.mxu0 0.0
          %2459 = vmatpush.msra.mxu0 0.0
          %2460 = vmatpush.msra.mxu0 0.0
          %2461 = vmatpush.msra.mxu0 0.0
          %2462 = vmatpush.msra.mxu0 0.0
          %2463 = vmatpush.msra.mxu0 0.0
          %2464 = vmatpush.msra.mxu0 0.0
          %2465 = vmatpush.msra.mxu0 0.0
          %2466 = vmatpush.msra.mxu0 0.0
          %2467 = vmatpush.msra.mxu0 0.0
          %2468 = vmatpush.msra.mxu0 0.0
          %2469 = vmatpush.msra.mxu0 0.0
          %2470 = vmatpush.msra.mxu0 0.0
          %v2471 = vand.u32 %v213, 4294901760
          %v2472 = vsub.f32 %v213, %v2471
          %v2473 = vand.u32 %v2472, 4294901760
          %v2474 = vsub.f32 %v2472, %v2473
          %v2475 = vand.u32 %v2474, 4294901760
          %2476 = vmatpush.msra.mxu0 %v2475
          %v2477 = vand.u32 %v212, 4294901760
          %v2478 = vsub.f32 %v212, %v2477
          %v2479 = vand.u32 %v2478, 4294901760
          %v2480 = vsub.f32 %v2478, %v2479
          %v2481 = vand.u32 %v2480, 4294901760
          %2482 = vmatpush.msra.mxu0 %v2481
          %v2483 = vand.u32 %v2417, 4294901760
          %2484 = vmatmul.f32.gmra.mxu0 %v2483
          %v2485 = vpop.f32.mrf.mxu0
          %v2486 = vadd.f32 %v2447, %v2485
          %v2487 = vand.u32 %v2420, 4294901760
          %2488 = vmatmul.f32.gmra.mxu0 %v2487
          %v2489 = vpop.f32.mrf.mxu0
          %v2490 = vadd.f32 %v2455, %v2489
          %2491 = vdwg.mxu0
          %2492 = vmatpush.msra.mxu0 0.0
          %2493 = vmatpush.msra.mxu0 0.0
          %2494 = vmatpush.msra.mxu0 0.0
          %2495 = vmatpush.msra.mxu0 0.0
          %2496 = vmatpush.msra.mxu0 0.0
          %2497 = vmatpush.msra.mxu0 0.0
          %2498 = vmatpush.msra.mxu0 0.0
          %2499 = vmatpush.msra.mxu0 0.0
          %2500 = vmatpush.msra.mxu0 0.0
          %2501 = vmatpush.msra.mxu0 0.0
          %2502 = vmatpush.msra.mxu0 0.0
          %2503 = vmatpush.msra.mxu0 0.0
          %2504 = vmatpush.msra.mxu0 0.0
          %2505 = vmatpush.msra.mxu0 0.0
          %v2506 = vand.u32 %v213, 4294901760
          %v2507 = vsub.f32 %v213, %v2506
          %2508 = vmatpush.msra.mxu0 %v2507
          %v2509 = vand.u32 %v212, 4294901760
          %v2510 = vsub.f32 %v212, %v2509
          %2511 = vmatpush.msra.mxu0 %v2510
          %v2512 = vand.u32 %v2417, 4294901760
          %v2513 = vsub.f32 %v2417, %v2512
          %2514 = vmatmul.f32.gmra.mxu0 %v2513
          %v2515 = vpop.f32.mrf.mxu0
          %v2516 = vadd.f32 %v2486, %v2515
          %v2517 = vand.u32 %v2420, 4294901760
          %v2518 = vsub.f32 %v2420, %v2517
          %2519 = vmatmul.f32.gmra.mxu0 %v2518
          %v2520 = vpop.f32.mrf.mxu0
          %v2521 = vadd.f32 %v2490, %v2520
          %2522 = vdwg.mxu0
          %2523 = vmatpush.msra.mxu0 0.0
          %2524 = vmatpush.msra.mxu0 0.0
          %2525 = vmatpush.msra.mxu0 0.0
          %2526 = vmatpush.msra.mxu0 0.0
          %2527 = vmatpush.msra.mxu0 0.0
          %2528 = vmatpush.msra.mxu0 0.0
          %2529 = vmatpush.msra.mxu0 0.0
          %2530 = vmatpush.msra.mxu0 0.0
          %2531 = vmatpush.msra.mxu0 0.0
          %2532 = vmatpush.msra.mxu0 0.0
          %2533 = vmatpush.msra.mxu0 0.0
          %2534 = vmatpush.msra.mxu0 0.0
          %2535 = vmatpush.msra.mxu0 0.0
          %2536 = vmatpush.msra.mxu0 0.0
          %v2537 = vand.u32 %v213, 4294901760
          %2538 = vmatpush.msra.mxu0 %v2537
          %v2539 = vand.u32 %v212, 4294901760
          %2540 = vmatpush.msra.mxu0 %v2539
          %v2541 = vand.u32 %v2417, 4294901760
          %v2542 = vsub.f32 %v2417, %v2541
          %v2543 = vand.u32 %v2542, 4294901760
          %2544 = vmatmul.f32.gmra.mxu0 %v2543
          %v2545 = vpop.f32.mrf.mxu0
          %v2546 = vadd.f32 %v2516, %v2545
          %v2547 = vand.u32 %v2420, 4294901760
          %v2548 = vsub.f32 %v2420, %v2547
          %v2549 = vand.u32 %v2548, 4294901760
          %2550 = vmatmul.f32.gmra.mxu0 %v2549
          %v2551 = vpop.f32.mrf.mxu0
          %v2552 = vadd.f32 %v2521, %v2551
          %2553 = vdwg.mxu0
          %2554 = vmatpush.msra.mxu0 0.0
          %2555 = vmatpush.msra.mxu0 0.0
          %2556 = vmatpush.msra.mxu0 0.0
          %2557 = vmatpush.msra.mxu0 0.0
          %2558 = vmatpush.msra.mxu0 0.0
          %2559 = vmatpush.msra.mxu0 0.0
          %2560 = vmatpush.msra.mxu0 0.0
          %2561 = vmatpush.msra.mxu0 0.0
          %2562 = vmatpush.msra.mxu0 0.0
          %2563 = vmatpush.msra.mxu0 0.0
          %2564 = vmatpush.msra.mxu0 0.0
          %2565 = vmatpush.msra.mxu0 0.0
          %2566 = vmatpush.msra.mxu0 0.0
          %2567 = vmatpush.msra.mxu0 0.0
          %v2568 = vand.u32 %v213, 4294901760
          %v2569 = vsub.f32 %v213, %v2568
          %v2570 = vand.u32 %v2569, 4294901760
          %2571 = vmatpush.msra.mxu0 %v2570
          %v2572 = vand.u32 %v212, 4294901760
          %v2573 = vsub.f32 %v212, %v2572
          %v2574 = vand.u32 %v2573, 4294901760
          %2575 = vmatpush.msra.mxu0 %v2574
          %v2576 = vand.u32 %v2417, 4294901760
          %2577 = vmatmul.f32.gmra.mxu0 %v2576
          %v2578 = vpop.f32.mrf.mxu0
          %v2579 = vadd.f32 %v2546, %v2578
          %v2580 = vand.u32 %v2420, 4294901760
          %2581 = vmatmul.f32.gmra.mxu0 %v2580
          %v2582 = vpop.f32.mrf.mxu0
          %v2583 = vadd.f32 %v2552, %v2582
          %2584 = vdwg.mxu0
          %2585 = vmatpush.msra.mxu0 0.0
          %2586 = vmatpush.msra.mxu0 0.0
          %2587 = vmatpush.msra.mxu0 0.0
          %2588 = vmatpush.msra.mxu0 0.0
          %2589 = vmatpush.msra.mxu0 0.0
          %2590 = vmatpush.msra.mxu0 0.0
          %2591 = vmatpush.msra.mxu0 0.0
          %2592 = vmatpush.msra.mxu0 0.0
          %2593 = vmatpush.msra.mxu0 0.0
          %2594 = vmatpush.msra.mxu0 0.0
          %2595 = vmatpush.msra.mxu0 0.0
          %2596 = vmatpush.msra.mxu0 0.0
          %2597 = vmatpush.msra.mxu0 0.0
          %2598 = vmatpush.msra.mxu0 0.0
          %v2599 = vand.u32 %v213, 4294901760
          %2600 = vmatpush.msra.mxu0 %v2599
          %v2601 = vand.u32 %v212, 4294901760
          %2602 = vmatpush.msra.mxu0 %v2601
          %v2603 = vand.u32 %v2417, 4294901760
          %2604 = vmatmul.f32.gmra.mxu0 %v2603
          %v2605 = vpop.f32.mrf.mxu0
          %v2606 = vadd.f32 %v2579, %v2605
          %v2607 = vand.u32 %v2420, 4294901760
          %2608 = vmatmul.f32.gmra.mxu0 %v2607
          %v2609 = vpop.f32.mrf.mxu0
          %v2610 = vadd.f32 %v2583, %v2609
          %2611 = vdwg.mxu0
          %v2613 = vsel %vm2023, %v2006, 0
          %v2616 = vsel %vm2023, %v2007, 0
          %2618 = vmatpush.msra.mxu0 0.0
          %2619 = vmatpush.msra.mxu0 0.0
          %2620 = vmatpush.msra.mxu0 0.0
          %2621 = vmatpush.msra.mxu0 0.0
          %2622 = vmatpush.msra.mxu0 0.0
          %2623 = vmatpush.msra.mxu0 0.0
          %2624 = vmatpush.msra.mxu0 0.0
          %2625 = vmatpush.msra.mxu0 0.0
          %2626 = vmatpush.msra.mxu0 0.0
          %2627 = vmatpush.msra.mxu0 0.0
          %2628 = vmatpush.msra.mxu0 0.0
          %2629 = vmatpush.msra.mxu0 0.0
          %2630 = vmatpush.msra.mxu0 0.0
          %2631 = vmatpush.msra.mxu0 0.0
          %v2632 = vand.u32 %v211, 4294901760
          %2633 = vmatpush.msra.mxu0 %v2632
          %v2634 = vand.u32 %v210, 4294901760
          %2635 = vmatpush.msra.mxu0 %v2634
          %v2636 = vand.u32 %v2613, 4294901760
          %v2637 = vsub.f32 %v2613, %v2636
          %v2638 = vand.u32 %v2637, 4294901760
          %v2639 = vsub.f32 %v2637, %v2638
          %v2640 = vand.u32 %v2639, 4294901760
          %2641 = vmatmul.f32.gmra.mxu0 %v2640
          %v2642 = vpop.f32.mrf.mxu0
          %v2643 = vadd.f32 %v2606, %v2642
          %v2644 = vand.u32 %v2616, 4294901760
          %v2645 = vsub.f32 %v2616, %v2644
          %v2646 = vand.u32 %v2645, 4294901760
          %v2647 = vsub.f32 %v2645, %v2646
          %v2648 = vand.u32 %v2647, 4294901760
          %2649 = vmatmul.f32.gmra.mxu0 %v2648
          %v2650 = vpop.f32.mrf.mxu0
          %v2651 = vadd.f32 %v2610, %v2650
          %2652 = vdwg.mxu0
          %2653 = vmatpush.msra.mxu0 0.0
          %2654 = vmatpush.msra.mxu0 0.0
          %2655 = vmatpush.msra.mxu0 0.0
          %2656 = vmatpush.msra.mxu0 0.0
          %2657 = vmatpush.msra.mxu0 0.0
          %2658 = vmatpush.msra.mxu0 0.0
          %2659 = vmatpush.msra.mxu0 0.0
          %2660 = vmatpush.msra.mxu0 0.0
          %2661 = vmatpush.msra.mxu0 0.0
          %2662 = vmatpush.msra.mxu0 0.0
          %2663 = vmatpush.msra.mxu0 0.0
          %2664 = vmatpush.msra.mxu0 0.0
          %2665 = vmatpush.msra.mxu0 0.0
          %2666 = vmatpush.msra.mxu0 0.0
          %v2667 = vand.u32 %v211, 4294901760
          %v2668 = vsub.f32 %v211, %v2667
          %v2669 = vand.u32 %v2668, 4294901760
          %v2670 = vsub.f32 %v2668, %v2669
          %v2671 = vand.u32 %v2670, 4294901760
          %2672 = vmatpush.msra.mxu0 %v2671
          %v2673 = vand.u32 %v210, 4294901760
          %v2674 = vsub.f32 %v210, %v2673
          %v2675 = vand.u32 %v2674, 4294901760
          %v2676 = vsub.f32 %v2674, %v2675
          %v2677 = vand.u32 %v2676, 4294901760
          %2678 = vmatpush.msra.mxu0 %v2677
          %v2679 = vand.u32 %v2613, 4294901760
          %2680 = vmatmul.f32.gmra.mxu0 %v2679
          %v2681 = vpop.f32.mrf.mxu0
          %v2682 = vadd.f32 %v2643, %v2681
          %v2683 = vand.u32 %v2616, 4294901760
          %2684 = vmatmul.f32.gmra.mxu0 %v2683
          %v2685 = vpop.f32.mrf.mxu0
          %v2686 = vadd.f32 %v2651, %v2685
          %2687 = vdwg.mxu0
          %2688 = vmatpush.msra.mxu0 0.0
          %2689 = vmatpush.msra.mxu0 0.0
          %2690 = vmatpush.msra.mxu0 0.0
          %2691 = vmatpush.msra.mxu0 0.0
          %2692 = vmatpush.msra.mxu0 0.0
          %2693 = vmatpush.msra.mxu0 0.0
          %2694 = vmatpush.msra.mxu0 0.0
          %2695 = vmatpush.msra.mxu0 0.0
          %2696 = vmatpush.msra.mxu0 0.0
          %2697 = vmatpush.msra.mxu0 0.0
          %2698 = vmatpush.msra.mxu0 0.0
          %2699 = vmatpush.msra.mxu0 0.0
          %2700 = vmatpush.msra.mxu0 0.0
          %2701 = vmatpush.msra.mxu0 0.0
          %v2702 = vand.u32 %v211, 4294901760
          %v2703 = vsub.f32 %v211, %v2702
          %2704 = vmatpush.msra.mxu0 %v2703
          %v2705 = vand.u32 %v210, 4294901760
          %v2706 = vsub.f32 %v210, %v2705
          %2707 = vmatpush.msra.mxu0 %v2706
          %v2708 = vand.u32 %v2613, 4294901760
          %v2709 = vsub.f32 %v2613, %v2708
          %2710 = vmatmul.f32.gmra.mxu0 %v2709
          %v2711 = vpop.f32.mrf.mxu0
          %v2712 = vadd.f32 %v2682, %v2711
          %v2713 = vand.u32 %v2616, 4294901760
          %v2714 = vsub.f32 %v2616, %v2713
          %2715 = vmatmul.f32.gmra.mxu0 %v2714
          %v2716 = vpop.f32.mrf.mxu0
          %v2717 = vadd.f32 %v2686, %v2716
          %2718 = vdwg.mxu0
          %2719 = vmatpush.msra.mxu0 0.0
          %2720 = vmatpush.msra.mxu0 0.0
          %2721 = vmatpush.msra.mxu0 0.0
          %2722 = vmatpush.msra.mxu0 0.0
          %2723 = vmatpush.msra.mxu0 0.0
          %2724 = vmatpush.msra.mxu0 0.0
          %2725 = vmatpush.msra.mxu0 0.0
          %2726 = vmatpush.msra.mxu0 0.0
          %2727 = vmatpush.msra.mxu0 0.0
          %2728 = vmatpush.msra.mxu0 0.0
          %2729 = vmatpush.msra.mxu0 0.0
          %2730 = vmatpush.msra.mxu0 0.0
          %2731 = vmatpush.msra.mxu0 0.0
          %2732 = vmatpush.msra.mxu0 0.0
          %v2733 = vand.u32 %v211, 4294901760
          %2734 = vmatpush.msra.mxu0 %v2733
          %v2735 = vand.u32 %v210, 4294901760
          %2736 = vmatpush.msra.mxu0 %v2735
          %v2737 = vand.u32 %v2613, 4294901760
          %v2738 = vsub.f32 %v2613, %v2737
          %v2739 = vand.u32 %v2738, 4294901760
          %2740 = vmatmul.f32.gmra.mxu0 %v2739
          %v2741 = vpop.f32.mrf.mxu0
          %v2742 = vadd.f32 %v2712, %v2741
          %v2743 = vand.u32 %v2616, 4294901760
          %v2744 = vsub.f32 %v2616, %v2743
          %v2745 = vand.u32 %v2744, 4294901760
          %2746 = vmatmul.f32.gmra.mxu0 %v2745
          %v2747 = vpop.f32.mrf.mxu0
          %v2748 = vadd.f32 %v2717, %v2747
          %2749 = vdwg.mxu0
          %2750 = vmatpush.msra.mxu0 0.0
          %2751 = vmatpush.msra.mxu0 0.0
          %2752 = vmatpush.msra.mxu0 0.0
          %2753 = vmatpush.msra.mxu0 0.0
          %2754 = vmatpush.msra.mxu0 0.0
          %2755 = vmatpush.msra.mxu0 0.0
          %2756 = vmatpush.msra.mxu0 0.0
          %2757 = vmatpush.msra.mxu0 0.0
          %2758 = vmatpush.msra.mxu0 0.0
          %2759 = vmatpush.msra.mxu0 0.0
          %2760 = vmatpush.msra.mxu0 0.0
          %2761 = vmatpush.msra.mxu0 0.0
          %2762 = vmatpush.msra.mxu0 0.0
          %2763 = vmatpush.msra.mxu0 0.0
          %v2764 = vand.u32 %v211, 4294901760
          %v2765 = vsub.f32 %v211, %v2764
          %v2766 = vand.u32 %v2765, 4294901760
          %2767 = vmatpush.msra.mxu0 %v2766
          %v2768 = vand.u32 %v210, 4294901760
          %v2769 = vsub.f32 %v210, %v2768
          %v2770 = vand.u32 %v2769, 4294901760
          %2771 = vmatpush.msra.mxu0 %v2770
          %v2772 = vand.u32 %v2613, 4294901760
          %2773 = vmatmul.f32.gmra.mxu0 %v2772
          %v2774 = vpop.f32.mrf.mxu0
          %v2775 = vadd.f32 %v2742, %v2774
          %v2776 = vand.u32 %v2616, 4294901760
          %2777 = vmatmul.f32.gmra.mxu0 %v2776
          %v2778 = vpop.f32.mrf.mxu0
          %v2779 = vadd.f32 %v2748, %v2778
          %2780 = vdwg.mxu0
          %2781 = vmatpush.msra.mxu0 0.0
          %2782 = vmatpush.msra.mxu0 0.0
          %2783 = vmatpush.msra.mxu0 0.0
          %2784 = vmatpush.msra.mxu0 0.0
          %2785 = vmatpush.msra.mxu0 0.0
          %2786 = vmatpush.msra.mxu0 0.0
          %2787 = vmatpush.msra.mxu0 0.0
          %2788 = vmatpush.msra.mxu0 0.0
          %2789 = vmatpush.msra.mxu0 0.0
          %2790 = vmatpush.msra.mxu0 0.0
          %2791 = vmatpush.msra.mxu0 0.0
          %2792 = vmatpush.msra.mxu0 0.0
          %2793 = vmatpush.msra.mxu0 0.0
          %2794 = vmatpush.msra.mxu0 0.0
          %v2795 = vand.u32 %v211, 4294901760
          %2796 = vmatpush.msra.mxu0 %v2795
          %v2797 = vand.u32 %v210, 4294901760
          %2798 = vmatpush.msra.mxu0 %v2797
          %v2799 = vand.u32 %v2613, 4294901760
          %2800 = vmatmul.f32.gmra.mxu0 %v2799
          %v2801 = vpop.f32.mrf.mxu0
          %v2802 = vadd.f32 %v2775, %v2801
          %v2803 = vand.u32 %v2616, 4294901760
          %2804 = vmatmul.f32.gmra.mxu0 %v2803
          %v2805 = vpop.f32.mrf.mxu0
          %v2806 = vadd.f32 %v2779, %v2805
          %2807 = vdwg.mxu0
          %s2808 = smul.u32 %s215, 16
          %s2809 = scalar_lea.vmem %s204, %s2808 [#allocation5]
          %vm2810 = vcmask 261120
          %2811 = vst.msk [vmem:[%s2809] sm:$0xff] %vm2810, %v2410
          %2812 = vst.msk [vmem:[%s2809 + $0x8] sm:$0xff] %vm2810, %v2414
          %2815 = vrot.lane.b32.xlu0 %v2802, 32
          %v2816 = vpop.permute.xlu0 %2815
          %2817 = vrot.lane.b32.xlu0 %v2806, 32
          %v2818 = vpop.permute.xlu0 %2817
          %vm2821 = vcmask 523520
          %2822 = vst.msk [vmem:[%s2809] sm:$0xff] %vm2821, %v2816
          %2823 = vst.msk [vmem:[%s2809 + $0x8] sm:$0xff] %vm2821, %v2818
        $region45: #{tpu_custom_call.1} parent=35 // loop_footer
          %s219 = sadd.s32 1, %s215
        $region46: #{tpu_custom_call.1} parent=35 // loop_footer_branch
          %214 = sbr.rel target = $region42
        $region47: #{tpu_custom_call.1} parent=35 // loop_exit
          _
        %s2824 = sand.u32 %s116, 1
        %s2825 = scalar_lea.sflag [#allocation3], %s2824
        %s2826 = sand.u32 %s116, 1
        %s2827 = smul.addr %s2826, 32
        %s2828 = scalar_lea.vmem [#allocation5], %s2827
        // Predicated region
        $region48: #{tpu_custom_call.1} parent=35 // pred_check
          %p2829 = pneg %p126
        $region49: #{tpu_custom_call.1} parent=35 // pred_check_branch
          %2831 = sbr.rel (%p2829) target = $region51
        $region50: #{tpu_custom_call.1} parent=35 // pred_region
          %2833 = vsyncadd %s2825, 0
          %s2834 = smul.addr %s19, 4
          %s2835 = smul.addr %s2834, 8
          %s2836 = scalar_lea.hbm %s4, %s2835
          %s2837 = sshll.u32 %s2828, 4
          %s2838 = int_to_ptr.vmem [resolvable:$true] %s2837
          %s2839 = sshll.u32 %s2836, 4
          %s2840 = int_to_ptr.hbm [resolvable:$true] %s2839
          %2845 = dma.vmem_to_hbm [thread:$0]  %s2838, 512, %s2840, %s2825, 128, 128, 8
        $region51: #{tpu_custom_call.1} parent=35 // pred_fallthru
          _
      $region36: #{tpu_custom_call.1} parent=5 // pred_fallthru
        _
      %p2846 = scmp.le.s32.totalorder 2, %s14
      // Predicated region
      $region52: #{tpu_custom_call.1} parent=5 // pred_check
        %p2847 = pneg %p2846
      $region53: #{tpu_custom_call.1} parent=5 // pred_check_branch
        %2849 = sbr.rel (%p2847) target = $region55
      $region54: #{tpu_custom_call.1} parent=5 // pred_region
        %s2850 = ssub.s32 %s14, 2
        // Predicated region
        $region56: #{tpu_custom_call.1} parent=54 // pred_check
          %p2851 = pneg %p132
        $region57: #{tpu_custom_call.1} parent=54 // pred_check_branch
          %2853 = sbr.rel (%p2851) target = $region59
        $region58: #{tpu_custom_call.1} parent=54 // pred_region
          %s2854 = sand.u32 %s117, 1
          %s2855 = scalar_lea.sflag [#allocation3], %s2854
          %s2856 = sand.u32 %s117, 1
          %s2857 = smul.addr %s2856, 32
          %s2858 = scalar_lea.vmem [#allocation5], %s2857
          %2860 = dma.done %s2855, 512
        $region59: #{tpu_custom_call.1} parent=54 // pred_fallthru
          _
      $region55: #{tpu_custom_call.1} parent=5 // pred_fallthru
        _
    $region6: #{tpu_custom_call.1} parent=1 // loop_footer
      %s18 = sadd.s32 1, %s14
    $region7: #{tpu_custom_call.1} parent=1 // loop_footer_branch
      %13 = sbr.rel target = $region3
    $region8: #{tpu_custom_call.1} parent=1 // loop_exit
      _
    %2861 = vsyncpa [#allocation3], 1
    %s2862 = scalar_lea.sflag [#allocation3], 1
    %2863 = vsyncpa %s2862, 1
    %2864 = vsyncpa [#allocation4], 1
    %s2865 = scalar_lea.sflag [#allocation4], 1
    %2866 = vsyncpa %s2865, 1

</llo_original>
